<compile_context>
chip_gen: v6e
topology: v6e:2x2x1
jax: 0.10.0
libtpu: 0.0.40
codegen_flags: <defaults>
</compile_context>

<pallas_src>
import jax
import jax.numpy as jnp
from jax.experimental import pallas as pl
from jax.experimental.pallas import tpu as pltpu

CLS_DIM = 16
BOX_DIM = 32
HDIM = 128
CONV_OUT = 64
KSIZE = 3
PAD = 3


def _correction_kernel(img_pool_ref, inst_pool_ref, cls_ref, box_ref,
                       w_img_ref, w_inst_ref,
                       w_cls_ref, b_cls_ref, w_box_ref, b_box_ref,
                       w1_img_ref, w1_inst_ref, w1_cls_ref, w1_box_ref, b1_ref,
                       w2_ref, b2_ref, w3_ref, b3_ref,
                       out_ref):
    f32 = jnp.float32

    # conv + global-average-pool, pre-reduced to one matvec per branch
    # (bf16 x bf16 operands, f32 accumulation on the MXU)
    img_feat = jnp.dot(img_pool_ref[...], w_img_ref[...],
                       preferred_element_type=f32)                    # (bs, 64)
    inst_feat = jnp.dot(inst_pool_ref[...], w_inst_ref[...],
                        preferred_element_type=f32)                   # (bs, 64)

    # class / box embeddings (whole batch at once)
    cls_e = jnp.dot(cls_ref[...], w_cls_ref[...],
                    preferred_element_type=f32) + b_cls_ref[...]      # (bs, 16)
    box_e = jnp.dot(box_ref[...], w_box_ref[...],
                    preferred_element_type=f32) + b_box_ref[...]      # (bs, 32)

    # forward_net: concat([img, inst, cls, box]) @ W1 as a 4-way split matmul
    h1 = jnp.tanh(
        jnp.dot(img_feat, w1_img_ref[...], preferred_element_type=f32)
        + jnp.dot(inst_feat, w1_inst_ref[...], preferred_element_type=f32)
        + jnp.dot(cls_e, w1_cls_ref[...], preferred_element_type=f32)
        + jnp.dot(box_e, w1_box_ref[...], preferred_element_type=f32)
        + b1_ref[...])                                                # (bs, 128)
    h2 = jnp.tanh(jnp.dot(h1, w2_ref[...],
                          preferred_element_type=f32) + b2_ref[...])  # (bs, 128)
    out = jnp.dot(h2, w3_ref[...],
                  preferred_element_type=f32) + b3_ref[...]           # (bs, nc+5)
    out_ref[...] = out.astype(out_ref.dtype)


def correction_net_forward(params, image_feature, instance_feature,
                           class_possibility, box_reg):
    bs, cin, h, w = image_feature.shape
    oh = h + 2 * PAD - KSIZE + 1
    ow = w + 2 * PAD - KSIZE + 1
    P = oh * ow
    kkc = KSIZE * KSIZE * cin
    n_out = params["w3"].shape[1]

    def pooled_patch_mean(x_nchw):
        # Column means of the im2col matrix: for each (kh, kw) shift, the mean
        # over all OHxOW output positions of the zero-padded NHWC feature map.
        x = jnp.transpose(x_nchw, (0, 2, 3, 1))                       # NCHW -> NHWC
        xp = jnp.pad(x, ((0, 0), (PAD, PAD), (PAD, PAD), (0, 0)))
        cols = [jnp.sum(xp[:, kh:kh + oh, kw:kw + ow, :], axis=(1, 2))
                for kh in range(KSIZE) for kw in range(KSIZE)]
        return jnp.concatenate(cols, axis=-1) * (1.0 / P)             # (bs, kkc)

    img_pool = pooled_patch_mean(image_feature).astype(jnp.bfloat16)
    inst_pool = pooled_patch_mean(instance_feature).astype(jnp.bfloat16)

    w_img = params["w_img"].reshape(kkc, CONV_OUT).astype(jnp.bfloat16)   # HWIO flat
    w_inst = params["w_inst"].reshape(kkc, CONV_OUT).astype(jnp.bfloat16)

    w1 = params["w1"]                                                  # (176, 128)
    w1_img = w1[:CONV_OUT]
    w1_inst = w1[CONV_OUT:2 * CONV_OUT]
    w1_cls = w1[2 * CONV_OUT:2 * CONV_OUT + CLS_DIM]
    w1_box = w1[2 * CONV_OUT + CLS_DIM:]

    inputs = [
        img_pool, inst_pool, class_possibility, box_reg,
        w_img, w_inst,
        params["w_cls"], params["b_cls"].reshape(1, -1),
        params["w_box"], params["b_box"].reshape(1, -1),
        w1_img, w1_inst, w1_cls, w1_box, params["b1"].reshape(1, -1),
        params["w2"], params["b2"].reshape(1, -1),
        params["w3"], params["b3"].reshape(1, -1),
    ]

    def full_spec(a):
        return pl.BlockSpec(a.shape, lambda i, nd=a.ndim: (0,) * nd)

    out = pl.pallas_call(
        _correction_kernel,
        out_shape=jax.ShapeDtypeStruct((bs, n_out), jnp.float32),
        grid=(1,),
        in_specs=[full_spec(a) for a in inputs],
        out_specs=pl.BlockSpec((bs, n_out), lambda i: (0, 0)),
        compiler_params=pltpu.CompilerParams(
            dimension_semantics=("arbitrary",),
            vmem_limit_bytes=32 * 1024 * 1024),
    )(*inputs)
    return out


def reference_forward(params, image_feature, instance_feature,
                      class_possibility, box_reg):
    """Pure-JAX reference mirroring the PyTorch forward() (f32, highest precision)."""
    hi = jax.lax.Precision.HIGHEST

    def conv_pool(x_nchw, w_hwio):
        x = jnp.transpose(x_nchw, (0, 2, 3, 1))
        y = jax.lax.conv_general_dilated(
            x, w_hwio, window_strides=(1, 1),
            padding=((PAD, PAD), (PAD, PAD)),
            dimension_numbers=("NHWC", "HWIO", "NHWC"),
            precision=hi)
        return jnp.mean(y, axis=(1, 2))

    img = conv_pool(image_feature, params["w_img"])
    inst = conv_pool(instance_feature, params["w_inst"])
    cls = jnp.dot(class_possibility, params["w_cls"], precision=hi) + params["b_cls"]
    box = jnp.dot(box_reg, params["w_box"], precision=hi) + params["b_box"]
    feat = jnp.concatenate([img, inst, cls, box], axis=-1)
    h1 = jnp.tanh(jnp.dot(feat, params["w1"], precision=hi) + params["b1"])
    h2 = jnp.tanh(jnp.dot(h1, params["w2"], precision=hi) + params["b2"])
    return jnp.dot(h2, params["w3"], precision=hi) + params["b3"]


def init_params(class_num, key, scale=0.05):
    ks = jax.random.split(key, 12)

    def init(k, shape):
        return scale * jax.random.normal(k, shape, jnp.float32)

    p = {}
    # conv weights stored HWIO (kh, kw, cin, cout); conv bias=False in the model
    p["w_img"] = init(ks[0], (KSIZE, KSIZE, 512, CONV_OUT))
    p["w_inst"] = init(ks[1], (KSIZE, KSIZE, 512, CONV_OUT))
    # linear weights stored (in, out)
    p["w_cls"] = init(ks[2], (class_num + 1, CLS_DIM))
    p["b_cls"] = init(ks[3], (CLS_DIM,))
    p["w_box"] = init(ks[4], (4, BOX_DIM))
    p["b_box"] = init(ks[5], (BOX_DIM,))
    p["w1"] = init(ks[6], (2 * CONV_OUT + CLS_DIM + BOX_DIM, HDIM))  # (176, 128)
    p["b1"] = init(ks[7], (HDIM,))
    p["w2"] = init(ks[8], (HDIM, HDIM))
    p["b2"] = init(ks[9], (HDIM,))
    p["w3"] = init(ks[10], (HDIM, class_num + 5))
    p["b3"] = init(ks[11], (class_num + 5,))
    return p


if __name__ == "__main__":
    class_num = 8
    bs, cin, h, w = 2, 512, 8, 8

    root = jax.random.PRNGKey(0)
    k_par, k_img, k_inst, k_cls, k_box = jax.random.split(root, 5)

    params = init_params(class_num, k_par)
    image_feature = jax.random.normal(k_img, (bs, cin, h, w), jnp.float32)
    instance_feature = jax.random.normal(k_inst, (bs, cin, h, w), jnp.float32)
    class_possibility = jax.nn.softmax(
        jax.random.normal(k_cls, (bs, class_num + 1), jnp.float32), axis=-1)
    box_reg = jax.random.normal(k_box, (bs, 4), jnp.float32)

    fwd = jax.jit(correction_net_forward)
    out = fwd(params, image_feature, instance_feature,
              class_possibility, box_reg)
    out = jax.block_until_ready(out)

    assert out.shape == (bs, class_num + 5), out.shape

    ref = reference_forward(params, image_feature, instance_feature,
                            class_possibility, box_reg)
    max_err = float(jnp.max(jnp.abs(out - ref)))
    if not max_err < 5e-3:
        raise AssertionError(f"Pallas kernel mismatch vs reference, max_err={max_err}")

    print("KERNEL_OK")
</pallas_src>

<mosaic_0001>
module attributes {stable_mosaic.version = 11 : i64} {
  func.func @_correction_kernel(%arg0: i32, %arg1: memref<2x4608xbf16, #tpu.memory_space<vmem>>, %arg2: memref<2x4608xbf16, #tpu.memory_space<vmem>>, %arg3: memref<2x9xf32, #tpu.memory_space<vmem>>, %arg4: memref<2x4xf32, #tpu.memory_space<vmem>>, %arg5: memref<4608x64xbf16, #tpu.memory_space<vmem>>, %arg6: memref<4608x64xbf16, #tpu.memory_space<vmem>>, %arg7: memref<9x16xf32, #tpu.memory_space<vmem>>, %arg8: memref<1x16xf32, #tpu.memory_space<vmem>>, %arg9: memref<4x32xf32, #tpu.memory_space<vmem>>, %arg10: memref<1x32xf32, #tpu.memory_space<vmem>>, %arg11: memref<64x128xf32, #tpu.memory_space<vmem>>, %arg12: memref<64x128xf32, #tpu.memory_space<vmem>>, %arg13: memref<16x128xf32, #tpu.memory_space<vmem>>, %arg14: memref<32x128xf32, #tpu.memory_space<vmem>>, %arg15: memref<1x128xf32, #tpu.memory_space<vmem>>, %arg16: memref<128x128xf32, #tpu.memory_space<vmem>>, %arg17: memref<1x128xf32, #tpu.memory_space<vmem>>, %arg18: memref<128x13xf32, #tpu.memory_space<vmem>>, %arg19: memref<1x13xf32, #tpu.memory_space<vmem>>, %arg20: memref<2x13xf32, #tpu.memory_space<vmem>>) attributes {dimension_semantics = [#tpu.dimension_semantics<arbitrary>], iteration_bounds = array<i64: 1>, scalar_prefetch = 0 : i64, scratch_operands = 0 : i64, tpu.core_type = #tpu.core_type<tc>, window_params = [{pipeline_mode = #tpu.pipeline_mode<synchronous>, transform_indices = @transform_0, window_bounds = array<i64: 2, 4608>}, {pipeline_mode = #tpu.pipeline_mode<synchronous>, transform_indices = @transform_1, window_bounds = array<i64: 2, 4608>}, {pipeline_mode = #tpu.pipeline_mode<synchronous>, transform_indices = @transform_2, window_bounds = array<i64: 2, 9>}, {pipeline_mode = #tpu.pipeline_mode<synchronous>, transform_indices = @transform_3, window_bounds = array<i64: 2, 4>}, {pipeline_mode = #tpu.pipeline_mode<synchronous>, transform_indices = @transform_4, window_bounds = array<i64: 4608, 64>}, {pipeline_mode = #tpu.pipeline_mode<synchronous>, transform_indices = @transform_5, window_bounds = array<i64: 4608, 64>}, {pipeline_mode = #tpu.pipeline_mode<synchronous>, transform_indices = @transform_6, window_bounds = array<i64: 9, 16>}, {pipeline_mode = #tpu.pipeline_mode<synchronous>, transform_indices = @transform_7, window_bounds = array<i64: 1, 16>}, {pipeline_mode = #tpu.pipeline_mode<synchronous>, transform_indices = @transform_8, window_bounds = array<i64: 4, 32>}, {pipeline_mode = #tpu.pipeline_mode<synchronous>, transform_indices = @transform_9, window_bounds = array<i64: 1, 32>}, {pipeline_mode = #tpu.pipeline_mode<synchronous>, transform_indices = @transform_10, window_bounds = array<i64: 64, 128>}, {pipeline_mode = #tpu.pipeline_mode<synchronous>, transform_indices = @transform_11, window_bounds = array<i64: 64, 128>}, {pipeline_mode = #tpu.pipeline_mode<synchronous>, transform_indices = @transform_12, window_bounds = array<i64: 16, 128>}, {pipeline_mode = #tpu.pipeline_mode<synchronous>, transform_indices = @transform_13, window_bounds = array<i64: 32, 128>}, {pipeline_mode = #tpu.pipeline_mode<synchronous>, transform_indices = @transform_14, window_bounds = array<i64: 1, 128>}, {pipeline_mode = #tpu.pipeline_mode<synchronous>, transform_indices = @transform_15, window_bounds = array<i64: 128, 128>}, {pipeline_mode = #tpu.pipeline_mode<synchronous>, transform_indices = @transform_16, window_bounds = array<i64: 1, 128>}, {pipeline_mode = #tpu.pipeline_mode<synchronous>, transform_indices = @transform_17, window_bounds = array<i64: 128, 13>}, {pipeline_mode = #tpu.pipeline_mode<synchronous>, transform_indices = @transform_18, window_bounds = array<i64: 1, 13>}, {pipeline_mode = #tpu.pipeline_mode<synchronous>, transform_indices = @transform_19, window_bounds = array<i64: 2, 13>}]} {
    %c0 = arith.constant 0 : index
    %c0_0 = arith.constant 0 : index
    %0 = vector.load %arg1[%c0, %c0_0] : memref<2x4608xbf16, #tpu.memory_space<vmem>>, vector<2x4608xbf16>
    %c0_1 = arith.constant 0 : index
    %c0_2 = arith.constant 0 : index
    %1 = vector.load %arg5[%c0_1, %c0_2] : memref<4608x64xbf16, #tpu.memory_space<vmem>>, vector<4608x64xbf16>
    %cst = arith.constant dense<0.000000e+00> : vector<2x64xf32>
    %2 = tpu.matmul %0, %1, %cst {dimension_numbers = #tpu.dot_dimension_numbers<[1], [0], [0], [1], [0, 0, 1, 1], [], []>} : vector<2x4608xbf16>, vector<4608x64xbf16>, vector<2x64xf32> -> vector<2x64xf32>
    %c0_3 = arith.constant 0 : index
    %c0_4 = arith.constant 0 : index
    %3 = vector.load %arg2[%c0_3, %c0_4] : memref<2x4608xbf16, #tpu.memory_space<vmem>>, vector<2x4608xbf16>
    %c0_5 = arith.constant 0 : index
    %c0_6 = arith.constant 0 : index
    %4 = vector.load %arg6[%c0_5, %c0_6] : memref<4608x64xbf16, #tpu.memory_space<vmem>>, vector<4608x64xbf16>
    %cst_7 = arith.constant dense<0.000000e+00> : vector<2x64xf32>
    %5 = tpu.matmul %3, %4, %cst_7 {dimension_numbers = #tpu.dot_dimension_numbers<[1], [0], [0], [1], [0, 0, 1, 1], [], []>} : vector<2x4608xbf16>, vector<4608x64xbf16>, vector<2x64xf32> -> vector<2x64xf32>
    %c0_8 = arith.constant 0 : index
    %c0_9 = arith.constant 0 : index
    %6 = vector.load %arg3[%c0_8, %c0_9] : memref<2x9xf32, #tpu.memory_space<vmem>>, vector<2x9xf32>
    %c0_10 = arith.constant 0 : index
    %c0_11 = arith.constant 0 : index
    %7 = vector.load %arg7[%c0_10, %c0_11] : memref<9x16xf32, #tpu.memory_space<vmem>>, vector<9x16xf32>
    %cst_12 = arith.constant dense<0.000000e+00> : vector<2x16xf32>
    %8 = tpu.matmul %6, %7, %cst_12 {dimension_numbers = #tpu.dot_dimension_numbers<[1], [0], [0], [1], [0, 0, 1, 1], [], []>} : vector<2x9xf32>, vector<9x16xf32>, vector<2x16xf32> -> vector<2x16xf32>
    %c0_13 = arith.constant 0 : index
    %c0_14 = arith.constant 0 : index
    %9 = vector.load %arg8[%c0_13, %c0_14] : memref<1x16xf32, #tpu.memory_space<vmem>>, vector<1x16xf32>
    %10 = vector.broadcast %9 : vector<1x16xf32> to vector<2x16xf32>
    %11 = arith.addf %8, %10 : vector<2x16xf32>
    %c0_15 = arith.constant 0 : index
    %c0_16 = arith.constant 0 : index
    %12 = vector.load %arg4[%c0_15, %c0_16] : memref<2x4xf32, #tpu.memory_space<vmem>>, vector<2x4xf32>
    %c0_17 = arith.constant 0 : index
    %c0_18 = arith.constant 0 : index
    %13 = vector.load %arg9[%c0_17, %c0_18] : memref<4x32xf32, #tpu.memory_space<vmem>>, vector<4x32xf32>
    %cst_19 = arith.constant dense<0.000000e+00> : vector<2x32xf32>
    %14 = tpu.matmul %12, %13, %cst_19 {dimension_numbers = #tpu.dot_dimension_numbers<[1], [0], [0], [1], [0, 0, 1, 1], [], []>} : vector<2x4xf32>, vector<4x32xf32>, vector<2x32xf32> -> vector<2x32xf32>
    %c0_20 = arith.constant 0 : index
    %c0_21 = arith.constant 0 : index
    %15 = vector.load %arg10[%c0_20, %c0_21] : memref<1x32xf32, #tpu.memory_space<vmem>>, vector<1x32xf32>
    %16 = vector.broadcast %15 : vector<1x32xf32> to vector<2x32xf32>
    %17 = arith.addf %14, %16 : vector<2x32xf32>
    %c0_22 = arith.constant 0 : index
    %c0_23 = arith.constant 0 : index
    %18 = vector.load %arg11[%c0_22, %c0_23] : memref<64x128xf32, #tpu.memory_space<vmem>>, vector<64x128xf32>
    %cst_24 = arith.constant dense<0.000000e+00> : vector<2x128xf32>
    %19 = tpu.matmul %2, %18, %cst_24 {dimension_numbers = #tpu.dot_dimension_numbers<[1], [0], [0], [1], [0, 0, 1, 1], [], []>} : vector<2x64xf32>, vector<64x128xf32>, vector<2x128xf32> -> vector<2x128xf32>
    %c0_25 = arith.constant 0 : index
    %c0_26 = arith.constant 0 : index
    %20 = vector.load %arg12[%c0_25, %c0_26] : memref<64x128xf32, #tpu.memory_space<vmem>>, vector<64x128xf32>
    %cst_27 = arith.constant dense<0.000000e+00> : vector<2x128xf32>
    %21 = tpu.matmul %5, %20, %cst_27 {dimension_numbers = #tpu.dot_dimension_numbers<[1], [0], [0], [1], [0, 0, 1, 1], [], []>} : vector<2x64xf32>, vector<64x128xf32>, vector<2x128xf32> -> vector<2x128xf32>
    %22 = arith.addf %19, %21 : vector<2x128xf32>
    %c0_28 = arith.constant 0 : index
    %c0_29 = arith.constant 0 : index
    %23 = vector.load %arg13[%c0_28, %c0_29] : memref<16x128xf32, #tpu.memory_space<vmem>>, vector<16x128xf32>
    %cst_30 = arith.constant dense<0.000000e+00> : vector<2x128xf32>
    %24 = tpu.matmul %11, %23, %cst_30 {dimension_numbers = #tpu.dot_dimension_numbers<[1], [0], [0], [1], [0, 0, 1, 1], [], []>} : vector<2x16xf32>, vector<16x128xf32>, vector<2x128xf32> -> vector<2x128xf32>
    %25 = arith.addf %22, %24 : vector<2x128xf32>
    %c0_31 = arith.constant 0 : index
    %c0_32 = arith.constant 0 : index
    %26 = vector.load %arg14[%c0_31, %c0_32] : memref<32x128xf32, #tpu.memory_space<vmem>>, vector<32x128xf32>
    %cst_33 = arith.constant dense<0.000000e+00> : vector<2x128xf32>
    %27 = tpu.matmul %17, %26, %cst_33 {dimension_numbers = #tpu.dot_dimension_numbers<[1], [0], [0], [1], [0, 0, 1, 1], [], []>} : vector<2x32xf32>, vector<32x128xf32>, vector<2x128xf32> -> vector<2x128xf32>
    %28 = arith.addf %25, %27 : vector<2x128xf32>
    %c0_34 = arith.constant 0 : index
    %c0_35 = arith.constant 0 : index
    %29 = vector.load %arg15[%c0_34, %c0_35] : memref<1x128xf32, #tpu.memory_space<vmem>>, vector<1x128xf32>
    %30 = vector.broadcast %29 : vector<1x128xf32> to vector<2x128xf32>
    %31 = arith.addf %28, %30 : vector<2x128xf32>
    %32 = math.tanh %31 : vector<2x128xf32>
    %c0_36 = arith.constant 0 : index
    %c0_37 = arith.constant 0 : index
    %33 = vector.load %arg16[%c0_36, %c0_37] : memref<128x128xf32, #tpu.memory_space<vmem>>, vector<128x128xf32>
    %cst_38 = arith.constant dense<0.000000e+00> : vector<2x128xf32>
    %34 = tpu.matmul %32, %33, %cst_38 {dimension_numbers = #tpu.dot_dimension_numbers<[1], [0], [0], [1], [0, 0, 1, 1], [], []>} : vector<2x128xf32>, vector<128x128xf32>, vector<2x128xf32> -> vector<2x128xf32>
    %c0_39 = arith.constant 0 : index
    %c0_40 = arith.constant 0 : index
    %35 = vector.load %arg17[%c0_39, %c0_40] : memref<1x128xf32, #tpu.memory_space<vmem>>, vector<1x128xf32>
    %36 = vector.broadcast %35 : vector<1x128xf32> to vector<2x128xf32>
    %37 = arith.addf %34, %36 : vector<2x128xf32>
    %38 = math.tanh %37 : vector<2x128xf32>
    %c0_41 = arith.constant 0 : index
    %c0_42 = arith.constant 0 : index
    %39 = vector.load %arg18[%c0_41, %c0_42] : memref<128x13xf32, #tpu.memory_space<vmem>>, vector<128x13xf32>
    %cst_43 = arith.constant dense<0.000000e+00> : vector<2x13xf32>
    %40 = tpu.matmul %38, %39, %cst_43 {dimension_numbers = #tpu.dot_dimension_numbers<[1], [0], [0], [1], [0, 0, 1, 1], [], []>} : vector<2x128xf32>, vector<128x13xf32>, vector<2x13xf32> -> vector<2x13xf32>
    %c0_44 = arith.constant 0 : index
    %c0_45 = arith.constant 0 : index
    %41 = vector.load %arg19[%c0_44, %c0_45] : memref<1x13xf32, #tpu.memory_space<vmem>>, vector<1x13xf32>
    %42 = vector.broadcast %41 : vector<1x13xf32> to vector<2x13xf32>
    %43 = arith.addf %40, %42 : vector<2x13xf32>
    %c0_46 = arith.constant 0 : index
    %c0_47 = arith.constant 0 : index
    %44 = vector.load %arg20[%c0_46, %c0_47] : memref<2x13xf32, #tpu.memory_space<vmem>>, vector<2x13xf32>
    tpu.vector_store %arg20[%c0_46, %c0_47], %43 {strides = array<i32>} : memref<2x13xf32, #tpu.memory_space<vmem>>, vector<2x13xf32>,
    return
  }
  func.func @transform_0(%arg0: i32) -> (i32, i32) {
    %c0_i32 = arith.constant 0 : i32
    %c0_i32_0 = arith.constant 0 : i32
    %c0_i32_1 = arith.constant 0 : i32
    return %c0_i32, %c0_i32_0 : i32, i32
  }
  func.func @transform_1(%arg0: i32) -> (i32, i32) {
    %c0_i32 = arith.constant 0 : i32
    %c0_i32_0 = arith.constant 0 : i32
    %c0_i32_1 = arith.constant 0 : i32
    return %c0_i32, %c0_i32_0 : i32, i32
  }
  func.func @transform_2(%arg0: i32) -> (i32, i32) {
    %c0_i32 = arith.constant 0 : i32
    %c0_i32_0 = arith.constant 0 : i32
    %c0_i32_1 = arith.constant 0 : i32
    return %c0_i32, %c0_i32_0 : i32, i32
  }
  func.func @transform_3(%arg0: i32) -> (i32, i32) {
    %c0_i32 = arith.constant 0 : i32
    %c0_i32_0 = arith.constant 0 : i32
    %c0_i32_1 = arith.constant 0 : i32
    return %c0_i32, %c0_i32_0 : i32, i32
  }
  func.func @transform_4(%arg0: i32) -> (i32, i32) {
    %c0_i32 = arith.constant 0 : i32
    %c0_i32_0 = arith.constant 0 : i32
    %c0_i32_1 = arith.constant 0 : i32
    return %c0_i32, %c0_i32_0 : i32, i32
  }
  func.func @transform_5(%arg0: i32) -> (i32, i32) {
    %c0_i32 = arith.constant 0 : i32
    %c0_i32_0 = arith.constant 0 : i32
    %c0_i32_1 = arith.constant 0 : i32
    return %c0_i32, %c0_i32_0 : i32, i32
  }
  func.func @transform_6(%arg0: i32) -> (i32, i32) {
    %c0_i32 = arith.constant 0 : i32
    %c0_i32_0 = arith.constant 0 : i32
    %c0_i32_1 = arith.constant 0 : i32
    return %c0_i32, %c0_i32_0 : i32, i32
  }
  func.func @transform_7(%arg0: i32) -> (i32, i32) {
    %c0_i32 = arith.constant 0 : i32
    %c0_i32_0 = arith.constant 0 : i32
    %c0_i32_1 = arith.constant 0 : i32
    return %c0_i32, %c0_i32_0 : i32, i32
  }
  func.func @transform_8(%arg0: i32) -> (i32, i32) {
    %c0_i32 = arith.constant 0 : i32
    %c0_i32_0 = arith.constant 0 : i32
    %c0_i32_1 = arith.constant 0 : i32
    return %c0_i32, %c0_i32_0 : i32, i32
  }
  func.func @transform_9(%arg0: i32) -> (i32, i32) {
    %c0_i32 = arith.constant 0 : i32
    %c0_i32_0 = arith.constant 0 : i32
    %c0_i32_1 = arith.constant 0 : i32
    return %c0_i32, %c0_i32_0 : i32, i32
  }
  func.func @transform_10(%arg0: i32) -> (i32, i32) {
    %c0_i32 = arith.constant 0 : i32
    %c0_i32_0 = arith.constant 0 : i32
    %c0_i32_1 = arith.constant 0 : i32
    return %c0_i32, %c0_i32_0 : i32, i32
  }
  func.func @transform_11(%arg0: i32) -> (i32, i32) {
    %c0_i32 = arith.constant 0 : i32
    %c0_i32_0 = arith.constant 0 : i32
    %c0_i32_1 = arith.constant 0 : i32
    return %c0_i32, %c0_i32_0 : i32, i32
  }
  func.func @transform_12(%arg0: i32) -> (i32, i32) {
    %c0_i32 = arith.constant 0 : i32
    %c0_i32_0 = arith.constant 0 : i32
    %c0_i32_1 = arith.constant 0 : i32
    return %c0_i32, %c0_i32_0 : i32, i32
  }
  func.func @transform_13(%arg0: i32) -> (i32, i32) {
    %c0_i32 = arith.constant 0 : i32
    %c0_i32_0 = arith.constant 0 : i32
    %c0_i32_1 = arith.constant 0 : i32
    return %c0_i32, %c0_i32_0 : i32, i32
  }
  func.func @transform_14(%arg0: i32) -> (i32, i32) {
    %c0_i32 = arith.constant 0 : i32
    %c0_i32_0 = arith.constant 0 : i32
    %c0_i32_1 = arith.constant 0 : i32
    return %c0_i32, %c0_i32_0 : i32, i32
  }
  func.func @transform_15(%arg0: i32) -> (i32, i32) {
    %c0_i32 = arith.constant 0 : i32
    %c0_i32_0 = arith.constant 0 : i32
    %c0_i32_1 = arith.constant 0 : i32
    return %c0_i32, %c0_i32_0 : i32, i32
  }
  func.func @transform_16(%arg0: i32) -> (i32, i32) {
    %c0_i32 = arith.constant 0 : i32
    %c0_i32_0 = arith.constant 0 : i32
    %c0_i32_1 = arith.constant 0 : i32
    return %c0_i32, %c0_i32_0 : i32, i32
  }
  func.func @transform_17(%arg0: i32) -> (i32, i32) {
    %c0_i32 = arith.constant 0 : i32
    %c0_i32_0 = arith.constant 0 : i32
    %c0_i32_1 = arith.constant 0 : i32
    return %c0_i32, %c0_i32_0 : i32, i32
  }
  func.func @transform_18(%arg0: i32) -> (i32, i32) {
    %c0_i32 = arith.constant 0 : i32
    %c0_i32_0 = arith.constant 0 : i32
    %c0_i32_1 = arith.constant 0 : i32
    return %c0_i32, %c0_i32_0 : i32, i32
  }
  func.func @transform_19(%arg0: i32) -> (i32, i32) {
    %c0_i32 = arith.constant 0 : i32
    %c0_i32_0 = arith.constant 0 : i32
    %c0_i32_1 = arith.constant 0 : i32
    return %c0_i32, %c0_i32_0 : i32, i32
  }
}

</mosaic_0001>

<llo_original>
// kernel: correction_net_forward.1
$region0: #{correction_net_forward.1}
  #allocation0 [shape = 'u32[]', space=smem, size = 0x4, offset = 0x4, fixed_abs, tag = 'smem constant byte address 0x4 - core index']
  #allocation1 [shape = 'u32[144,128]{1,0:T(1,128)}', space=vmem, size = 0x12000, scoped, tag = 'internal scratch']
  %s0 = inlined_call_operand.vmem [shape: bf16[2,4608], index: 0, kind: input, shape index: {}]
  %s1 = inlined_call_operand.vmem [shape: bf16[2,4608], index: 1, kind: input, shape index: {}]
  %s2 = inlined_call_operand.vmem [shape: f32[2,9], index: 2, kind: input, shape index: {}]
  %s3 = inlined_call_operand.vmem [shape: f32[2,4], index: 3, kind: input, shape index: {}]
  %s4 = inlined_call_operand.vmem [shape: bf16[4608,64], index: 4, kind: input, shape index: {}]
  %s5 = inlined_call_operand.vmem [shape: bf16[4608,64], index: 5, kind: input, shape index: {}]
  %s6 = inlined_call_operand.vmem [shape: f32[9,16], index: 6, kind: input, shape index: {}]
  %s7 = inlined_call_operand.vmem [shape: f32[1,16], index: 7, kind: input, shape index: {}]
  %s8 = inlined_call_operand.vmem [shape: f32[4,32], index: 8, kind: input, shape index: {}]
  %s9 = inlined_call_operand.vmem [shape: f32[1,32], index: 9, kind: input, shape index: {}]
  %s10 = inlined_call_operand.vmem [shape: f32[64,128], index: 10, kind: input, shape index: {}]
  %s11 = inlined_call_operand.vmem [shape: f32[64,128], index: 11, kind: input, shape index: {}]
  %s12 = inlined_call_operand.vmem [shape: f32[16,128], index: 12, kind: input, shape index: {}]
  %s13 = inlined_call_operand.vmem [shape: f32[32,128], index: 13, kind: input, shape index: {}]
  %s14 = inlined_call_operand.vmem [shape: f32[1,128], index: 14, kind: input, shape index: {}]
  %s15 = inlined_call_operand.vmem [shape: f32[128,128], index: 15, kind: input, shape index: {}]
  %s16 = inlined_call_operand.vmem [shape: f32[1,128], index: 16, kind: input, shape index: {}]
  %s17 = inlined_call_operand.vmem [shape: f32[128,13], index: 17, kind: input, shape index: {}]
  %s18 = inlined_call_operand.vmem [shape: f32[1,13], index: 18, kind: input, shape index: {}]
  %s19 = inlined_call_operand.hbm [shape: f32[2,13], index: 19, kind: output, shape index: {}]
  %s20 = sld [smem:[#allocation0]]
  $region86: #{correction_net_forward.1} parent=0
    _
  %s22 = ssub.s32 1, %s20
  %s23 = scalar_select 0, %s22, %s20
  $region1: #{correction_net_forward.1} parent=0
    #allocation2 [shape = 'u8[1024]{0}', space=vmem, size = 0x400, scoped, tag = 'output window, operand 0, single buffered']
    #allocation3 [shape = 's32[1]{0}', space=sflag, size = 0x4, scoped, tag = 'scoped memory for correction_net_forward.1']
    %24 = vsyncpa [#allocation3], 0
    // Predicated region
    $region2: #{correction_net_forward.1} parent=1 // pred_check
      _
    $region3: #{correction_net_forward.1} parent=1 // pred_check_branch
      %26 = sbr.rel (0) target = $region5
    $region4: #{correction_net_forward.1} parent=1 // pred_region
      _
    $region5: #{correction_net_forward.1} parent=1 // pred_fallthru
      _
    // Predicated region
    $region6: #{correction_net_forward.1} parent=1 // pred_check
      _
    $region7: #{correction_net_forward.1} parent=1 // pred_check_branch
      %28 = sbr.rel (0) target = $region9
    $region8: #{correction_net_forward.1} parent=1 // pred_region
      _
    $region9: #{correction_net_forward.1} parent=1 // pred_fallthru
      _
    // Predicated region
    $region10: #{correction_net_forward.1} parent=1 // pred_check
      _
    $region11: #{correction_net_forward.1} parent=1 // pred_check_branch
      %30 = sbr.rel (0) target = $region13
    $region12: #{correction_net_forward.1} parent=1 // pred_region
      _
    $region13: #{correction_net_forward.1} parent=1 // pred_fallthru
      _
    // Predicated region
    $region14: #{correction_net_forward.1} parent=1 // pred_check
      _
    $region15: #{correction_net_forward.1} parent=1 // pred_check_branch
      %32 = sbr.rel (0) target = $region17
    $region16: #{correction_net_forward.1} parent=1 // pred_region
      _
    $region17: #{correction_net_forward.1} parent=1 // pred_fallthru
      _
    // Predicated region
    $region18: #{correction_net_forward.1} parent=1 // pred_check
      _
    $region19: #{correction_net_forward.1} parent=1 // pred_check_branch
      %34 = sbr.rel (0) target = $region21
    $region20: #{correction_net_forward.1} parent=1 // pred_region
      _
    $region21: #{correction_net_forward.1} parent=1 // pred_fallthru
      _
    // Predicated region
    $region22: #{correction_net_forward.1} parent=1 // pred_check
      _
    $region23: #{correction_net_forward.1} parent=1 // pred_check_branch
      %36 = sbr.rel (0) target = $region25
    $region24: #{correction_net_forward.1} parent=1 // pred_region
      _
    $region25: #{correction_net_forward.1} parent=1 // pred_fallthru
      _
    // Predicated region
    $region26: #{correction_net_forward.1} parent=1 // pred_check
      _
    $region27: #{correction_net_forward.1} parent=1 // pred_check_branch
      %38 = sbr.rel (0) target = $region29
    $region28: #{correction_net_forward.1} parent=1 // pred_region
      _
    $region29: #{correction_net_forward.1} parent=1 // pred_fallthru
      _
    // Predicated region
    $region30: #{correction_net_forward.1} parent=1 // pred_check
      _
    $region31: #{correction_net_forward.1} parent=1 // pred_check_branch
      %40 = sbr.rel (0) target = $region33
    $region32: #{correction_net_forward.1} parent=1 // pred_region
      _
    $region33: #{correction_net_forward.1} parent=1 // pred_fallthru
      _
    // Predicated region
    $region34: #{correction_net_forward.1} parent=1 // pred_check
      _
    $region35: #{correction_net_forward.1} parent=1 // pred_check_branch
      %42 = sbr.rel (0) target = $region37
    $region36: #{correction_net_forward.1} parent=1 // pred_region
      _
    $region37: #{correction_net_forward.1} parent=1 // pred_fallthru
      _
    // Predicated region
    $region38: #{correction_net_forward.1} parent=1 // pred_check
      _
    $region39: #{correction_net_forward.1} parent=1 // pred_check_branch
      %44 = sbr.rel (0) target = $region41
    $region40: #{correction_net_forward.1} parent=1 // pred_region
      _
    $region41: #{correction_net_forward.1} parent=1 // pred_fallthru
      _
    // Predicated region
    $region42: #{correction_net_forward.1} parent=1 // pred_check
      _
    $region43: #{correction_net_forward.1} parent=1 // pred_check_branch
      %46 = sbr.rel (0) target = $region45
    $region44: #{correction_net_forward.1} parent=1 // pred_region
      _
    $region45: #{correction_net_forward.1} parent=1 // pred_fallthru
      _
    // Predicated region
    $region46: #{correction_net_forward.1} parent=1 // pred_check
      _
    $region47: #{correction_net_forward.1} parent=1 // pred_check_branch
      %48 = sbr.rel (0) target = $region49
    $region48: #{correction_net_forward.1} parent=1 // pred_region
      _
    $region49: #{correction_net_forward.1} parent=1 // pred_fallthru
      _
    // Predicated region
    $region50: #{correction_net_forward.1} parent=1 // pred_check
      _
    $region51: #{correction_net_forward.1} parent=1 // pred_check_branch
      %50 = sbr.rel (0) target = $region53
    $region52: #{correction_net_forward.1} parent=1 // pred_region
      _
    $region53: #{correction_net_forward.1} parent=1 // pred_fallthru
      _
    // Predicated region
    $region54: #{correction_net_forward.1} parent=1 // pred_check
      _
    $region55: #{correction_net_forward.1} parent=1 // pred_check_branch
      %52 = sbr.rel (0) target = $region57
    $region56: #{correction_net_forward.1} parent=1 // pred_region
      _
    $region57: #{correction_net_forward.1} parent=1 // pred_fallthru
      _
    // Predicated region
    $region58: #{correction_net_forward.1} parent=1 // pred_check
      _
    $region59: #{correction_net_forward.1} parent=1 // pred_check_branch
      %54 = sbr.rel (0) target = $region61
    $region60: #{correction_net_forward.1} parent=1 // pred_region
      _
    $region61: #{correction_net_forward.1} parent=1 // pred_fallthru
      _
    // Predicated region
    $region62: #{correction_net_forward.1} parent=1 // pred_check
      _
    $region63: #{correction_net_forward.1} parent=1 // pred_check_branch
      %56 = sbr.rel (0) target = $region65
    $region64: #{correction_net_forward.1} parent=1 // pred_region
      _
    $region65: #{correction_net_forward.1} parent=1 // pred_fallthru
      _
    // Predicated region
    $region66: #{correction_net_forward.1} parent=1 // pred_check
      _
    $region67: #{correction_net_forward.1} parent=1 // pred_check_branch
      %58 = sbr.rel (0) target = $region69
    $region68: #{correction_net_forward.1} parent=1 // pred_region
      _
    $region69: #{correction_net_forward.1} parent=1 // pred_fallthru
      _
    // Predicated region
    $region70: #{correction_net_forward.1} parent=1 // pred_check
      _
    $region71: #{correction_net_forward.1} parent=1 // pred_check_branch
      %60 = sbr.rel (0) target = $region73
    $region72: #{correction_net_forward.1} parent=1 // pred_region
      _
    $region73: #{correction_net_forward.1} parent=1 // pred_fallthru
      _
    // Predicated region
    $region74: #{correction_net_forward.1} parent=1 // pred_check
      _
    $region75: #{correction_net_forward.1} parent=1 // pred_check_branch
      %62 = sbr.rel (0) target = $region77
    $region76: #{correction_net_forward.1} parent=1 // pred_region
      _
    $region77: #{correction_net_forward.1} parent=1 // pred_fallthru
      _
    %v64 = vld [vmem:[%s0] sm:$0xff]
    %v65 = vld [vmem:[%s0 + $0x8] sm:$0xff]
    %v66 = vld [vmem:[%s0 + $0x10] sm:$0xff]
    %v67 = vld [vmem:[%s0 + $0x18] sm:$0xff]
    %v68 = vld [vmem:[%s0 + $0x20] sm:$0xf]
    %v69 = vld [vmem:[%s4] sm:$0xf]
    %v70 = vld [vmem:[%s4 + $0x4] sm:$0xf]
    %v71 = vld [vmem:[%s4 + $0x8] sm:$0xf]
    %v72 = vld [vmem:[%s4 + $0xc] sm:$0xf]
    %v73 = vld [vmem:[%s4 + $0x10] sm:$0xf]
    %v74 = vld [vmem:[%s4 + $0x14] sm:$0xf]
    %v75 = vld [vmem:[%s4 + $0x18] sm:$0xf]
    %v76 = vld [vmem:[%s4 + $0x1c] sm:$0xf]
    %v77 = vld [vmem:[%s4 + $0x20] sm:$0xf]
    %v78 = vld [vmem:[%s4 + $0x24] sm:$0xf]
    %v79 = vld [vmem:[%s4 + $0x28] sm:$0xf]
    %v80 = vld [vmem:[%s4 + $0x2c] sm:$0xf]
    %v81 = vld [vmem:[%s4 + $0x30] sm:$0xf]
    %v82 = vld [vmem:[%s4 + $0x34] sm:$0xf]
    %v83 = vld [vmem:[%s4 + $0x38] sm:$0xf]
    %v84 = vld [vmem:[%s4 + $0x3c] sm:$0xf]
    %v85 = vld [vmem:[%s4 + $0x40] sm:$0xf]
    %v86 = vld [vmem:[%s4 + $0x44] sm:$0xf]
    %v87 = vld [vmem:[%s4 + $0x48] sm:$0xf]
    %v88 = vld [vmem:[%s4 + $0x4c] sm:$0xf]
    %v89 = vld [vmem:[%s4 + $0x50] sm:$0xf]
    %v90 = vld [vmem:[%s4 + $0x54] sm:$0xf]
    %v91 = vld [vmem:[%s4 + $0x58] sm:$0xf]
    %v92 = vld [vmem:[%s4 + $0x5c] sm:$0xf]
    %v93 = vld [vmem:[%s4 + $0x60] sm:$0xf]
    %v94 = vld [vmem:[%s4 + $0x64] sm:$0xf]
    %v95 = vld [vmem:[%s4 + $0x68] sm:$0xf]
    %v96 = vld [vmem:[%s4 + $0x6c] sm:$0xf]
    %v97 = vld [vmem:[%s4 + $0x70] sm:$0xf]
    %v98 = vld [vmem:[%s4 + $0x74] sm:$0xf]
    %v99 = vld [vmem:[%s4 + $0x78] sm:$0xf]
    %v100 = vld [vmem:[%s4 + $0x7c] sm:$0xf]
    %v101 = vld [vmem:[%s4 + $0x80] sm:$0xf]
    %v102 = vld [vmem:[%s4 + $0x84] sm:$0xf]
    %v103 = vld [vmem:[%s4 + $0x88] sm:$0xf]
    %v104 = vld [vmem:[%s4 + $0x8c] sm:$0xf]
    %v105 = vld [vmem:[%s4 + $0x90] sm:$0xf]
    %v106 = vld [vmem:[%s4 + $0x94] sm:$0xf]
    %v107 = vld [vmem:[%s4 + $0x98] sm:$0xf]
    %v108 = vld [vmem:[%s4 + $0x9c] sm:$0xf]
    %v109 = vld [vmem:[%s4 + $0xa0] sm:$0xf]
    %v110 = vld [vmem:[%s4 + $0xa4] sm:$0xf]
    %v111 = vld [vmem:[%s4 + $0xa8] sm:$0xf]
    %v112 = vld [vmem:[%s4 + $0xac] sm:$0xf]
    %v113 = vld [vmem:[%s4 + $0xb0] sm:$0xf]
    %v114 = vld [vmem:[%s4 + $0xb4] sm:$0xf]
    %v115 = vld [vmem:[%s4 + $0xb8] sm:$0xf]
    %v116 = vld [vmem:[%s4 + $0xbc] sm:$0xf]
    %v117 = vld [vmem:[%s4 + $0xc0] sm:$0xf]
    %v118 = vld [vmem:[%s4 + $0xc4] sm:$0xf]
    %v119 = vld [vmem:[%s4 + $0xc8] sm:$0xf]
    %v120 = vld [vmem:[%s4 + $0xcc] sm:$0xf]
    %v121 = vld [vmem:[%s4 + $0xd0] sm:$0xf]
    %v122 = vld [vmem:[%s4 + $0xd4] sm:$0xf]
    %v123 = vld [vmem:[%s4 + $0xd8] sm:$0xf]
    %v124 = vld [vmem:[%s4 + $0xdc] sm:$0xf]
    %v125 = vld [vmem:[%s4 + $0xe0] sm:$0xf]
    %v126 = vld [vmem:[%s4 + $0xe4] sm:$0xf]
    %v127 = vld [vmem:[%s4 + $0xe8] sm:$0xf]
    %v128 = vld [vmem:[%s4 + $0xec] sm:$0xf]
    %v129 = vld [vmem:[%s4 + $0xf0] sm:$0xf]
    %v130 = vld [vmem:[%s4 + $0xf4] sm:$0xf]
    %v131 = vld [vmem:[%s4 + $0xf8] sm:$0xf]
    %v132 = vld [vmem:[%s4 + $0xfc] sm:$0xf]
    %v133 = vld [vmem:[%s4 + $0x100] sm:$0xf]
    %v134 = vld [vmem:[%s4 + $0x104] sm:$0xf]
    %v135 = vld [vmem:[%s4 + $0x108] sm:$0xf]
    %v136 = vld [vmem:[%s4 + $0x10c] sm:$0xf]
    %v137 = vld [vmem:[%s4 + $0x110] sm:$0xf]
    %v138 = vld [vmem:[%s4 + $0x114] sm:$0xf]
    %v139 = vld [vmem:[%s4 + $0x118] sm:$0xf]
    %v140 = vld [vmem:[%s4 + $0x11c] sm:$0xf]
    %v141 = vld [vmem:[%s4 + $0x120] sm:$0xf]
    %v142 = vld [vmem:[%s4 + $0x124] sm:$0xf]
    %v143 = vld [vmem:[%s4 + $0x128] sm:$0xf]
    %v144 = vld [vmem:[%s4 + $0x12c] sm:$0xf]
    %v145 = vld [vmem:[%s4 + $0x130] sm:$0xf]
    %v146 = vld [vmem:[%s4 + $0x134] sm:$0xf]
    %v147 = vld [vmem:[%s4 + $0x138] sm:$0xf]
    %v148 = vld [vmem:[%s4 + $0x13c] sm:$0xf]
    %v149 = vld [vmem:[%s4 + $0x140] sm:$0xf]
    %v150 = vld [vmem:[%s4 + $0x144] sm:$0xf]
    %v151 = vld [vmem:[%s4 + $0x148] sm:$0xf]
    %v152 = vld [vmem:[%s4 + $0x14c] sm:$0xf]
    %v153 = vld [vmem:[%s4 + $0x150] sm:$0xf]
    %v154 = vld [vmem:[%s4 + $0x154] sm:$0xf]
    %v155 = vld [vmem:[%s4 + $0x158] sm:$0xf]
    %v156 = vld [vmem:[%s4 + $0x15c] sm:$0xf]
    %v157 = vld [vmem:[%s4 + $0x160] sm:$0xf]
    %v158 = vld [vmem:[%s4 + $0x164] sm:$0xf]
    %v159 = vld [vmem:[%s4 + $0x168] sm:$0xf]
    %v160 = vld [vmem:[%s4 + $0x16c] sm:$0xf]
    %v161 = vld [vmem:[%s4 + $0x170] sm:$0xf]
    %v162 = vld [vmem:[%s4 + $0x174] sm:$0xf]
    %v163 = vld [vmem:[%s4 + $0x178] sm:$0xf]
    %v164 = vld [vmem:[%s4 + $0x17c] sm:$0xf]
    %v165 = vld [vmem:[%s4 + $0x180] sm:$0xf]
    %v166 = vld [vmem:[%s4 + $0x184] sm:$0xf]
    %v167 = vld [vmem:[%s4 + $0x188] sm:$0xf]
    %v168 = vld [vmem:[%s4 + $0x18c] sm:$0xf]
    %v169 = vld [vmem:[%s4 + $0x190] sm:$0xf]
    %v170 = vld [vmem:[%s4 + $0x194] sm:$0xf]
    %v171 = vld [vmem:[%s4 + $0x198] sm:$0xf]
    %v172 = vld [vmem:[%s4 + $0x19c] sm:$0xf]
    %v173 = vld [vmem:[%s4 + $0x1a0] sm:$0xf]
    %v174 = vld [vmem:[%s4 + $0x1a4] sm:$0xf]
    %v175 = vld [vmem:[%s4 + $0x1a8] sm:$0xf]
    %v176 = vld [vmem:[%s4 + $0x1ac] sm:$0xf]
    %v177 = vld [vmem:[%s4 + $0x1b0] sm:$0xf]
    %v178 = vld [vmem:[%s4 + $0x1b4] sm:$0xf]
    %v179 = vld [vmem:[%s4 + $0x1b8] sm:$0xf]
    %v180 = vld [vmem:[%s4 + $0x1bc] sm:$0xf]
    %v181 = vld [vmem:[%s4 + $0x1c0] sm:$0xf]
    %v182 = vld [vmem:[%s4 + $0x1c4] sm:$0xf]
    %v183 = vld [vmem:[%s4 + $0x1c8] sm:$0xf]
    %v184 = vld [vmem:[%s4 + $0x1cc] sm:$0xf]
    %v185 = vld [vmem:[%s4 + $0x1d0] sm:$0xf]
    %v186 = vld [vmem:[%s4 + $0x1d4] sm:$0xf]
    %v187 = vld [vmem:[%s4 + $0x1d8] sm:$0xf]
    %v188 = vld [vmem:[%s4 + $0x1dc] sm:$0xf]
    %v189 = vld [vmem:[%s4 + $0x1e0] sm:$0xf]
    %v190 = vld [vmem:[%s4 + $0x1e4] sm:$0xf]
    %v191 = vld [vmem:[%s4 + $0x1e8] sm:$0xf]
    %v192 = vld [vmem:[%s4 + $0x1ec] sm:$0xf]
    %v193 = vld [vmem:[%s4 + $0x1f0] sm:$0xf]
    %v194 = vld [vmem:[%s4 + $0x1f4] sm:$0xf]
    %v195 = vld [vmem:[%s4 + $0x1f8] sm:$0xf]
    %v196 = vld [vmem:[%s4 + $0x1fc] sm:$0xf]
    %v197 = vld [vmem:[%s4 + $0x200] sm:$0xf]
    %v198 = vld [vmem:[%s4 + $0x204] sm:$0xf]
    %v199 = vld [vmem:[%s4 + $0x208] sm:$0xf]
    %v200 = vld [vmem:[%s4 + $0x20c] sm:$0xf]
    %v201 = vld [vmem:[%s4 + $0x210] sm:$0xf]
    %v202 = vld [vmem:[%s4 + $0x214] sm:$0xf]
    %v203 = vld [vmem:[%s4 + $0x218] sm:$0xf]
    %v204 = vld [vmem:[%s4 + $0x21c] sm:$0xf]
    %v205 = vld [vmem:[%s4 + $0x220] sm:$0xf]
    %v206 = vld [vmem:[%s4 + $0x224] sm:$0xf]
    %v207 = vld [vmem:[%s4 + $0x228] sm:$0xf]
    %v208 = vld [vmem:[%s4 + $0x22c] sm:$0xf]
    %v209 = vld [vmem:[%s4 + $0x230] sm:$0xf]
    %v210 = vld [vmem:[%s4 + $0x234] sm:$0xf]
    %v211 = vld [vmem:[%s4 + $0x238] sm:$0xf]
    %v212 = vld [vmem:[%s4 + $0x23c] sm:$0xf]
    %v213 = vld [vmem:[%s4 + $0x240] sm:$0xf]
    %v214 = vld [vmem:[%s4 + $0x244] sm:$0xf]
    %v215 = vld [vmem:[%s4 + $0x248] sm:$0xf]
    %v216 = vld [vmem:[%s4 + $0x24c] sm:$0xf]
    %v217 = vld [vmem:[%s4 + $0x250] sm:$0xf]
    %v218 = vld [vmem:[%s4 + $0x254] sm:$0xf]
    %v219 = vld [vmem:[%s4 + $0x258] sm:$0xf]
    %v220 = vld [vmem:[%s4 + $0x25c] sm:$0xf]
    %v221 = vld [vmem:[%s4 + $0x260] sm:$0xf]
    %v222 = vld [vmem:[%s4 + $0x264] sm:$0xf]
    %v223 = vld [vmem:[%s4 + $0x268] sm:$0xf]
    %v224 = vld [vmem:[%s4 + $0x26c] sm:$0xf]
    %v225 = vld [vmem:[%s4 + $0x270] sm:$0xf]
    %v226 = vld [vmem:[%s4 + $0x274] sm:$0xf]
    %v227 = vld [vmem:[%s4 + $0x278] sm:$0xf]
    %v228 = vld [vmem:[%s4 + $0x27c] sm:$0xf]
    %v229 = vld [vmem:[%s4 + $0x280] sm:$0xf]
    %v230 = vld [vmem:[%s4 + $0x284] sm:$0xf]
    %v231 = vld [vmem:[%s4 + $0x288] sm:$0xf]
    %v232 = vld [vmem:[%s4 + $0x28c] sm:$0xf]
    %v233 = vld [vmem:[%s4 + $0x290] sm:$0xf]
    %v234 = vld [vmem:[%s4 + $0x294] sm:$0xf]
    %v235 = vld [vmem:[%s4 + $0x298] sm:$0xf]
    %v236 = vld [vmem:[%s4 + $0x29c] sm:$0xf]
    %v237 = vld [vmem:[%s4 + $0x2a0] sm:$0xf]
    %v238 = vld [vmem:[%s4 + $0x2a4] sm:$0xf]
    %v239 = vld [vmem:[%s4 + $0x2a8] sm:$0xf]
    %v240 = vld [vmem:[%s4 + $0x2ac] sm:$0xf]
    %v241 = vld [vmem:[%s4 + $0x2b0] sm:$0xf]
    %v242 = vld [vmem:[%s4 + $0x2b4] sm:$0xf]
    %v243 = vld [vmem:[%s4 + $0x2b8] sm:$0xf]
    %v244 = vld [vmem:[%s4 + $0x2bc] sm:$0xf]
    %v245 = vld [vmem:[%s4 + $0x2c0] sm:$0xf]
    %v246 = vld [vmem:[%s4 + $0x2c4] sm:$0xf]
    %v247 = vld [vmem:[%s4 + $0x2c8] sm:$0xf]
    %v248 = vld [vmem:[%s4 + $0x2cc] sm:$0xf]
    %v249 = vld [vmem:[%s4 + $0x2d0] sm:$0xf]
    %v250 = vld [vmem:[%s4 + $0x2d4] sm:$0xf]
    %v251 = vld [vmem:[%s4 + $0x2d8] sm:$0xf]
    %v252 = vld [vmem:[%s4 + $0x2dc] sm:$0xf]
    %v253 = vld [vmem:[%s4 + $0x2e0] sm:$0xf]
    %v254 = vld [vmem:[%s4 + $0x2e4] sm:$0xf]
    %v255 = vld [vmem:[%s4 + $0x2e8] sm:$0xf]
    %v256 = vld [vmem:[%s4 + $0x2ec] sm:$0xf]
    %v257 = vld [vmem:[%s4 + $0x2f0] sm:$0xf]
    %v258 = vld [vmem:[%s4 + $0x2f4] sm:$0xf]
    %v259 = vld [vmem:[%s4 + $0x2f8] sm:$0xf]
    %v260 = vld [vmem:[%s4 + $0x2fc] sm:$0xf]
    %v261 = vld [vmem:[%s4 + $0x300] sm:$0xf]
    %v262 = vld [vmem:[%s4 + $0x304] sm:$0xf]
    %v263 = vld [vmem:[%s4 + $0x308] sm:$0xf]
    %v264 = vld [vmem:[%s4 + $0x30c] sm:$0xf]
    %v265 = vld [vmem:[%s4 + $0x310] sm:$0xf]
    %v266 = vld [vmem:[%s4 + $0x314] sm:$0xf]
    %v267 = vld [vmem:[%s4 + $0x318] sm:$0xf]
    %v268 = vld [vmem:[%s4 + $0x31c] sm:$0xf]
    %v269 = vld [vmem:[%s4 + $0x320] sm:$0xf]
    %v270 = vld [vmem:[%s4 + $0x324] sm:$0xf]
    %v271 = vld [vmem:[%s4 + $0x328] sm:$0xf]
    %v272 = vld [vmem:[%s4 + $0x32c] sm:$0xf]
    %v273 = vld [vmem:[%s4 + $0x330] sm:$0xf]
    %v274 = vld [vmem:[%s4 + $0x334] sm:$0xf]
    %v275 = vld [vmem:[%s4 + $0x338] sm:$0xf]
    %v276 = vld [vmem:[%s4 + $0x33c] sm:$0xf]
    %v277 = vld [vmem:[%s4 + $0x340] sm:$0xf]
    %v278 = vld [vmem:[%s4 + $0x344] sm:$0xf]
    %v279 = vld [vmem:[%s4 + $0x348] sm:$0xf]
    %v280 = vld [vmem:[%s4 + $0x34c] sm:$0xf]
    %v281 = vld [vmem:[%s4 + $0x350] sm:$0xf]
    %v282 = vld [vmem:[%s4 + $0x354] sm:$0xf]
    %v283 = vld [vmem:[%s4 + $0x358] sm:$0xf]
    %v284 = vld [vmem:[%s4 + $0x35c] sm:$0xf]
    %v285 = vld [vmem:[%s4 + $0x360] sm:$0xf]
    %v286 = vld [vmem:[%s4 + $0x364] sm:$0xf]
    %v287 = vld [vmem:[%s4 + $0x368] sm:$0xf]
    %v288 = vld [vmem:[%s4 + $0x36c] sm:$0xf]
    %v289 = vld [vmem:[%s4 + $0x370] sm:$0xf]
    %v290 = vld [vmem:[%s4 + $0x374] sm:$0xf]
    %v291 = vld [vmem:[%s4 + $0x378] sm:$0xf]
    %v292 = vld [vmem:[%s4 + $0x37c] sm:$0xf]
    %v293 = vld [vmem:[%s4 + $0x380] sm:$0xf]
    %v294 = vld [vmem:[%s4 + $0x384] sm:$0xf]
    %v295 = vld [vmem:[%s4 + $0x388] sm:$0xf]
    %v296 = vld [vmem:[%s4 + $0x38c] sm:$0xf]
    %v297 = vld [vmem:[%s4 + $0x390] sm:$0xf]
    %v298 = vld [vmem:[%s4 + $0x394] sm:$0xf]
    %v299 = vld [vmem:[%s4 + $0x398] sm:$0xf]
    %v300 = vld [vmem:[%s4 + $0x39c] sm:$0xf]
    %v301 = vld [vmem:[%s4 + $0x3a0] sm:$0xf]
    %v302 = vld [vmem:[%s4 + $0x3a4] sm:$0xf]
    %v303 = vld [vmem:[%s4 + $0x3a8] sm:$0xf]
    %v304 = vld [vmem:[%s4 + $0x3ac] sm:$0xf]
    %v305 = vld [vmem:[%s4 + $0x3b0] sm:$0xf]
    %v306 = vld [vmem:[%s4 + $0x3b4] sm:$0xf]
    %v307 = vld [vmem:[%s4 + $0x3b8] sm:$0xf]
    %v308 = vld [vmem:[%s4 + $0x3bc] sm:$0xf]
    %v309 = vld [vmem:[%s4 + $0x3c0] sm:$0xf]
    %v310 = vld [vmem:[%s4 + $0x3c4] sm:$0xf]
    %v311 = vld [vmem:[%s4 + $0x3c8] sm:$0xf]
    %v312 = vld [vmem:[%s4 + $0x3cc] sm:$0xf]
    %v313 = vld [vmem:[%s4 + $0x3d0] sm:$0xf]
    %v314 = vld [vmem:[%s4 + $0x3d4] sm:$0xf]
    %v315 = vld [vmem:[%s4 + $0x3d8] sm:$0xf]
    %v316 = vld [vmem:[%s4 + $0x3dc] sm:$0xf]
    %v317 = vld [vmem:[%s4 + $0x3e0] sm:$0xf]
    %v318 = vld [vmem:[%s4 + $0x3e4] sm:$0xf]
    %v319 = vld [vmem:[%s4 + $0x3e8] sm:$0xf]
    %v320 = vld [vmem:[%s4 + $0x3ec] sm:$0xf]
    %v321 = vld [vmem:[%s4 + $0x3f0] sm:$0xf]
    %v322 = vld [vmem:[%s4 + $0x3f4] sm:$0xf]
    %v323 = vld [vmem:[%s4 + $0x3f8] sm:$0xf]
    %v324 = vld [vmem:[%s4 + $0x3fc] sm:$0xf]
    %v325 = vld [vmem:[%s4 + $0x400] sm:$0xf]
    %v326 = vld [vmem:[%s4 + $0x404] sm:$0xf]
    %v327 = vld [vmem:[%s4 + $0x408] sm:$0xf]
    %v328 = vld [vmem:[%s4 + $0x40c] sm:$0xf]
    %v329 = vld [vmem:[%s4 + $0x410] sm:$0xf]
    %v330 = vld [vmem:[%s4 + $0x414] sm:$0xf]
    %v331 = vld [vmem:[%s4 + $0x418] sm:$0xf]
    %v332 = vld [vmem:[%s4 + $0x41c] sm:$0xf]
    %v333 = vld [vmem:[%s4 + $0x420] sm:$0xf]
    %v334 = vld [vmem:[%s4 + $0x424] sm:$0xf]
    %v335 = vld [vmem:[%s4 + $0x428] sm:$0xf]
    %v336 = vld [vmem:[%s4 + $0x42c] sm:$0xf]
    %v337 = vld [vmem:[%s4 + $0x430] sm:$0xf]
    %v338 = vld [vmem:[%s4 + $0x434] sm:$0xf]
    %v339 = vld [vmem:[%s4 + $0x438] sm:$0xf]
    %v340 = vld [vmem:[%s4 + $0x43c] sm:$0xf]
    %v341 = vld [vmem:[%s4 + $0x440] sm:$0xf]
    %v342 = vld [vmem:[%s4 + $0x444] sm:$0xf]
    %v343 = vld [vmem:[%s4 + $0x448] sm:$0xf]
    %v344 = vld [vmem:[%s4 + $0x44c] sm:$0xf]
    %v345 = vld [vmem:[%s4 + $0x450] sm:$0xf]
    %v346 = vld [vmem:[%s4 + $0x454] sm:$0xf]
    %v347 = vld [vmem:[%s4 + $0x458] sm:$0xf]
    %v348 = vld [vmem:[%s4 + $0x45c] sm:$0xf]
    %v349 = vld [vmem:[%s4 + $0x460] sm:$0xf]
    %v350 = vld [vmem:[%s4 + $0x464] sm:$0xf]
    %v351 = vld [vmem:[%s4 + $0x468] sm:$0xf]
    %v352 = vld [vmem:[%s4 + $0x46c] sm:$0xf]
    %v353 = vld [vmem:[%s4 + $0x470] sm:$0xf]
    %v354 = vld [vmem:[%s4 + $0x474] sm:$0xf]
    %v355 = vld [vmem:[%s4 + $0x478] sm:$0xf]
    %v356 = vld [vmem:[%s4 + $0x47c] sm:$0xf]
    %v357 = vld [vmem:[%s4 + $0x480] sm:$0xf]
    %v358 = vld [vmem:[%s4 + $0x484] sm:$0xf]
    %v359 = vld [vmem:[%s4 + $0x488] sm:$0xf]
    %v360 = vld [vmem:[%s4 + $0x48c] sm:$0xf]
    %v361 = vld [vmem:[%s4 + $0x490] sm:$0xf]
    %v362 = vld [vmem:[%s4 + $0x494] sm:$0xf]
    %v363 = vld [vmem:[%s4 + $0x498] sm:$0xf]
    %v364 = vld [vmem:[%s4 + $0x49c] sm:$0xf]
    %v365 = vld [vmem:[%s4 + $0x4a0] sm:$0xf]
    %v366 = vld [vmem:[%s4 + $0x4a4] sm:$0xf]
    %v367 = vld [vmem:[%s4 + $0x4a8] sm:$0xf]
    %v368 = vld [vmem:[%s4 + $0x4ac] sm:$0xf]
    %v369 = vld [vmem:[%s4 + $0x4b0] sm:$0xf]
    %v370 = vld [vmem:[%s4 + $0x4b4] sm:$0xf]
    %v371 = vld [vmem:[%s4 + $0x4b8] sm:$0xf]
    %v372 = vld [vmem:[%s4 + $0x4bc] sm:$0xf]
    %v373 = vld [vmem:[%s4 + $0x4c0] sm:$0xf]
    %v374 = vld [vmem:[%s4 + $0x4c4] sm:$0xf]
    %v375 = vld [vmem:[%s4 + $0x4c8] sm:$0xf]
    %v376 = vld [vmem:[%s4 + $0x4cc] sm:$0xf]
    %v377 = vld [vmem:[%s4 + $0x4d0] sm:$0xf]
    %v378 = vld [vmem:[%s4 + $0x4d4] sm:$0xf]
    %v379 = vld [vmem:[%s4 + $0x4d8] sm:$0xf]
    %v380 = vld [vmem:[%s4 + $0x4dc] sm:$0xf]
    %v381 = vld [vmem:[%s4 + $0x4e0] sm:$0xf]
    %v382 = vld [vmem:[%s4 + $0x4e4] sm:$0xf]
    %v383 = vld [vmem:[%s4 + $0x4e8] sm:$0xf]
    %v384 = vld [vmem:[%s4 + $0x4ec] sm:$0xf]
    %v385 = vld [vmem:[%s4 + $0x4f0] sm:$0xf]
    %v386 = vld [vmem:[%s4 + $0x4f4] sm:$0xf]
    %v387 = vld [vmem:[%s4 + $0x4f8] sm:$0xf]
    %v388 = vld [vmem:[%s4 + $0x4fc] sm:$0xf]
    %v389 = vld [vmem:[%s4 + $0x500] sm:$0xf]
    %v390 = vld [vmem:[%s4 + $0x504] sm:$0xf]
    %v391 = vld [vmem:[%s4 + $0x508] sm:$0xf]
    %v392 = vld [vmem:[%s4 + $0x50c] sm:$0xf]
    %v393 = vld [vmem:[%s4 + $0x510] sm:$0xf]
    %v394 = vld [vmem:[%s4 + $0x514] sm:$0xf]
    %v395 = vld [vmem:[%s4 + $0x518] sm:$0xf]
    %v396 = vld [vmem:[%s4 + $0x51c] sm:$0xf]
    %v397 = vld [vmem:[%s4 + $0x520] sm:$0xf]
    %v398 = vld [vmem:[%s4 + $0x524] sm:$0xf]
    %v399 = vld [vmem:[%s4 + $0x528] sm:$0xf]
    %v400 = vld [vmem:[%s4 + $0x52c] sm:$0xf]
    %v401 = vld [vmem:[%s4 + $0x530] sm:$0xf]
    %v402 = vld [vmem:[%s4 + $0x534] sm:$0xf]
    %v403 = vld [vmem:[%s4 + $0x538] sm:$0xf]
    %v404 = vld [vmem:[%s4 + $0x53c] sm:$0xf]
    %v405 = vld [vmem:[%s4 + $0x540] sm:$0xf]
    %v406 = vld [vmem:[%s4 + $0x544] sm:$0xf]
    %v407 = vld [vmem:[%s4 + $0x548] sm:$0xf]
    %v408 = vld [vmem:[%s4 + $0x54c] sm:$0xf]
    %v409 = vld [vmem:[%s4 + $0x550] sm:$0xf]
    %v410 = vld [vmem:[%s4 + $0x554] sm:$0xf]
    %v411 = vld [vmem:[%s4 + $0x558] sm:$0xf]
    %v412 = vld [vmem:[%s4 + $0x55c] sm:$0xf]
    %v413 = vld [vmem:[%s4 + $0x560] sm:$0xf]
    %v414 = vld [vmem:[%s4 + $0x564] sm:$0xf]
    %v415 = vld [vmem:[%s4 + $0x568] sm:$0xf]
    %v416 = vld [vmem:[%s4 + $0x56c] sm:$0xf]
    %v417 = vld [vmem:[%s4 + $0x570] sm:$0xf]
    %v418 = vld [vmem:[%s4 + $0x574] sm:$0xf]
    %v419 = vld [vmem:[%s4 + $0x578] sm:$0xf]
    %v420 = vld [vmem:[%s4 + $0x57c] sm:$0xf]
    %v421 = vld [vmem:[%s4 + $0x580] sm:$0xf]
    %v422 = vld [vmem:[%s4 + $0x584] sm:$0xf]
    %v423 = vld [vmem:[%s4 + $0x588] sm:$0xf]
    %v424 = vld [vmem:[%s4 + $0x58c] sm:$0xf]
    %v425 = vld [vmem:[%s4 + $0x590] sm:$0xf]
    %v426 = vld [vmem:[%s4 + $0x594] sm:$0xf]
    %v427 = vld [vmem:[%s4 + $0x598] sm:$0xf]
    %v428 = vld [vmem:[%s4 + $0x59c] sm:$0xf]
    %v429 = vld [vmem:[%s4 + $0x5a0] sm:$0xf]
    %v430 = vld [vmem:[%s4 + $0x5a4] sm:$0xf]
    %v431 = vld [vmem:[%s4 + $0x5a8] sm:$0xf]
    %v432 = vld [vmem:[%s4 + $0x5ac] sm:$0xf]
    %v433 = vld [vmem:[%s4 + $0x5b0] sm:$0xf]
    %v434 = vld [vmem:[%s4 + $0x5b4] sm:$0xf]
    %v435 = vld [vmem:[%s4 + $0x5b8] sm:$0xf]
    %v436 = vld [vmem:[%s4 + $0x5bc] sm:$0xf]
    %v437 = vld [vmem:[%s4 + $0x5c0] sm:$0xf]
    %v438 = vld [vmem:[%s4 + $0x5c4] sm:$0xf]
    %v439 = vld [vmem:[%s4 + $0x5c8] sm:$0xf]
    %v440 = vld [vmem:[%s4 + $0x5cc] sm:$0xf]
    %v441 = vld [vmem:[%s4 + $0x5d0] sm:$0xf]
    %v442 = vld [vmem:[%s4 + $0x5d4] sm:$0xf]
    %v443 = vld [vmem:[%s4 + $0x5d8] sm:$0xf]
    %v444 = vld [vmem:[%s4 + $0x5dc] sm:$0xf]
    %v445 = vld [vmem:[%s4 + $0x5e0] sm:$0xf]
    %v446 = vld [vmem:[%s4 + $0x5e4] sm:$0xf]
    %v447 = vld [vmem:[%s4 + $0x5e8] sm:$0xf]
    %v448 = vld [vmem:[%s4 + $0x5ec] sm:$0xf]
    %v449 = vld [vmem:[%s4 + $0x5f0] sm:$0xf]
    %v450 = vld [vmem:[%s4 + $0x5f4] sm:$0xf]
    %v451 = vld [vmem:[%s4 + $0x5f8] sm:$0xf]
    %v452 = vld [vmem:[%s4 + $0x5fc] sm:$0xf]
    %v453 = vld [vmem:[%s4 + $0x600] sm:$0xf]
    %v454 = vld [vmem:[%s4 + $0x604] sm:$0xf]
    %v455 = vld [vmem:[%s4 + $0x608] sm:$0xf]
    %v456 = vld [vmem:[%s4 + $0x60c] sm:$0xf]
    %v457 = vld [vmem:[%s4 + $0x610] sm:$0xf]
    %v458 = vld [vmem:[%s4 + $0x614] sm:$0xf]
    %v459 = vld [vmem:[%s4 + $0x618] sm:$0xf]
    %v460 = vld [vmem:[%s4 + $0x61c] sm:$0xf]
    %v461 = vld [vmem:[%s4 + $0x620] sm:$0xf]
    %v462 = vld [vmem:[%s4 + $0x624] sm:$0xf]
    %v463 = vld [vmem:[%s4 + $0x628] sm:$0xf]
    %v464 = vld [vmem:[%s4 + $0x62c] sm:$0xf]
    %v465 = vld [vmem:[%s4 + $0x630] sm:$0xf]
    %v466 = vld [vmem:[%s4 + $0x634] sm:$0xf]
    %v467 = vld [vmem:[%s4 + $0x638] sm:$0xf]
    %v468 = vld [vmem:[%s4 + $0x63c] sm:$0xf]
    %v469 = vld [vmem:[%s4 + $0x640] sm:$0xf]
    %v470 = vld [vmem:[%s4 + $0x644] sm:$0xf]
    %v471 = vld [vmem:[%s4 + $0x648] sm:$0xf]
    %v472 = vld [vmem:[%s4 + $0x64c] sm:$0xf]
    %v473 = vld [vmem:[%s4 + $0x650] sm:$0xf]
    %v474 = vld [vmem:[%s4 + $0x654] sm:$0xf]
    %v475 = vld [vmem:[%s4 + $0x658] sm:$0xf]
    %v476 = vld [vmem:[%s4 + $0x65c] sm:$0xf]
    %v477 = vld [vmem:[%s4 + $0x660] sm:$0xf]
    %v478 = vld [vmem:[%s4 + $0x664] sm:$0xf]
    %v479 = vld [vmem:[%s4 + $0x668] sm:$0xf]
    %v480 = vld [vmem:[%s4 + $0x66c] sm:$0xf]
    %v481 = vld [vmem:[%s4 + $0x670] sm:$0xf]
    %v482 = vld [vmem:[%s4 + $0x674] sm:$0xf]
    %v483 = vld [vmem:[%s4 + $0x678] sm:$0xf]
    %v484 = vld [vmem:[%s4 + $0x67c] sm:$0xf]
    %v485 = vld [vmem:[%s4 + $0x680] sm:$0xf]
    %v486 = vld [vmem:[%s4 + $0x684] sm:$0xf]
    %v487 = vld [vmem:[%s4 + $0x688] sm:$0xf]
    %v488 = vld [vmem:[%s4 + $0x68c] sm:$0xf]
    %v489 = vld [vmem:[%s4 + $0x690] sm:$0xf]
    %v490 = vld [vmem:[%s4 + $0x694] sm:$0xf]
    %v491 = vld [vmem:[%s4 + $0x698] sm:$0xf]
    %v492 = vld [vmem:[%s4 + $0x69c] sm:$0xf]
    %v493 = vld [vmem:[%s4 + $0x6a0] sm:$0xf]
    %v494 = vld [vmem:[%s4 + $0x6a4] sm:$0xf]
    %v495 = vld [vmem:[%s4 + $0x6a8] sm:$0xf]
    %v496 = vld [vmem:[%s4 + $0x6ac] sm:$0xf]
    %v497 = vld [vmem:[%s4 + $0x6b0] sm:$0xf]
    %v498 = vld [vmem:[%s4 + $0x6b4] sm:$0xf]
    %v499 = vld [vmem:[%s4 + $0x6b8] sm:$0xf]
    %v500 = vld [vmem:[%s4 + $0x6bc] sm:$0xf]
    %v501 = vld [vmem:[%s4 + $0x6c0] sm:$0xf]
    %v502 = vld [vmem:[%s4 + $0x6c4] sm:$0xf]
    %v503 = vld [vmem:[%s4 + $0x6c8] sm:$0xf]
    %v504 = vld [vmem:[%s4 + $0x6cc] sm:$0xf]
    %v505 = vld [vmem:[%s4 + $0x6d0] sm:$0xf]
    %v506 = vld [vmem:[%s4 + $0x6d4] sm:$0xf]
    %v507 = vld [vmem:[%s4 + $0x6d8] sm:$0xf]
    %v508 = vld [vmem:[%s4 + $0x6dc] sm:$0xf]
    %v509 = vld [vmem:[%s4 + $0x6e0] sm:$0xf]
    %v510 = vld [vmem:[%s4 + $0x6e4] sm:$0xf]
    %v511 = vld [vmem:[%s4 + $0x6e8] sm:$0xf]
    %v512 = vld [vmem:[%s4 + $0x6ec] sm:$0xf]
    %v513 = vld [vmem:[%s4 + $0x6f0] sm:$0xf]
    %v514 = vld [vmem:[%s4 + $0x6f4] sm:$0xf]
    %v515 = vld [vmem:[%s4 + $0x6f8] sm:$0xf]
    %v516 = vld [vmem:[%s4 + $0x6fc] sm:$0xf]
    %v517 = vld [vmem:[%s4 + $0x700] sm:$0xf]
    %v518 = vld [vmem:[%s4 + $0x704] sm:$0xf]
    %v519 = vld [vmem:[%s4 + $0x708] sm:$0xf]
    %v520 = vld [vmem:[%s4 + $0x70c] sm:$0xf]
    %v521 = vld [vmem:[%s4 + $0x710] sm:$0xf]
    %v522 = vld [vmem:[%s4 + $0x714] sm:$0xf]
    %v523 = vld [vmem:[%s4 + $0x718] sm:$0xf]
    %v524 = vld [vmem:[%s4 + $0x71c] sm:$0xf]
    %v525 = vld [vmem:[%s4 + $0x720] sm:$0xf]
    %v526 = vld [vmem:[%s4 + $0x724] sm:$0xf]
    %v527 = vld [vmem:[%s4 + $0x728] sm:$0xf]
    %v528 = vld [vmem:[%s4 + $0x72c] sm:$0xf]
    %v529 = vld [vmem:[%s4 + $0x730] sm:$0xf]
    %v530 = vld [vmem:[%s4 + $0x734] sm:$0xf]
    %v531 = vld [vmem:[%s4 + $0x738] sm:$0xf]
    %v532 = vld [vmem:[%s4 + $0x73c] sm:$0xf]
    %v533 = vld [vmem:[%s4 + $0x740] sm:$0xf]
    %v534 = vld [vmem:[%s4 + $0x744] sm:$0xf]
    %v535 = vld [vmem:[%s4 + $0x748] sm:$0xf]
    %v536 = vld [vmem:[%s4 + $0x74c] sm:$0xf]
    %v537 = vld [vmem:[%s4 + $0x750] sm:$0xf]
    %v538 = vld [vmem:[%s4 + $0x754] sm:$0xf]
    %v539 = vld [vmem:[%s4 + $0x758] sm:$0xf]
    %v540 = vld [vmem:[%s4 + $0x75c] sm:$0xf]
    %v541 = vld [vmem:[%s4 + $0x760] sm:$0xf]
    %v542 = vld [vmem:[%s4 + $0x764] sm:$0xf]
    %v543 = vld [vmem:[%s4 + $0x768] sm:$0xf]
    %v544 = vld [vmem:[%s4 + $0x76c] sm:$0xf]
    %v545 = vld [vmem:[%s4 + $0x770] sm:$0xf]
    %v546 = vld [vmem:[%s4 + $0x774] sm:$0xf]
    %v547 = vld [vmem:[%s4 + $0x778] sm:$0xf]
    %v548 = vld [vmem:[%s4 + $0x77c] sm:$0xf]
    %v549 = vld [vmem:[%s4 + $0x780] sm:$0xf]
    %v550 = vld [vmem:[%s4 + $0x784] sm:$0xf]
    %v551 = vld [vmem:[%s4 + $0x788] sm:$0xf]
    %v552 = vld [vmem:[%s4 + $0x78c] sm:$0xf]
    %v553 = vld [vmem:[%s4 + $0x790] sm:$0xf]
    %v554 = vld [vmem:[%s4 + $0x794] sm:$0xf]
    %v555 = vld [vmem:[%s4 + $0x798] sm:$0xf]
    %v556 = vld [vmem:[%s4 + $0x79c] sm:$0xf]
    %v557 = vld [vmem:[%s4 + $0x7a0] sm:$0xf]
    %v558 = vld [vmem:[%s4 + $0x7a4] sm:$0xf]
    %v559 = vld [vmem:[%s4 + $0x7a8] sm:$0xf]
    %v560 = vld [vmem:[%s4 + $0x7ac] sm:$0xf]
    %v561 = vld [vmem:[%s4 + $0x7b0] sm:$0xf]
    %v562 = vld [vmem:[%s4 + $0x7b4] sm:$0xf]
    %v563 = vld [vmem:[%s4 + $0x7b8] sm:$0xf]
    %v564 = vld [vmem:[%s4 + $0x7bc] sm:$0xf]
    %v565 = vld [vmem:[%s4 + $0x7c0] sm:$0xf]
    %v566 = vld [vmem:[%s4 + $0x7c4] sm:$0xf]
    %v567 = vld [vmem:[%s4 + $0x7c8] sm:$0xf]
    %v568 = vld [vmem:[%s4 + $0x7cc] sm:$0xf]
    %v569 = vld [vmem:[%s4 + $0x7d0] sm:$0xf]
    %v570 = vld [vmem:[%s4 + $0x7d4] sm:$0xf]
    %v571 = vld [vmem:[%s4 + $0x7d8] sm:$0xf]
    %v572 = vld [vmem:[%s4 + $0x7dc] sm:$0xf]
    %v573 = vld [vmem:[%s4 + $0x7e0] sm:$0xf]
    %v574 = vld [vmem:[%s4 + $0x7e4] sm:$0xf]
    %v575 = vld [vmem:[%s4 + $0x7e8] sm:$0xf]
    %v576 = vld [vmem:[%s4 + $0x7ec] sm:$0xf]
    %v577 = vld [vmem:[%s4 + $0x7f0] sm:$0xf]
    %v578 = vld [vmem:[%s4 + $0x7f4] sm:$0xf]
    %v579 = vld [vmem:[%s4 + $0x7f8] sm:$0xf]
    %v580 = vld [vmem:[%s4 + $0x7fc] sm:$0xf]
    %v581 = vld [vmem:[%s4 + $0x800] sm:$0xf]
    %v582 = vld [vmem:[%s4 + $0x804] sm:$0xf]
    %v583 = vld [vmem:[%s4 + $0x808] sm:$0xf]
    %v584 = vld [vmem:[%s4 + $0x80c] sm:$0xf]
    %v585 = vld [vmem:[%s4 + $0x810] sm:$0xf]
    %v586 = vld [vmem:[%s4 + $0x814] sm:$0xf]
    %v587 = vld [vmem:[%s4 + $0x818] sm:$0xf]
    %v588 = vld [vmem:[%s4 + $0x81c] sm:$0xf]
    %v589 = vld [vmem:[%s4 + $0x820] sm:$0xf]
    %v590 = vld [vmem:[%s4 + $0x824] sm:$0xf]
    %v591 = vld [vmem:[%s4 + $0x828] sm:$0xf]
    %v592 = vld [vmem:[%s4 + $0x82c] sm:$0xf]
    %v593 = vld [vmem:[%s4 + $0x830] sm:$0xf]
    %v594 = vld [vmem:[%s4 + $0x834] sm:$0xf]
    %v595 = vld [vmem:[%s4 + $0x838] sm:$0xf]
    %v596 = vld [vmem:[%s4 + $0x83c] sm:$0xf]
    %v597 = vld [vmem:[%s4 + $0x840] sm:$0xf]
    %v598 = vld [vmem:[%s4 + $0x844] sm:$0xf]
    %v599 = vld [vmem:[%s4 + $0x848] sm:$0xf]
    %v600 = vld [vmem:[%s4 + $0x84c] sm:$0xf]
    %v601 = vld [vmem:[%s4 + $0x850] sm:$0xf]
    %v602 = vld [vmem:[%s4 + $0x854] sm:$0xf]
    %v603 = vld [vmem:[%s4 + $0x858] sm:$0xf]
    %v604 = vld [vmem:[%s4 + $0x85c] sm:$0xf]
    %v605 = vld [vmem:[%s4 + $0x860] sm:$0xf]
    %v606 = vld [vmem:[%s4 + $0x864] sm:$0xf]
    %v607 = vld [vmem:[%s4 + $0x868] sm:$0xf]
    %v608 = vld [vmem:[%s4 + $0x86c] sm:$0xf]
    %v609 = vld [vmem:[%s4 + $0x870] sm:$0xf]
    %v610 = vld [vmem:[%s4 + $0x874] sm:$0xf]
    %v611 = vld [vmem:[%s4 + $0x878] sm:$0xf]
    %v612 = vld [vmem:[%s4 + $0x87c] sm:$0xf]
    %v613 = vld [vmem:[%s4 + $0x880] sm:$0xf]
    %v614 = vld [vmem:[%s4 + $0x884] sm:$0xf]
    %v615 = vld [vmem:[%s4 + $0x888] sm:$0xf]
    %v616 = vld [vmem:[%s4 + $0x88c] sm:$0xf]
    %v617 = vld [vmem:[%s4 + $0x890] sm:$0xf]
    %v618 = vld [vmem:[%s4 + $0x894] sm:$0xf]
    %v619 = vld [vmem:[%s4 + $0x898] sm:$0xf]
    %v620 = vld [vmem:[%s4 + $0x89c] sm:$0xf]
    %v621 = vld [vmem:[%s4 + $0x8a0] sm:$0xf]
    %v622 = vld [vmem:[%s4 + $0x8a4] sm:$0xf]
    %v623 = vld [vmem:[%s4 + $0x8a8] sm:$0xf]
    %v624 = vld [vmem:[%s4 + $0x8ac] sm:$0xf]
    %v625 = vld [vmem:[%s4 + $0x8b0] sm:$0xf]
    %v626 = vld [vmem:[%s4 + $0x8b4] sm:$0xf]
    %v627 = vld [vmem:[%s4 + $0x8b8] sm:$0xf]
    %v628 = vld [vmem:[%s4 + $0x8bc] sm:$0xf]
    %v629 = vld [vmem:[%s4 + $0x8c0] sm:$0xf]
    %v630 = vld [vmem:[%s4 + $0x8c4] sm:$0xf]
    %v631 = vld [vmem:[%s4 + $0x8c8] sm:$0xf]
    %v632 = vld [vmem:[%s4 + $0x8cc] sm:$0xf]
    %v633 = vld [vmem:[%s4 + $0x8d0] sm:$0xf]
    %v634 = vld [vmem:[%s4 + $0x8d4] sm:$0xf]
    %v635 = vld [vmem:[%s4 + $0x8d8] sm:$0xf]
    %v636 = vld [vmem:[%s4 + $0x8dc] sm:$0xf]
    %v637 = vld [vmem:[%s4 + $0x8e0] sm:$0xf]
    %v638 = vld [vmem:[%s4 + $0x8e4] sm:$0xf]
    %v639 = vld [vmem:[%s4 + $0x8e8] sm:$0xf]
    %v640 = vld [vmem:[%s4 + $0x8ec] sm:$0xf]
    %v641 = vld [vmem:[%s4 + $0x8f0] sm:$0xf]
    %v642 = vld [vmem:[%s4 + $0x8f4] sm:$0xf]
    %v643 = vld [vmem:[%s4 + $0x8f8] sm:$0xf]
    %v644 = vld [vmem:[%s4 + $0x8fc] sm:$0xf]
    %v650 = vcombine.high %v64, %v64
    %v652 = vunpack.c.l.s4 1966171168
    %v653 = vunpack.c.0.s8 %v652
    %v654 = vlaneseq
    %v655 = vshrl.u32 %v654, 7
    %v656 = vsub.s32 %v653, %v655
    %v657 = vrot.slane %v64, %v656
    %v659 = vunpack.c.l.s4 1966171168
    %v660 = vunpack.c.0.s8 %v659
    %v661 = vlaneseq
    %v662 = vshrl.u32 %v661, 7
    %v663 = vsub.s32 %v660, %v662
    %v664 = vrot.slane %v650, %v663
    %v665 = vcombine.high %v657, %v657
    %v666 = vcombine.high %v664, %v664
    %v668 = vunpack.c.l.s4 1966171168
    %v669 = vunpack.c.0.s8 %v668
    %v670 = vlaneseq
    %v671 = vshrl.u32 %v670, 7
    %v672 = vsub.s32 %v669, %v671
    %v673 = vrot.slane %v657, %v672
    %v675 = vunpack.c.l.s4 1966171168
    %v676 = vunpack.c.0.s8 %v675
    %v677 = vlaneseq
    %v678 = vshrl.u32 %v677, 7
    %v679 = vsub.s32 %v676, %v678
    %v680 = vrot.slane %v664, %v679
    %v682 = vunpack.c.l.s4 1966171168
    %v683 = vunpack.c.0.s8 %v682
    %v684 = vlaneseq
    %v685 = vshrl.u32 %v684, 7
    %v686 = vsub.s32 %v683, %v685
    %v687 = vrot.slane %v665, %v686
    %v689 = vunpack.c.l.s4 1966171168
    %v690 = vunpack.c.0.s8 %v689
    %v691 = vlaneseq
    %v692 = vshrl.u32 %v691, 7
    %v693 = vsub.s32 %v690, %v692
    %v694 = vrot.slane %v666, %v693
    %v695 = vcombine.high %v673, %v673
    %v696 = vcombine.high %v680, %v680
    %v697 = vcombine.high %v687, %v687
    %v698 = vcombine.high %v694, %v694
    %v699 = vcombine.high %v65, %v65
    %v701 = vunpack.c.l.s4 1966171168
    %v702 = vunpack.c.0.s8 %v701
    %v703 = vlaneseq
    %v704 = vshrl.u32 %v703, 7
    %v705 = vsub.s32 %v702, %v704
    %v706 = vrot.slane %v65, %v705
    %v708 = vunpack.c.l.s4 1966171168
    %v709 = vunpack.c.0.s8 %v708
    %v710 = vlaneseq
    %v711 = vshrl.u32 %v710, 7
    %v712 = vsub.s32 %v709, %v711
    %v713 = vrot.slane %v699, %v712
    %v714 = vcombine.high %v706, %v706
    %v715 = vcombine.high %v713, %v713
    %v717 = vunpack.c.l.s4 1966171168
    %v718 = vunpack.c.0.s8 %v717
    %v719 = vlaneseq
    %v720 = vshrl.u32 %v719, 7
    %v721 = vsub.s32 %v718, %v720
    %v722 = vrot.slane %v706, %v721
    %v724 = vunpack.c.l.s4 1966171168
    %v725 = vunpack.c.0.s8 %v724
    %v726 = vlaneseq
    %v727 = vshrl.u32 %v726, 7
    %v728 = vsub.s32 %v725, %v727
    %v729 = vrot.slane %v713, %v728
    %v731 = vunpack.c.l.s4 1966171168
    %v732 = vunpack.c.0.s8 %v731
    %v733 = vlaneseq
    %v734 = vshrl.u32 %v733, 7
    %v735 = vsub.s32 %v732, %v734
    %v736 = vrot.slane %v714, %v735
    %v738 = vunpack.c.l.s4 1966171168
    %v739 = vunpack.c.0.s8 %v738
    %v740 = vlaneseq
    %v741 = vshrl.u32 %v740, 7
    %v742 = vsub.s32 %v739, %v741
    %v743 = vrot.slane %v715, %v742
    %v744 = vcombine.high %v722, %v722
    %v745 = vcombine.high %v729, %v729
    %v746 = vcombine.high %v736, %v736
    %v747 = vcombine.high %v743, %v743
    %v748 = vcombine.high %v66, %v66
    %v750 = vunpack.c.l.s4 1966171168
    %v751 = vunpack.c.0.s8 %v750
    %v752 = vlaneseq
    %v753 = vshrl.u32 %v752, 7
    %v754 = vsub.s32 %v751, %v753
    %v755 = vrot.slane %v66, %v754
    %v757 = vunpack.c.l.s4 1966171168
    %v758 = vunpack.c.0.s8 %v757
    %v759 = vlaneseq
    %v760 = vshrl.u32 %v759, 7
    %v761 = vsub.s32 %v758, %v760
    %v762 = vrot.slane %v748, %v761
    %v763 = vcombine.high %v755, %v755
    %v764 = vcombine.high %v762, %v762
    %v766 = vunpack.c.l.s4 1966171168
    %v767 = vunpack.c.0.s8 %v766
    %v768 = vlaneseq
    %v769 = vshrl.u32 %v768, 7
    %v770 = vsub.s32 %v767, %v769
    %v771 = vrot.slane %v755, %v770
    %v773 = vunpack.c.l.s4 1966171168
    %v774 = vunpack.c.0.s8 %v773
    %v775 = vlaneseq
    %v776 = vshrl.u32 %v775, 7
    %v777 = vsub.s32 %v774, %v776
    %v778 = vrot.slane %v762, %v777
    %v780 = vunpack.c.l.s4 1966171168
    %v781 = vunpack.c.0.s8 %v780
    %v782 = vlaneseq
    %v783 = vshrl.u32 %v782, 7
    %v784 = vsub.s32 %v781, %v783
    %v785 = vrot.slane %v763, %v784
    %v787 = vunpack.c.l.s4 1966171168
    %v788 = vunpack.c.0.s8 %v787
    %v789 = vlaneseq
    %v790 = vshrl.u32 %v789, 7
    %v791 = vsub.s32 %v788, %v790
    %v792 = vrot.slane %v764, %v791
    %v793 = vcombine.high %v771, %v771
    %v794 = vcombine.high %v778, %v778
    %v795 = vcombine.high %v785, %v785
    %v796 = vcombine.high %v792, %v792
    %v797 = vcombine.high %v67, %v67
    %v799 = vunpack.c.l.s4 1966171168
    %v800 = vunpack.c.0.s8 %v799
    %v801 = vlaneseq
    %v802 = vshrl.u32 %v801, 7
    %v803 = vsub.s32 %v800, %v802
    %v804 = vrot.slane %v67, %v803
    %v806 = vunpack.c.l.s4 1966171168
    %v807 = vunpack.c.0.s8 %v806
    %v808 = vlaneseq
    %v809 = vshrl.u32 %v808, 7
    %v810 = vsub.s32 %v807, %v809
    %v811 = vrot.slane %v797, %v810
    %v812 = vcombine.high %v804, %v804
    %v813 = vcombine.high %v811, %v811
    %v815 = vunpack.c.l.s4 1966171168
    %v816 = vunpack.c.0.s8 %v815
    %v817 = vlaneseq
    %v818 = vshrl.u32 %v817, 7
    %v819 = vsub.s32 %v816, %v818
    %v820 = vrot.slane %v804, %v819
    %v822 = vunpack.c.l.s4 1966171168
    %v823 = vunpack.c.0.s8 %v822
    %v824 = vlaneseq
    %v825 = vshrl.u32 %v824, 7
    %v826 = vsub.s32 %v823, %v825
    %v827 = vrot.slane %v811, %v826
    %v829 = vunpack.c.l.s4 1966171168
    %v830 = vunpack.c.0.s8 %v829
    %v831 = vlaneseq
    %v832 = vshrl.u32 %v831, 7
    %v833 = vsub.s32 %v830, %v832
    %v834 = vrot.slane %v812, %v833
    %v836 = vunpack.c.l.s4 1966171168
    %v837 = vunpack.c.0.s8 %v836
    %v838 = vlaneseq
    %v839 = vshrl.u32 %v838, 7
    %v840 = vsub.s32 %v837, %v839
    %v841 = vrot.slane %v813, %v840
    %v842 = vcombine.high %v820, %v820
    %v843 = vcombine.high %v827, %v827
    %v844 = vcombine.high %v834, %v834
    %v845 = vcombine.high %v841, %v841
    %v847 = vunpack.c.l.s4 1966171168
    %v848 = vunpack.c.0.s8 %v847
    %v849 = vlaneseq
    %v850 = vshrl.u32 %v849, 7
    %v851 = vsub.s32 %v848, %v850
    %v852 = vrot.slane %v68, %v851
    %v853 = vcombine.high %v852, %v852
    %v855 = vunpack.c.l.s4 1966171168
    %v856 = vunpack.c.0.s8 %v855
    %v857 = vlaneseq
    %v858 = vshrl.u32 %v857, 7
    %v859 = vsub.s32 %v856, %v858
    %v860 = vrot.slane %v852, %v859
    %v862 = vunpack.c.l.s4 1966171168
    %v863 = vunpack.c.0.s8 %v862
    %v864 = vlaneseq
    %v865 = vshrl.u32 %v864, 7
    %v866 = vsub.s32 %v863, %v865
    %v867 = vrot.slane %v853, %v866
    %v868 = vcombine.high %v860, %v860
    %v869 = vcombine.high %v867, %v867
    %v1482 = vunpack.c.l.b16 %v69
    %v1483 = vunpack.c.l.b16 %v70
    %v1484 = vunpack.c.l.b16 %v71
    %v1485 = vunpack.c.l.b16 %v72
    %v1486 = vunpack.c.l.b16 %v73
    %v1487 = vunpack.c.l.b16 %v74
    %v1488 = vunpack.c.l.b16 %v75
    %v1489 = vunpack.c.l.b16 %v76
    %v1490 = vunpack.c.l.b16 %v77
    %v1491 = vunpack.c.l.b16 %v78
    %v1492 = vunpack.c.l.b16 %v79
    %v1493 = vunpack.c.l.b16 %v80
    %v1494 = vunpack.c.l.b16 %v81
    %v1495 = vunpack.c.l.b16 %v82
    %v1496 = vunpack.c.l.b16 %v83
    %v1497 = vunpack.c.l.b16 %v84
    %v1498 = vunpack.c.l.b16 %v85
    %v1499 = vunpack.c.l.b16 %v86
    %v1500 = vunpack.c.l.b16 %v87
    %v1501 = vunpack.c.l.b16 %v88
    %v1502 = vunpack.c.l.b16 %v89
    %v1503 = vunpack.c.l.b16 %v90
    %v1504 = vunpack.c.l.b16 %v91
    %v1505 = vunpack.c.l.b16 %v92
    %v1506 = vunpack.c.l.b16 %v93
    %v1507 = vunpack.c.l.b16 %v94
    %v1508 = vunpack.c.l.b16 %v95
    %v1509 = vunpack.c.l.b16 %v96
    %v1510 = vunpack.c.l.b16 %v97
    %v1511 = vunpack.c.l.b16 %v98
    %v1512 = vunpack.c.l.b16 %v99
    %v1513 = vunpack.c.l.b16 %v100
    %v1514 = vunpack.c.l.b16 %v101
    %v1515 = vunpack.c.l.b16 %v102
    %v1516 = vunpack.c.l.b16 %v103
    %v1517 = vunpack.c.l.b16 %v104
    %v1518 = vunpack.c.l.b16 %v105
    %v1519 = vunpack.c.l.b16 %v106
    %v1520 = vunpack.c.l.b16 %v107
    %v1521 = vunpack.c.l.b16 %v108
    %v1522 = vunpack.c.l.b16 %v109
    %v1523 = vunpack.c.l.b16 %v110
    %v1524 = vunpack.c.l.b16 %v111
    %v1525 = vunpack.c.l.b16 %v112
    %v1526 = vunpack.c.l.b16 %v113
    %v1527 = vunpack.c.l.b16 %v114
    %v1528 = vunpack.c.l.b16 %v115
    %v1529 = vunpack.c.l.b16 %v116
    %v1530 = vunpack.c.l.b16 %v117
    %v1531 = vunpack.c.l.b16 %v118
    %v1532 = vunpack.c.l.b16 %v119
    %v1533 = vunpack.c.l.b16 %v120
    %v1534 = vunpack.c.l.b16 %v121
    %v1535 = vunpack.c.l.b16 %v122
    %v1536 = vunpack.c.l.b16 %v123
    %v1537 = vunpack.c.l.b16 %v124
    %v1538 = vunpack.c.l.b16 %v125
    %v1539 = vunpack.c.l.b16 %v126
    %v1540 = vunpack.c.l.b16 %v127
    %v1541 = vunpack.c.l.b16 %v128
    %v1542 = vunpack.c.l.b16 %v129
    %v1543 = vunpack.c.l.b16 %v130
    %v1544 = vunpack.c.l.b16 %v131
    %v1545 = vunpack.c.l.b16 %v132
    %v1546 = vunpack.c.l.b16 %v133
    %v1547 = vunpack.c.l.b16 %v134
    %v1548 = vunpack.c.l.b16 %v135
    %v1549 = vunpack.c.l.b16 %v136
    %v1550 = vunpack.c.l.b16 %v137
    %v1551 = vunpack.c.l.b16 %v138
    %v1552 = vunpack.c.l.b16 %v139
    %v1553 = vunpack.c.l.b16 %v140
    %v1554 = vunpack.c.l.b16 %v141
    %v1555 = vunpack.c.l.b16 %v142
    %v1556 = vunpack.c.l.b16 %v143
    %v1557 = vunpack.c.l.b16 %v144
    %v1558 = vunpack.c.l.b16 %v145
    %v1559 = vunpack.c.l.b16 %v146
    %v1560 = vunpack.c.l.b16 %v147
    %v1561 = vunpack.c.l.b16 %v148
    %v1562 = vunpack.c.l.b16 %v149
    %v1563 = vunpack.c.l.b16 %v150
    %v1564 = vunpack.c.l.b16 %v151
    %v1565 = vunpack.c.l.b16 %v152
    %v1566 = vunpack.c.l.b16 %v153
    %v1567 = vunpack.c.l.b16 %v154
    %v1568 = vunpack.c.l.b16 %v155
    %v1569 = vunpack.c.l.b16 %v156
    %v1570 = vunpack.c.l.b16 %v157
    %v1571 = vunpack.c.l.b16 %v158
    %v1572 = vunpack.c.l.b16 %v159
    %v1573 = vunpack.c.l.b16 %v160
    %v1574 = vunpack.c.l.b16 %v161
    %v1575 = vunpack.c.l.b16 %v162
    %v1576 = vunpack.c.l.b16 %v163
    %v1577 = vunpack.c.l.b16 %v164
    %v1578 = vunpack.c.l.b16 %v165
    %v1579 = vunpack.c.l.b16 %v166
    %v1580 = vunpack.c.l.b16 %v167
    %v1581 = vunpack.c.l.b16 %v168
    %v1582 = vunpack.c.l.b16 %v169
    %v1583 = vunpack.c.l.b16 %v170
    %v1584 = vunpack.c.l.b16 %v171
    %v1585 = vunpack.c.l.b16 %v172
    %v1586 = vunpack.c.l.b16 %v173
    %v1587 = vunpack.c.l.b16 %v174
    %v1588 = vunpack.c.l.b16 %v175
    %v1589 = vunpack.c.l.b16 %v176
    %v1590 = vunpack.c.l.b16 %v177
    %v1591 = vunpack.c.l.b16 %v178
    %v1592 = vunpack.c.l.b16 %v179
    %v1593 = vunpack.c.l.b16 %v180
    %v1594 = vunpack.c.l.b16 %v181
    %v1595 = vunpack.c.l.b16 %v182
    %v1596 = vunpack.c.l.b16 %v183
    %v1597 = vunpack.c.l.b16 %v184
    %v1598 = vunpack.c.l.b16 %v185
    %v1599 = vunpack.c.l.b16 %v186
    %v1600 = vunpack.c.l.b16 %v187
    %v1601 = vunpack.c.l.b16 %v188
    %v1602 = vunpack.c.l.b16 %v189
    %v1603 = vunpack.c.l.b16 %v190
    %v1604 = vunpack.c.l.b16 %v191
    %v1605 = vunpack.c.l.b16 %v192
    %v1606 = vunpack.c.l.b16 %v193
    %v1607 = vunpack.c.l.b16 %v194
    %v1608 = vunpack.c.l.b16 %v195
    %v1609 = vunpack.c.l.b16 %v196
    %v1610 = vunpack.c.l.b16 %v197
    %v1611 = vunpack.c.l.b16 %v198
    %v1612 = vunpack.c.l.b16 %v199
    %v1613 = vunpack.c.l.b16 %v200
    %v1614 = vunpack.c.l.b16 %v201
    %v1615 = vunpack.c.l.b16 %v202
    %v1616 = vunpack.c.l.b16 %v203
    %v1617 = vunpack.c.l.b16 %v204
    %v1618 = vunpack.c.l.b16 %v205
    %v1619 = vunpack.c.l.b16 %v206
    %v1620 = vunpack.c.l.b16 %v207
    %v1621 = vunpack.c.l.b16 %v208
    %v1622 = vunpack.c.l.b16 %v209
    %v1623 = vunpack.c.l.b16 %v210
    %v1624 = vunpack.c.l.b16 %v211
    %v1625 = vunpack.c.l.b16 %v212
    %v1626 = vunpack.c.l.b16 %v213
    %v1627 = vunpack.c.l.b16 %v214
    %v1628 = vunpack.c.l.b16 %v215
    %v1629 = vunpack.c.l.b16 %v216
    %v1630 = vunpack.c.l.b16 %v217
    %v1631 = vunpack.c.l.b16 %v218
    %v1632 = vunpack.c.l.b16 %v219
    %v1633 = vunpack.c.l.b16 %v220
    %v1634 = vunpack.c.l.b16 %v221
    %v1635 = vunpack.c.l.b16 %v222
    %v1636 = vunpack.c.l.b16 %v223
    %v1637 = vunpack.c.l.b16 %v224
    %v1638 = vunpack.c.l.b16 %v225
    %v1639 = vunpack.c.l.b16 %v226
    %v1640 = vunpack.c.l.b16 %v227
    %v1641 = vunpack.c.l.b16 %v228
    %v1642 = vunpack.c.l.b16 %v229
    %v1643 = vunpack.c.l.b16 %v230
    %v1644 = vunpack.c.l.b16 %v231
    %v1645 = vunpack.c.l.b16 %v232
    %v1646 = vunpack.c.l.b16 %v233
    %v1647 = vunpack.c.l.b16 %v234
    %v1648 = vunpack.c.l.b16 %v235
    %v1649 = vunpack.c.l.b16 %v236
    %v1650 = vunpack.c.l.b16 %v237
    %v1651 = vunpack.c.l.b16 %v238
    %v1652 = vunpack.c.l.b16 %v239
    %v1653 = vunpack.c.l.b16 %v240
    %v1654 = vunpack.c.l.b16 %v241
    %v1655 = vunpack.c.l.b16 %v242
    %v1656 = vunpack.c.l.b16 %v243
    %v1657 = vunpack.c.l.b16 %v244
    %v1658 = vunpack.c.l.b16 %v245
    %v1659 = vunpack.c.l.b16 %v246
    %v1660 = vunpack.c.l.b16 %v247
    %v1661 = vunpack.c.l.b16 %v248
    %v1662 = vunpack.c.l.b16 %v249
    %v1663 = vunpack.c.l.b16 %v250
    %v1664 = vunpack.c.l.b16 %v251
    %v1665 = vunpack.c.l.b16 %v252
    %v1666 = vunpack.c.l.b16 %v253
    %v1667 = vunpack.c.l.b16 %v254
    %v1668 = vunpack.c.l.b16 %v255
    %v1669 = vunpack.c.l.b16 %v256
    %v1670 = vunpack.c.l.b16 %v257
    %v1671 = vunpack.c.l.b16 %v258
    %v1672 = vunpack.c.l.b16 %v259
    %v1673 = vunpack.c.l.b16 %v260
    %v1674 = vunpack.c.l.b16 %v261
    %v1675 = vunpack.c.l.b16 %v262
    %v1676 = vunpack.c.l.b16 %v263
    %v1677 = vunpack.c.l.b16 %v264
    %v1678 = vunpack.c.l.b16 %v265
    %v1679 = vunpack.c.l.b16 %v266
    %v1680 = vunpack.c.l.b16 %v267
    %v1681 = vunpack.c.l.b16 %v268
    %v1682 = vunpack.c.l.b16 %v269
    %v1683 = vunpack.c.l.b16 %v270
    %v1684 = vunpack.c.l.b16 %v271
    %v1685 = vunpack.c.l.b16 %v272
    %v1686 = vunpack.c.l.b16 %v273
    %v1687 = vunpack.c.l.b16 %v274
    %v1688 = vunpack.c.l.b16 %v275
    %v1689 = vunpack.c.l.b16 %v276
    %v1690 = vunpack.c.l.b16 %v277
    %v1691 = vunpack.c.l.b16 %v278
    %v1692 = vunpack.c.l.b16 %v279
    %v1693 = vunpack.c.l.b16 %v280
    %v1694 = vunpack.c.l.b16 %v281
    %v1695 = vunpack.c.l.b16 %v282
    %v1696 = vunpack.c.l.b16 %v283
    %v1697 = vunpack.c.l.b16 %v284
    %v1698 = vunpack.c.l.b16 %v285
    %v1699 = vunpack.c.l.b16 %v286
    %v1700 = vunpack.c.l.b16 %v287
    %v1701 = vunpack.c.l.b16 %v288
    %v1702 = vunpack.c.l.b16 %v289
    %v1703 = vunpack.c.l.b16 %v290
    %v1704 = vunpack.c.l.b16 %v291
    %v1705 = vunpack.c.l.b16 %v292
    %v1706 = vunpack.c.l.b16 %v293
    %v1707 = vunpack.c.l.b16 %v294
    %v1708 = vunpack.c.l.b16 %v295
    %v1709 = vunpack.c.l.b16 %v296
    %v1710 = vunpack.c.l.b16 %v297
    %v1711 = vunpack.c.l.b16 %v298
    %v1712 = vunpack.c.l.b16 %v299
    %v1713 = vunpack.c.l.b16 %v300
    %v1714 = vunpack.c.l.b16 %v301
    %v1715 = vunpack.c.l.b16 %v302
    %v1716 = vunpack.c.l.b16 %v303
    %v1717 = vunpack.c.l.b16 %v304
    %v1718 = vunpack.c.l.b16 %v305
    %v1719 = vunpack.c.l.b16 %v306
    %v1720 = vunpack.c.l.b16 %v307
    %v1721 = vunpack.c.l.b16 %v308
    %v1722 = vunpack.c.l.b16 %v309
    %v1723 = vunpack.c.l.b16 %v310
    %v1724 = vunpack.c.l.b16 %v311
    %v1725 = vunpack.c.l.b16 %v312
    %v1726 = vunpack.c.l.b16 %v313
    %v1727 = vunpack.c.l.b16 %v314
    %v1728 = vunpack.c.l.b16 %v315
    %v1729 = vunpack.c.l.b16 %v316
    %v1730 = vunpack.c.l.b16 %v317
    %v1731 = vunpack.c.l.b16 %v318
    %v1732 = vunpack.c.l.b16 %v319
    %v1733 = vunpack.c.l.b16 %v320
    %v1734 = vunpack.c.l.b16 %v321
    %v1735 = vunpack.c.l.b16 %v322
    %v1736 = vunpack.c.l.b16 %v323
    %v1737 = vunpack.c.l.b16 %v324
    %v1738 = vunpack.c.l.b16 %v325
    %v1739 = vunpack.c.l.b16 %v326
    %v1740 = vunpack.c.l.b16 %v327
    %v1741 = vunpack.c.l.b16 %v328
    %v1742 = vunpack.c.l.b16 %v329
    %v1743 = vunpack.c.l.b16 %v330
    %v1744 = vunpack.c.l.b16 %v331
    %v1745 = vunpack.c.l.b16 %v332
    %v1746 = vunpack.c.l.b16 %v333
    %v1747 = vunpack.c.l.b16 %v334
    %v1748 = vunpack.c.l.b16 %v335
    %v1749 = vunpack.c.l.b16 %v336
    %v1750 = vunpack.c.l.b16 %v337
    %v1751 = vunpack.c.l.b16 %v338
    %v1752 = vunpack.c.l.b16 %v339
    %v1753 = vunpack.c.l.b16 %v340
    %v1754 = vunpack.c.l.b16 %v341
    %v1755 = vunpack.c.l.b16 %v342
    %v1756 = vunpack.c.l.b16 %v343
    %v1757 = vunpack.c.l.b16 %v344
    %v1758 = vunpack.c.l.b16 %v345
    %v1759 = vunpack.c.l.b16 %v346
    %v1760 = vunpack.c.l.b16 %v347
    %v1761 = vunpack.c.l.b16 %v348
    %v1762 = vunpack.c.l.b16 %v349
    %v1763 = vunpack.c.l.b16 %v350
    %v1764 = vunpack.c.l.b16 %v351
    %v1765 = vunpack.c.l.b16 %v352
    %v1766 = vunpack.c.l.b16 %v353
    %v1767 = vunpack.c.l.b16 %v354
    %v1768 = vunpack.c.l.b16 %v355
    %v1769 = vunpack.c.l.b16 %v356
    %v1770 = vunpack.c.l.b16 %v357
    %v1771 = vunpack.c.l.b16 %v358
    %v1772 = vunpack.c.l.b16 %v359
    %v1773 = vunpack.c.l.b16 %v360
    %v1774 = vunpack.c.l.b16 %v361
    %v1775 = vunpack.c.l.b16 %v362
    %v1776 = vunpack.c.l.b16 %v363
    %v1777 = vunpack.c.l.b16 %v364
    %v1778 = vunpack.c.l.b16 %v365
    %v1779 = vunpack.c.l.b16 %v366
    %v1780 = vunpack.c.l.b16 %v367
    %v1781 = vunpack.c.l.b16 %v368
    %v1782 = vunpack.c.l.b16 %v369
    %v1783 = vunpack.c.l.b16 %v370
    %v1784 = vunpack.c.l.b16 %v371
    %v1785 = vunpack.c.l.b16 %v372
    %v1786 = vunpack.c.l.b16 %v373
    %v1787 = vunpack.c.l.b16 %v374
    %v1788 = vunpack.c.l.b16 %v375
    %v1789 = vunpack.c.l.b16 %v376
    %v1790 = vunpack.c.l.b16 %v377
    %v1791 = vunpack.c.l.b16 %v378
    %v1792 = vunpack.c.l.b16 %v379
    %v1793 = vunpack.c.l.b16 %v380
    %v1794 = vunpack.c.l.b16 %v381
    %v1795 = vunpack.c.l.b16 %v382
    %v1796 = vunpack.c.l.b16 %v383
    %v1797 = vunpack.c.l.b16 %v384
    %v1798 = vunpack.c.l.b16 %v385
    %v1799 = vunpack.c.l.b16 %v386
    %v1800 = vunpack.c.l.b16 %v387
    %v1801 = vunpack.c.l.b16 %v388
    %v1802 = vunpack.c.l.b16 %v389
    %v1803 = vunpack.c.l.b16 %v390
    %v1804 = vunpack.c.l.b16 %v391
    %v1805 = vunpack.c.l.b16 %v392
    %v1806 = vunpack.c.l.b16 %v393
    %v1807 = vunpack.c.l.b16 %v394
    %v1808 = vunpack.c.l.b16 %v395
    %v1809 = vunpack.c.l.b16 %v396
    %v1810 = vunpack.c.l.b16 %v397
    %v1811 = vunpack.c.l.b16 %v398
    %v1812 = vunpack.c.l.b16 %v399
    %v1813 = vunpack.c.l.b16 %v400
    %v1814 = vunpack.c.l.b16 %v401
    %v1815 = vunpack.c.l.b16 %v402
    %v1816 = vunpack.c.l.b16 %v403
    %v1817 = vunpack.c.l.b16 %v404
    %v1818 = vunpack.c.l.b16 %v405
    %v1819 = vunpack.c.l.b16 %v406
    %v1820 = vunpack.c.l.b16 %v407
    %v1821 = vunpack.c.l.b16 %v408
    %v1822 = vunpack.c.l.b16 %v409
    %v1823 = vunpack.c.l.b16 %v410
    %v1824 = vunpack.c.l.b16 %v411
    %v1825 = vunpack.c.l.b16 %v412
    %v1826 = vunpack.c.l.b16 %v413
    %v1827 = vunpack.c.l.b16 %v414
    %v1828 = vunpack.c.l.b16 %v415
    %v1829 = vunpack.c.l.b16 %v416
    %v1830 = vunpack.c.l.b16 %v417
    %v1831 = vunpack.c.l.b16 %v418
    %v1832 = vunpack.c.l.b16 %v419
    %v1833 = vunpack.c.l.b16 %v420
    %v1834 = vunpack.c.l.b16 %v421
    %v1835 = vunpack.c.l.b16 %v422
    %v1836 = vunpack.c.l.b16 %v423
    %v1837 = vunpack.c.l.b16 %v424
    %v1838 = vunpack.c.l.b16 %v425
    %v1839 = vunpack.c.l.b16 %v426
    %v1840 = vunpack.c.l.b16 %v427
    %v1841 = vunpack.c.l.b16 %v428
    %v1842 = vunpack.c.l.b16 %v429
    %v1843 = vunpack.c.l.b16 %v430
    %v1844 = vunpack.c.l.b16 %v431
    %v1845 = vunpack.c.l.b16 %v432
    %v1846 = vunpack.c.l.b16 %v433
    %v1847 = vunpack.c.l.b16 %v434
    %v1848 = vunpack.c.l.b16 %v435
    %v1849 = vunpack.c.l.b16 %v436
    %v1850 = vunpack.c.l.b16 %v437
    %v1851 = vunpack.c.l.b16 %v438
    %v1852 = vunpack.c.l.b16 %v439
    %v1853 = vunpack.c.l.b16 %v440
    %v1854 = vunpack.c.l.b16 %v441
    %v1855 = vunpack.c.l.b16 %v442
    %v1856 = vunpack.c.l.b16 %v443
    %v1857 = vunpack.c.l.b16 %v444
    %v1858 = vunpack.c.l.b16 %v445
    %v1859 = vunpack.c.l.b16 %v446
    %v1860 = vunpack.c.l.b16 %v447
    %v1861 = vunpack.c.l.b16 %v448
    %v1862 = vunpack.c.l.b16 %v449
    %v1863 = vunpack.c.l.b16 %v450
    %v1864 = vunpack.c.l.b16 %v451
    %v1865 = vunpack.c.l.b16 %v452
    %v1866 = vunpack.c.l.b16 %v453
    %v1867 = vunpack.c.l.b16 %v454
    %v1868 = vunpack.c.l.b16 %v455
    %v1869 = vunpack.c.l.b16 %v456
    %v1870 = vunpack.c.l.b16 %v457
    %v1871 = vunpack.c.l.b16 %v458
    %v1872 = vunpack.c.l.b16 %v459
    %v1873 = vunpack.c.l.b16 %v460
    %v1874 = vunpack.c.l.b16 %v461
    %v1875 = vunpack.c.l.b16 %v462
    %v1876 = vunpack.c.l.b16 %v463
    %v1877 = vunpack.c.l.b16 %v464
    %v1878 = vunpack.c.l.b16 %v465
    %v1879 = vunpack.c.l.b16 %v466
    %v1880 = vunpack.c.l.b16 %v467
    %v1881 = vunpack.c.l.b16 %v468
    %v1882 = vunpack.c.l.b16 %v469
    %v1883 = vunpack.c.l.b16 %v470
    %v1884 = vunpack.c.l.b16 %v471
    %v1885 = vunpack.c.l.b16 %v472
    %v1886 = vunpack.c.l.b16 %v473
    %v1887 = vunpack.c.l.b16 %v474
    %v1888 = vunpack.c.l.b16 %v475
    %v1889 = vunpack.c.l.b16 %v476
    %v1890 = vunpack.c.l.b16 %v477
    %v1891 = vunpack.c.l.b16 %v478
    %v1892 = vunpack.c.l.b16 %v479
    %v1893 = vunpack.c.l.b16 %v480
    %v1894 = vunpack.c.l.b16 %v481
    %v1895 = vunpack.c.l.b16 %v482
    %v1896 = vunpack.c.l.b16 %v483
    %v1897 = vunpack.c.l.b16 %v484
    %v1898 = vunpack.c.l.b16 %v485
    %v1899 = vunpack.c.l.b16 %v486
    %v1900 = vunpack.c.l.b16 %v487
    %v1901 = vunpack.c.l.b16 %v488
    %v1902 = vunpack.c.l.b16 %v489
    %v1903 = vunpack.c.l.b16 %v490
    %v1904 = vunpack.c.l.b16 %v491
    %v1905 = vunpack.c.l.b16 %v492
    %v1906 = vunpack.c.l.b16 %v493
    %v1907 = vunpack.c.l.b16 %v494
    %v1908 = vunpack.c.l.b16 %v495
    %v1909 = vunpack.c.l.b16 %v496
    %v1910 = vunpack.c.l.b16 %v497
    %v1911 = vunpack.c.l.b16 %v498
    %v1912 = vunpack.c.l.b16 %v499
    %v1913 = vunpack.c.l.b16 %v500
    %v1914 = vunpack.c.l.b16 %v501
    %v1915 = vunpack.c.l.b16 %v502
    %v1916 = vunpack.c.l.b16 %v503
    %v1917 = vunpack.c.l.b16 %v504
    %v1918 = vunpack.c.l.b16 %v505
    %v1919 = vunpack.c.l.b16 %v506
    %v1920 = vunpack.c.l.b16 %v507
    %v1921 = vunpack.c.l.b16 %v508
    %v1922 = vunpack.c.l.b16 %v509
    %v1923 = vunpack.c.l.b16 %v510
    %v1924 = vunpack.c.l.b16 %v511
    %v1925 = vunpack.c.l.b16 %v512
    %v1926 = vunpack.c.l.b16 %v513
    %v1927 = vunpack.c.l.b16 %v514
    %v1928 = vunpack.c.l.b16 %v515
    %v1929 = vunpack.c.l.b16 %v516
    %v1930 = vunpack.c.l.b16 %v517
    %v1931 = vunpack.c.l.b16 %v518
    %v1932 = vunpack.c.l.b16 %v519
    %v1933 = vunpack.c.l.b16 %v520
    %v1934 = vunpack.c.l.b16 %v521
    %v1935 = vunpack.c.l.b16 %v522
    %v1936 = vunpack.c.l.b16 %v523
    %v1937 = vunpack.c.l.b16 %v524
    %v1938 = vunpack.c.l.b16 %v525
    %v1939 = vunpack.c.l.b16 %v526
    %v1940 = vunpack.c.l.b16 %v527
    %v1941 = vunpack.c.l.b16 %v528
    %v1942 = vunpack.c.l.b16 %v529
    %v1943 = vunpack.c.l.b16 %v530
    %v1944 = vunpack.c.l.b16 %v531
    %v1945 = vunpack.c.l.b16 %v532
    %v1946 = vunpack.c.l.b16 %v533
    %v1947 = vunpack.c.l.b16 %v534
    %v1948 = vunpack.c.l.b16 %v535
    %v1949 = vunpack.c.l.b16 %v536
    %v1950 = vunpack.c.l.b16 %v537
    %v1951 = vunpack.c.l.b16 %v538
    %v1952 = vunpack.c.l.b16 %v539
    %v1953 = vunpack.c.l.b16 %v540
    %v1954 = vunpack.c.l.b16 %v541
    %v1955 = vunpack.c.l.b16 %v542
    %v1956 = vunpack.c.l.b16 %v543
    %v1957 = vunpack.c.l.b16 %v544
    %v1958 = vunpack.c.l.b16 %v545
    %v1959 = vunpack.c.l.b16 %v546
    %v1960 = vunpack.c.l.b16 %v547
    %v1961 = vunpack.c.l.b16 %v548
    %v1962 = vunpack.c.l.b16 %v549
    %v1963 = vunpack.c.l.b16 %v550
    %v1964 = vunpack.c.l.b16 %v551
    %v1965 = vunpack.c.l.b16 %v552
    %v1966 = vunpack.c.l.b16 %v553
    %v1967 = vunpack.c.l.b16 %v554
    %v1968 = vunpack.c.l.b16 %v555
    %v1969 = vunpack.c.l.b16 %v556
    %v1970 = vunpack.c.l.b16 %v557
    %v1971 = vunpack.c.l.b16 %v558
    %v1972 = vunpack.c.l.b16 %v559
    %v1973 = vunpack.c.l.b16 %v560
    %v1974 = vunpack.c.l.b16 %v561
    %v1975 = vunpack.c.l.b16 %v562
    %v1976 = vunpack.c.l.b16 %v563
    %v1977 = vunpack.c.l.b16 %v564
    %v1978 = vunpack.c.l.b16 %v565
    %v1979 = vunpack.c.l.b16 %v566
    %v1980 = vunpack.c.l.b16 %v567
    %v1981 = vunpack.c.l.b16 %v568
    %v1982 = vunpack.c.l.b16 %v569
    %v1983 = vunpack.c.l.b16 %v570
    %v1984 = vunpack.c.l.b16 %v571
    %v1985 = vunpack.c.l.b16 %v572
    %v1986 = vunpack.c.l.b16 %v573
    %v1987 = vunpack.c.l.b16 %v574
    %v1988 = vunpack.c.l.b16 %v575
    %v1989 = vunpack.c.l.b16 %v576
    %v1990 = vunpack.c.l.b16 %v577
    %v1991 = vunpack.c.l.b16 %v578
    %v1992 = vunpack.c.l.b16 %v579
    %v1993 = vunpack.c.l.b16 %v580
    %v1994 = vunpack.c.l.b16 %v581
    %v1995 = vunpack.c.l.b16 %v582
    %v1996 = vunpack.c.l.b16 %v583
    %v1997 = vunpack.c.l.b16 %v584
    %v1998 = vunpack.c.l.b16 %v585
    %v1999 = vunpack.c.l.b16 %v586
    %v2000 = vunpack.c.l.b16 %v587
    %v2001 = vunpack.c.l.b16 %v588
    %v2002 = vunpack.c.l.b16 %v589
    %v2003 = vunpack.c.l.b16 %v590
    %v2004 = vunpack.c.l.b16 %v591
    %v2005 = vunpack.c.l.b16 %v592
    %v2006 = vunpack.c.l.b16 %v593
    %v2007 = vunpack.c.l.b16 %v594
    %v2008 = vunpack.c.l.b16 %v595
    %v2009 = vunpack.c.l.b16 %v596
    %v2010 = vunpack.c.l.b16 %v597
    %v2011 = vunpack.c.l.b16 %v598
    %v2012 = vunpack.c.l.b16 %v599
    %v2013 = vunpack.c.l.b16 %v600
    %v2014 = vunpack.c.l.b16 %v601
    %v2015 = vunpack.c.l.b16 %v602
    %v2016 = vunpack.c.l.b16 %v603
    %v2017 = vunpack.c.l.b16 %v604
    %v2018 = vunpack.c.l.b16 %v605
    %v2019 = vunpack.c.l.b16 %v606
    %v2020 = vunpack.c.l.b16 %v607
    %v2021 = vunpack.c.l.b16 %v608
    %v2022 = vunpack.c.l.b16 %v609
    %v2023 = vunpack.c.l.b16 %v610
    %v2024 = vunpack.c.l.b16 %v611
    %v2025 = vunpack.c.l.b16 %v612
    %v2026 = vunpack.c.l.b16 %v613
    %v2027 = vunpack.c.l.b16 %v614
    %v2028 = vunpack.c.l.b16 %v615
    %v2029 = vunpack.c.l.b16 %v616
    %v2030 = vunpack.c.l.b16 %v617
    %v2031 = vunpack.c.l.b16 %v618
    %v2032 = vunpack.c.l.b16 %v619
    %v2033 = vunpack.c.l.b16 %v620
    %v2034 = vunpack.c.l.b16 %v621
    %v2035 = vunpack.c.l.b16 %v622
    %v2036 = vunpack.c.l.b16 %v623
    %v2037 = vunpack.c.l.b16 %v624
    %v2038 = vunpack.c.l.b16 %v625
    %v2039 = vunpack.c.l.b16 %v626
    %v2040 = vunpack.c.l.b16 %v627
    %v2041 = vunpack.c.l.b16 %v628
    %v2042 = vunpack.c.l.b16 %v629
    %v2043 = vunpack.c.l.b16 %v630
    %v2044 = vunpack.c.l.b16 %v631
    %v2045 = vunpack.c.l.b16 %v632
    %v2046 = vunpack.c.l.b16 %v633
    %v2047 = vunpack.c.l.b16 %v634
    %v2048 = vunpack.c.l.b16 %v635
    %v2049 = vunpack.c.l.b16 %v636
    %v2050 = vunpack.c.l.b16 %v637
    %v2051 = vunpack.c.l.b16 %v638
    %v2052 = vunpack.c.l.b16 %v639
    %v2053 = vunpack.c.l.b16 %v640
    %v2054 = vunpack.c.l.b16 %v641
    %v2055 = vunpack.c.l.b16 %v642
    %v2056 = vunpack.c.l.b16 %v643
    %v2057 = vunpack.c.l.b16 %v644
    %v2058 = vpack.c.b16 %v1483, %v1482
    %v2059 = vpack.c.b16 %v1485, %v1484
    %v2060 = vpack.c.b16 %v1487, %v1486
    %v2061 = vpack.c.b16 %v1489, %v1488
    %v2062 = vpack.c.b16 %v1491, %v1490
    %v2063 = vpack.c.b16 %v1493, %v1492
    %v2064 = vpack.c.b16 %v1495, %v1494
    %v2065 = vpack.c.b16 %v1497, %v1496
    %v2066 = vpack.c.b16 %v1499, %v1498
    %v2067 = vpack.c.b16 %v1501, %v1500
    %v2068 = vpack.c.b16 %v1503, %v1502
    %v2069 = vpack.c.b16 %v1505, %v1504
    %v2070 = vpack.c.b16 %v1507, %v1506
    %v2071 = vpack.c.b16 %v1509, %v1508
    %v2072 = vpack.c.b16 %v1511, %v1510
    %v2073 = vpack.c.b16 %v1513, %v1512
    %v2074 = vpack.c.b16 %v1515, %v1514
    %v2075 = vpack.c.b16 %v1517, %v1516
    %v2076 = vpack.c.b16 %v1519, %v1518
    %v2077 = vpack.c.b16 %v1521, %v1520
    %v2078 = vpack.c.b16 %v1523, %v1522
    %v2079 = vpack.c.b16 %v1525, %v1524
    %v2080 = vpack.c.b16 %v1527, %v1526
    %v2081 = vpack.c.b16 %v1529, %v1528
    %v2082 = vpack.c.b16 %v1531, %v1530
    %v2083 = vpack.c.b16 %v1533, %v1532
    %v2084 = vpack.c.b16 %v1535, %v1534
    %v2085 = vpack.c.b16 %v1537, %v1536
    %v2086 = vpack.c.b16 %v1539, %v1538
    %v2087 = vpack.c.b16 %v1541, %v1540
    %v2088 = vpack.c.b16 %v1543, %v1542
    %v2089 = vpack.c.b16 %v1545, %v1544
    %v2090 = vpack.c.b16 %v1547, %v1546
    %v2091 = vpack.c.b16 %v1549, %v1548
    %v2092 = vpack.c.b16 %v1551, %v1550
    %v2093 = vpack.c.b16 %v1553, %v1552
    %v2094 = vpack.c.b16 %v1555, %v1554
    %v2095 = vpack.c.b16 %v1557, %v1556
    %v2096 = vpack.c.b16 %v1559, %v1558
    %v2097 = vpack.c.b16 %v1561, %v1560
    %v2098 = vpack.c.b16 %v1563, %v1562
    %v2099 = vpack.c.b16 %v1565, %v1564
    %v2100 = vpack.c.b16 %v1567, %v1566
    %v2101 = vpack.c.b16 %v1569, %v1568
    %v2102 = vpack.c.b16 %v1571, %v1570
    %v2103 = vpack.c.b16 %v1573, %v1572
    %v2104 = vpack.c.b16 %v1575, %v1574
    %v2105 = vpack.c.b16 %v1577, %v1576
    %v2106 = vpack.c.b16 %v1579, %v1578
    %v2107 = vpack.c.b16 %v1581, %v1580
    %v2108 = vpack.c.b16 %v1583, %v1582
    %v2109 = vpack.c.b16 %v1585, %v1584
    %v2110 = vpack.c.b16 %v1587, %v1586
    %v2111 = vpack.c.b16 %v1589, %v1588
    %v2112 = vpack.c.b16 %v1591, %v1590
    %v2113 = vpack.c.b16 %v1593, %v1592
    %v2114 = vpack.c.b16 %v1595, %v1594
    %v2115 = vpack.c.b16 %v1597, %v1596
    %v2116 = vpack.c.b16 %v1599, %v1598
    %v2117 = vpack.c.b16 %v1601, %v1600
    %v2118 = vpack.c.b16 %v1603, %v1602
    %v2119 = vpack.c.b16 %v1605, %v1604
    %v2120 = vpack.c.b16 %v1607, %v1606
    %v2121 = vpack.c.b16 %v1609, %v1608
    %v2122 = vpack.c.b16 %v1611, %v1610
    %v2123 = vpack.c.b16 %v1613, %v1612
    %v2124 = vpack.c.b16 %v1615, %v1614
    %v2125 = vpack.c.b16 %v1617, %v1616
    %v2126 = vpack.c.b16 %v1619, %v1618
    %v2127 = vpack.c.b16 %v1621, %v1620
    %v2128 = vpack.c.b16 %v1623, %v1622
    %v2129 = vpack.c.b16 %v1625, %v1624
    %v2130 = vpack.c.b16 %v1627, %v1626
    %v2131 = vpack.c.b16 %v1629, %v1628
    %v2132 = vpack.c.b16 %v1631, %v1630
    %v2133 = vpack.c.b16 %v1633, %v1632
    %v2134 = vpack.c.b16 %v1635, %v1634
    %v2135 = vpack.c.b16 %v1637, %v1636
    %v2136 = vpack.c.b16 %v1639, %v1638
    %v2137 = vpack.c.b16 %v1641, %v1640
    %v2138 = vpack.c.b16 %v1643, %v1642
    %v2139 = vpack.c.b16 %v1645, %v1644
    %v2140 = vpack.c.b16 %v1647, %v1646
    %v2141 = vpack.c.b16 %v1649, %v1648
    %v2142 = vpack.c.b16 %v1651, %v1650
    %v2143 = vpack.c.b16 %v1653, %v1652
    %v2144 = vpack.c.b16 %v1655, %v1654
    %v2145 = vpack.c.b16 %v1657, %v1656
    %v2146 = vpack.c.b16 %v1659, %v1658
    %v2147 = vpack.c.b16 %v1661, %v1660
    %v2148 = vpack.c.b16 %v1663, %v1662
    %v2149 = vpack.c.b16 %v1665, %v1664
    %v2150 = vpack.c.b16 %v1667, %v1666
    %v2151 = vpack.c.b16 %v1669, %v1668
    %v2152 = vpack.c.b16 %v1671, %v1670
    %v2153 = vpack.c.b16 %v1673, %v1672
    %v2154 = vpack.c.b16 %v1675, %v1674
    %v2155 = vpack.c.b16 %v1677, %v1676
    %v2156 = vpack.c.b16 %v1679, %v1678
    %v2157 = vpack.c.b16 %v1681, %v1680
    %v2158 = vpack.c.b16 %v1683, %v1682
    %v2159 = vpack.c.b16 %v1685, %v1684
    %v2160 = vpack.c.b16 %v1687, %v1686
    %v2161 = vpack.c.b16 %v1689, %v1688
    %v2162 = vpack.c.b16 %v1691, %v1690
    %v2163 = vpack.c.b16 %v1693, %v1692
    %v2164 = vpack.c.b16 %v1695, %v1694
    %v2165 = vpack.c.b16 %v1697, %v1696
    %v2166 = vpack.c.b16 %v1699, %v1698
    %v2167 = vpack.c.b16 %v1701, %v1700
    %v2168 = vpack.c.b16 %v1703, %v1702
    %v2169 = vpack.c.b16 %v1705, %v1704
    %v2170 = vpack.c.b16 %v1707, %v1706
    %v2171 = vpack.c.b16 %v1709, %v1708
    %v2172 = vpack.c.b16 %v1711, %v1710
    %v2173 = vpack.c.b16 %v1713, %v1712
    %v2174 = vpack.c.b16 %v1715, %v1714
    %v2175 = vpack.c.b16 %v1717, %v1716
    %v2176 = vpack.c.b16 %v1719, %v1718
    %v2177 = vpack.c.b16 %v1721, %v1720
    %v2178 = vpack.c.b16 %v1723, %v1722
    %v2179 = vpack.c.b16 %v1725, %v1724
    %v2180 = vpack.c.b16 %v1727, %v1726
    %v2181 = vpack.c.b16 %v1729, %v1728
    %v2182 = vpack.c.b16 %v1731, %v1730
    %v2183 = vpack.c.b16 %v1733, %v1732
    %v2184 = vpack.c.b16 %v1735, %v1734
    %v2185 = vpack.c.b16 %v1737, %v1736
    %v2186 = vpack.c.b16 %v1739, %v1738
    %v2187 = vpack.c.b16 %v1741, %v1740
    %v2188 = vpack.c.b16 %v1743, %v1742
    %v2189 = vpack.c.b16 %v1745, %v1744
    %v2190 = vpack.c.b16 %v1747, %v1746
    %v2191 = vpack.c.b16 %v1749, %v1748
    %v2192 = vpack.c.b16 %v1751, %v1750
    %v2193 = vpack.c.b16 %v1753, %v1752
    %v2194 = vpack.c.b16 %v1755, %v1754
    %v2195 = vpack.c.b16 %v1757, %v1756
    %v2196 = vpack.c.b16 %v1759, %v1758
    %v2197 = vpack.c.b16 %v1761, %v1760
    %v2198 = vpack.c.b16 %v1763, %v1762
    %v2199 = vpack.c.b16 %v1765, %v1764
    %v2200 = vpack.c.b16 %v1767, %v1766
    %v2201 = vpack.c.b16 %v1769, %v1768
    %v2202 = vpack.c.b16 %v1771, %v1770
    %v2203 = vpack.c.b16 %v1773, %v1772
    %v2204 = vpack.c.b16 %v1775, %v1774
    %v2205 = vpack.c.b16 %v1777, %v1776
    %v2206 = vpack.c.b16 %v1779, %v1778
    %v2207 = vpack.c.b16 %v1781, %v1780
    %v2208 = vpack.c.b16 %v1783, %v1782
    %v2209 = vpack.c.b16 %v1785, %v1784
    %v2210 = vpack.c.b16 %v1787, %v1786
    %v2211 = vpack.c.b16 %v1789, %v1788
    %v2212 = vpack.c.b16 %v1791, %v1790
    %v2213 = vpack.c.b16 %v1793, %v1792
    %v2214 = vpack.c.b16 %v1795, %v1794
    %v2215 = vpack.c.b16 %v1797, %v1796
    %v2216 = vpack.c.b16 %v1799, %v1798
    %v2217 = vpack.c.b16 %v1801, %v1800
    %v2218 = vpack.c.b16 %v1803, %v1802
    %v2219 = vpack.c.b16 %v1805, %v1804
    %v2220 = vpack.c.b16 %v1807, %v1806
    %v2221 = vpack.c.b16 %v1809, %v1808
    %v2222 = vpack.c.b16 %v1811, %v1810
    %v2223 = vpack.c.b16 %v1813, %v1812
    %v2224 = vpack.c.b16 %v1815, %v1814
    %v2225 = vpack.c.b16 %v1817, %v1816
    %v2226 = vpack.c.b16 %v1819, %v1818
    %v2227 = vpack.c.b16 %v1821, %v1820
    %v2228 = vpack.c.b16 %v1823, %v1822
    %v2229 = vpack.c.b16 %v1825, %v1824
    %v2230 = vpack.c.b16 %v1827, %v1826
    %v2231 = vpack.c.b16 %v1829, %v1828
    %v2232 = vpack.c.b16 %v1831, %v1830
    %v2233 = vpack.c.b16 %v1833, %v1832
    %v2234 = vpack.c.b16 %v1835, %v1834
    %v2235 = vpack.c.b16 %v1837, %v1836
    %v2236 = vpack.c.b16 %v1839, %v1838
    %v2237 = vpack.c.b16 %v1841, %v1840
    %v2238 = vpack.c.b16 %v1843, %v1842
    %v2239 = vpack.c.b16 %v1845, %v1844
    %v2240 = vpack.c.b16 %v1847, %v1846
    %v2241 = vpack.c.b16 %v1849, %v1848
    %v2242 = vpack.c.b16 %v1851, %v1850
    %v2243 = vpack.c.b16 %v1853, %v1852
    %v2244 = vpack.c.b16 %v1855, %v1854
    %v2245 = vpack.c.b16 %v1857, %v1856
    %v2246 = vpack.c.b16 %v1859, %v1858
    %v2247 = vpack.c.b16 %v1861, %v1860
    %v2248 = vpack.c.b16 %v1863, %v1862
    %v2249 = vpack.c.b16 %v1865, %v1864
    %v2250 = vpack.c.b16 %v1867, %v1866
    %v2251 = vpack.c.b16 %v1869, %v1868
    %v2252 = vpack.c.b16 %v1871, %v1870
    %v2253 = vpack.c.b16 %v1873, %v1872
    %v2254 = vpack.c.b16 %v1875, %v1874
    %v2255 = vpack.c.b16 %v1877, %v1876
    %v2256 = vpack.c.b16 %v1879, %v1878
    %v2257 = vpack.c.b16 %v1881, %v1880
    %v2258 = vpack.c.b16 %v1883, %v1882
    %v2259 = vpack.c.b16 %v1885, %v1884
    %v2260 = vpack.c.b16 %v1887, %v1886
    %v2261 = vpack.c.b16 %v1889, %v1888
    %v2262 = vpack.c.b16 %v1891, %v1890
    %v2263 = vpack.c.b16 %v1893, %v1892
    %v2264 = vpack.c.b16 %v1895, %v1894
    %v2265 = vpack.c.b16 %v1897, %v1896
    %v2266 = vpack.c.b16 %v1899, %v1898
    %v2267 = vpack.c.b16 %v1901, %v1900
    %v2268 = vpack.c.b16 %v1903, %v1902
    %v2269 = vpack.c.b16 %v1905, %v1904
    %v2270 = vpack.c.b16 %v1907, %v1906
    %v2271 = vpack.c.b16 %v1909, %v1908
    %v2272 = vpack.c.b16 %v1911, %v1910
    %v2273 = vpack.c.b16 %v1913, %v1912
    %v2274 = vpack.c.b16 %v1915, %v1914
    %v2275 = vpack.c.b16 %v1917, %v1916
    %v2276 = vpack.c.b16 %v1919, %v1918
    %v2277 = vpack.c.b16 %v1921, %v1920
    %v2278 = vpack.c.b16 %v1923, %v1922
    %v2279 = vpack.c.b16 %v1925, %v1924
    %v2280 = vpack.c.b16 %v1927, %v1926
    %v2281 = vpack.c.b16 %v1929, %v1928
    %v2282 = vpack.c.b16 %v1931, %v1930
    %v2283 = vpack.c.b16 %v1933, %v1932
    %v2284 = vpack.c.b16 %v1935, %v1934
    %v2285 = vpack.c.b16 %v1937, %v1936
    %v2286 = vpack.c.b16 %v1939, %v1938
    %v2287 = vpack.c.b16 %v1941, %v1940
    %v2288 = vpack.c.b16 %v1943, %v1942
    %v2289 = vpack.c.b16 %v1945, %v1944
    %v2290 = vpack.c.b16 %v1947, %v1946
    %v2291 = vpack.c.b16 %v1949, %v1948
    %v2292 = vpack.c.b16 %v1951, %v1950
    %v2293 = vpack.c.b16 %v1953, %v1952
    %v2294 = vpack.c.b16 %v1955, %v1954
    %v2295 = vpack.c.b16 %v1957, %v1956
    %v2296 = vpack.c.b16 %v1959, %v1958
    %v2297 = vpack.c.b16 %v1961, %v1960
    %v2298 = vpack.c.b16 %v1963, %v1962
    %v2299 = vpack.c.b16 %v1965, %v1964
    %v2300 = vpack.c.b16 %v1967, %v1966
    %v2301 = vpack.c.b16 %v1969, %v1968
    %v2302 = vpack.c.b16 %v1971, %v1970
    %v2303 = vpack.c.b16 %v1973, %v1972
    %v2304 = vpack.c.b16 %v1975, %v1974
    %v2305 = vpack.c.b16 %v1977, %v1976
    %v2306 = vpack.c.b16 %v1979, %v1978
    %v2307 = vpack.c.b16 %v1981, %v1980
    %v2308 = vpack.c.b16 %v1983, %v1982
    %v2309 = vpack.c.b16 %v1985, %v1984
    %v2310 = vpack.c.b16 %v1987, %v1986
    %v2311 = vpack.c.b16 %v1989, %v1988
    %v2312 = vpack.c.b16 %v1991, %v1990
    %v2313 = vpack.c.b16 %v1993, %v1992
    %v2314 = vpack.c.b16 %v1995, %v1994
    %v2315 = vpack.c.b16 %v1997, %v1996
    %v2316 = vpack.c.b16 %v1999, %v1998
    %v2317 = vpack.c.b16 %v2001, %v2000
    %v2318 = vpack.c.b16 %v2003, %v2002
    %v2319 = vpack.c.b16 %v2005, %v2004
    %v2320 = vpack.c.b16 %v2007, %v2006
    %v2321 = vpack.c.b16 %v2009, %v2008
    %v2322 = vpack.c.b16 %v2011, %v2010
    %v2323 = vpack.c.b16 %v2013, %v2012
    %v2324 = vpack.c.b16 %v2015, %v2014
    %v2325 = vpack.c.b16 %v2017, %v2016
    %v2326 = vpack.c.b16 %v2019, %v2018
    %v2327 = vpack.c.b16 %v2021, %v2020
    %v2328 = vpack.c.b16 %v2023, %v2022
    %v2329 = vpack.c.b16 %v2025, %v2024
    %v2330 = vpack.c.b16 %v2027, %v2026
    %v2331 = vpack.c.b16 %v2029, %v2028
    %v2332 = vpack.c.b16 %v2031, %v2030
    %v2333 = vpack.c.b16 %v2033, %v2032
    %v2334 = vpack.c.b16 %v2035, %v2034
    %v2335 = vpack.c.b16 %v2037, %v2036
    %v2336 = vpack.c.b16 %v2039, %v2038
    %v2337 = vpack.c.b16 %v2041, %v2040
    %v2338 = vpack.c.b16 %v2043, %v2042
    %v2339 = vpack.c.b16 %v2045, %v2044
    %v2340 = vpack.c.b16 %v2047, %v2046
    %v2341 = vpack.c.b16 %v2049, %v2048
    %v2342 = vpack.c.b16 %v2051, %v2050
    %v2343 = vpack.c.b16 %v2053, %v2052
    %v2344 = vpack.c.b16 %v2055, %v2054
    %v2345 = vpack.c.b16 %v2057, %v2056
    %2634 = vmatprep.subr.bf16.mxu0 0
    %2635 = vmatpush1.bf16.msra.mxu0 %v2065
    %2636 = vmatprep.subr.bf16.mxu0 0
    %2637 = vmatpush1.bf16.msra.mxu0 %v2064
    %2638 = vmatprep.subr.bf16.mxu0 0
    %2639 = vmatpush1.bf16.msra.mxu0 %v2063
    %2640 = vmatprep.subr.bf16.mxu0 0
    %2641 = vmatpush1.bf16.msra.mxu0 %v2062
    %2642 = vmatprep.subr.bf16.mxu0 0
    %2643 = vmatpush1.bf16.msra.mxu0 %v2061
    %2644 = vmatprep.subr.bf16.mxu0 0
    %2645 = vmatpush1.bf16.msra.mxu0 %v2060
    %2646 = vmatprep.subr.bf16.mxu0 0
    %2647 = vmatpush1.bf16.msra.mxu0 %v2059
    %2648 = vmatprep.subr.bf16.mxu0 0
    %2649 = vmatpush1.bf16.msra.mxu0 %v2058
    %2650 = vmatprep.subr.bf16.mxu0 0
    %2651 = vmatpush2.bf16.msra.mxu0 %v2073
    %2652 = vmatprep.subr.bf16.mxu0 0
    %2653 = vmatpush2.bf16.msra.mxu0 %v2072
    %2654 = vmatprep.subr.bf16.mxu0 0
    %2655 = vmatpush2.bf16.msra.mxu0 %v2071
    %2656 = vmatprep.subr.bf16.mxu0 0
    %2657 = vmatpush2.bf16.msra.mxu0 %v2070
    %2658 = vmatprep.subr.bf16.mxu0 0
    %2659 = vmatpush2.bf16.msra.mxu0 %v2069
    %2660 = vmatprep.subr.bf16.mxu0 0
    %2661 = vmatpush2.bf16.msra.mxu0 %v2068
    %2662 = vmatprep.subr.bf16.mxu0 0
    %2663 = vmatpush2.bf16.msra.mxu0 %v2067
    %2664 = vmatprep.subr.bf16.mxu0 0
    %2665 = vmatpush2.bf16.msra.mxu0 %v2066
    %2666 = vmatprep.mubr.bf16.mxu0 %v687
    %2667 = vmatmul.mubr.bf16.gmra.mxu0 %v673
    %v2668 = vpop.f32.mrf.mxu0
    %v2669 = vadd.f32 0.0, %v2668
    %v2670 = vpop.f32.mrf.mxu0
    %v2671 = vpop.f32.mrf.mxu0
    %v2672 = vpop.f32.mrf.mxu0
    %2673 = vdwg.mxu0
    %2674 = vmatprep.subr.bf16.mxu0 0
    %2675 = vmatpush1.bf16.msra.mxu0 %v2081
    %2676 = vmatprep.subr.bf16.mxu0 0
    %2677 = vmatpush1.bf16.msra.mxu0 %v2080
    %2678 = vmatprep.subr.bf16.mxu0 0
    %2679 = vmatpush1.bf16.msra.mxu0 %v2079
    %2680 = vmatprep.subr.bf16.mxu0 0
    %2681 = vmatpush1.bf16.msra.mxu0 %v2078
    %2682 = vmatprep.subr.bf16.mxu0 0
    %2683 = vmatpush1.bf16.msra.mxu0 %v2077
    %2684 = vmatprep.subr.bf16.mxu0 0
    %2685 = vmatpush1.bf16.msra.mxu0 %v2076
    %2686 = vmatprep.subr.bf16.mxu0 0
    %2687 = vmatpush1.bf16.msra.mxu0 %v2075
    %2688 = vmatprep.subr.bf16.mxu0 0
    %2689 = vmatpush1.bf16.msra.mxu0 %v2074
    %2690 = vmatprep.subr.bf16.mxu0 0
    %2691 = vmatpush2.bf16.msra.mxu0 %v2089
    %2692 = vmatprep.subr.bf16.mxu0 0
    %2693 = vmatpush2.bf16.msra.mxu0 %v2088
    %2694 = vmatprep.subr.bf16.mxu0 0
    %2695 = vmatpush2.bf16.msra.mxu0 %v2087
    %2696 = vmatprep.subr.bf16.mxu0 0
    %2697 = vmatpush2.bf16.msra.mxu0 %v2086
    %2698 = vmatprep.subr.bf16.mxu0 0
    %2699 = vmatpush2.bf16.msra.mxu0 %v2085
    %2700 = vmatprep.subr.bf16.mxu0 0
    %2701 = vmatpush2.bf16.msra.mxu0 %v2084
    %2702 = vmatprep.subr.bf16.mxu0 0
    %2703 = vmatpush2.bf16.msra.mxu0 %v2083
    %2704 = vmatprep.subr.bf16.mxu0 0
    %2705 = vmatpush2.bf16.msra.mxu0 %v2082
    %2706 = vmatprep.mubr.bf16.mxu0 %v697
    %2707 = vmatmul.mubr.bf16.gmra.mxu0 %v695
    %v2708 = vpop.f32.mrf.mxu0
    %v2709 = vadd.f32 %v2669, %v2708
    %v2710 = vpop.f32.mrf.mxu0
    %v2711 = vpop.f32.mrf.mxu0
    %v2712 = vpop.f32.mrf.mxu0
    %2713 = vdwg.mxu0
    %2714 = vmatprep.subr.bf16.mxu0 0
    %2715 = vmatpush1.bf16.msra.mxu0 %v2097
    %2716 = vmatprep.subr.bf16.mxu0 0
    %2717 = vmatpush1.bf16.msra.mxu0 %v2096
    %2718 = vmatprep.subr.bf16.mxu0 0
    %2719 = vmatpush1.bf16.msra.mxu0 %v2095
    %2720 = vmatprep.subr.bf16.mxu0 0
    %2721 = vmatpush1.bf16.msra.mxu0 %v2094
    %2722 = vmatprep.subr.bf16.mxu0 0
    %2723 = vmatpush1.bf16.msra.mxu0 %v2093
    %2724 = vmatprep.subr.bf16.mxu0 0
    %2725 = vmatpush1.bf16.msra.mxu0 %v2092
    %2726 = vmatprep.subr.bf16.mxu0 0
    %2727 = vmatpush1.bf16.msra.mxu0 %v2091
    %2728 = vmatprep.subr.bf16.mxu0 0
    %2729 = vmatpush1.bf16.msra.mxu0 %v2090
    %2730 = vmatprep.subr.bf16.mxu0 0
    %2731 = vmatpush2.bf16.msra.mxu0 %v2105
    %2732 = vmatprep.subr.bf16.mxu0 0
    %2733 = vmatpush2.bf16.msra.mxu0 %v2104
    %2734 = vmatprep.subr.bf16.mxu0 0
    %2735 = vmatpush2.bf16.msra.mxu0 %v2103
    %2736 = vmatprep.subr.bf16.mxu0 0
    %2737 = vmatpush2.bf16.msra.mxu0 %v2102
    %2738 = vmatprep.subr.bf16.mxu0 0
    %2739 = vmatpush2.bf16.msra.mxu0 %v2101
    %2740 = vmatprep.subr.bf16.mxu0 0
    %2741 = vmatpush2.bf16.msra.mxu0 %v2100
    %2742 = vmatprep.subr.bf16.mxu0 0
    %2743 = vmatpush2.bf16.msra.mxu0 %v2099
    %2744 = vmatprep.subr.bf16.mxu0 0
    %2745 = vmatpush2.bf16.msra.mxu0 %v2098
    %2746 = vmatprep.mubr.bf16.mxu0 %v694
    %2747 = vmatmul.mubr.bf16.gmra.mxu0 %v680
    %v2748 = vpop.f32.mrf.mxu0
    %v2749 = vadd.f32 %v2709, %v2748
    %v2750 = vpop.f32.mrf.mxu0
    %v2751 = vpop.f32.mrf.mxu0
    %v2752 = vpop.f32.mrf.mxu0
    %2753 = vdwg.mxu0
    %2754 = vmatprep.subr.bf16.mxu0 0
    %2755 = vmatpush1.bf16.msra.mxu0 %v2113
    %2756 = vmatprep.subr.bf16.mxu0 0
    %2757 = vmatpush1.bf16.msra.mxu0 %v2112
    %2758 = vmatprep.subr.bf16.mxu0 0
    %2759 = vmatpush1.bf16.msra.mxu0 %v2111
    %2760 = vmatprep.subr.bf16.mxu0 0
    %2761 = vmatpush1.bf16.msra.mxu0 %v2110
    %2762 = vmatprep.subr.bf16.mxu0 0
    %2763 = vmatpush1.bf16.msra.mxu0 %v2109
    %2764 = vmatprep.subr.bf16.mxu0 0
    %2765 = vmatpush1.bf16.msra.mxu0 %v2108
    %2766 = vmatprep.subr.bf16.mxu0 0
    %2767 = vmatpush1.bf16.msra.mxu0 %v2107
    %2768 = vmatprep.subr.bf16.mxu0 0
    %2769 = vmatpush1.bf16.msra.mxu0 %v2106
    %2770 = vmatprep.subr.bf16.mxu0 0
    %2771 = vmatpush2.bf16.msra.mxu0 %v2121
    %2772 = vmatprep.subr.bf16.mxu0 0
    %2773 = vmatpush2.bf16.msra.mxu0 %v2120
    %2774 = vmatprep.subr.bf16.mxu0 0
    %2775 = vmatpush2.bf16.msra.mxu0 %v2119
    %2776 = vmatprep.subr.bf16.mxu0 0
    %2777 = vmatpush2.bf16.msra.mxu0 %v2118
    %2778 = vmatprep.subr.bf16.mxu0 0
    %2779 = vmatpush2.bf16.msra.mxu0 %v2117
    %2780 = vmatprep.subr.bf16.mxu0 0
    %2781 = vmatpush2.bf16.msra.mxu0 %v2116
    %2782 = vmatprep.subr.bf16.mxu0 0
    %2783 = vmatpush2.bf16.msra.mxu0 %v2115
    %2784 = vmatprep.subr.bf16.mxu0 0
    %2785 = vmatpush2.bf16.msra.mxu0 %v2114
    %2786 = vmatprep.mubr.bf16.mxu0 %v698
    %2787 = vmatmul.mubr.bf16.gmra.mxu0 %v696
    %v2788 = vpop.f32.mrf.mxu0
    %v2789 = vadd.f32 %v2749, %v2788
    %v2790 = vpop.f32.mrf.mxu0
    %v2791 = vpop.f32.mrf.mxu0
    %v2792 = vpop.f32.mrf.mxu0
    %2793 = vdwg.mxu0
    %2794 = vmatprep.subr.bf16.mxu0 0
    %2795 = vmatpush1.bf16.msra.mxu0 %v2129
    %2796 = vmatprep.subr.bf16.mxu0 0
    %2797 = vmatpush1.bf16.msra.mxu0 %v2128
    %2798 = vmatprep.subr.bf16.mxu0 0
    %2799 = vmatpush1.bf16.msra.mxu0 %v2127
    %2800 = vmatprep.subr.bf16.mxu0 0
    %2801 = vmatpush1.bf16.msra.mxu0 %v2126
    %2802 = vmatprep.subr.bf16.mxu0 0
    %2803 = vmatpush1.bf16.msra.mxu0 %v2125
    %2804 = vmatprep.subr.bf16.mxu0 0
    %2805 = vmatpush1.bf16.msra.mxu0 %v2124
    %2806 = vmatprep.subr.bf16.mxu0 0
    %2807 = vmatpush1.bf16.msra.mxu0 %v2123
    %2808 = vmatprep.subr.bf16.mxu0 0
    %2809 = vmatpush1.bf16.msra.mxu0 %v2122
    %2810 = vmatprep.subr.bf16.mxu0 0
    %2811 = vmatpush2.bf16.msra.mxu0 %v2137
    %2812 = vmatprep.subr.bf16.mxu0 0
    %2813 = vmatpush2.bf16.msra.mxu0 %v2136
    %2814 = vmatprep.subr.bf16.mxu0 0
    %2815 = vmatpush2.bf16.msra.mxu0 %v2135
    %2816 = vmatprep.subr.bf16.mxu0 0
    %2817 = vmatpush2.bf16.msra.mxu0 %v2134
    %2818 = vmatprep.subr.bf16.mxu0 0
    %2819 = vmatpush2.bf16.msra.mxu0 %v2133
    %2820 = vmatprep.subr.bf16.mxu0 0
    %2821 = vmatpush2.bf16.msra.mxu0 %v2132
    %2822 = vmatprep.subr.bf16.mxu0 0
    %2823 = vmatpush2.bf16.msra.mxu0 %v2131
    %2824 = vmatprep.subr.bf16.mxu0 0
    %2825 = vmatpush2.bf16.msra.mxu0 %v2130
    %2826 = vmatprep.mubr.bf16.mxu0 %v736
    %2827 = vmatmul.mubr.bf16.gmra.mxu0 %v722
    %v2828 = vpop.f32.mrf.mxu0
    %v2829 = vadd.f32 %v2789, %v2828
    %v2830 = vpop.f32.mrf.mxu0
    %v2831 = vpop.f32.mrf.mxu0
    %v2832 = vpop.f32.mrf.mxu0
    %2833 = vdwg.mxu0
    %2834 = vmatprep.subr.bf16.mxu0 0
    %2835 = vmatpush1.bf16.msra.mxu0 %v2145
    %2836 = vmatprep.subr.bf16.mxu0 0
    %2837 = vmatpush1.bf16.msra.mxu0 %v2144
    %2838 = vmatprep.subr.bf16.mxu0 0
    %2839 = vmatpush1.bf16.msra.mxu0 %v2143
    %2840 = vmatprep.subr.bf16.mxu0 0
    %2841 = vmatpush1.bf16.msra.mxu0 %v2142
    %2842 = vmatprep.subr.bf16.mxu0 0
    %2843 = vmatpush1.bf16.msra.mxu0 %v2141
    %2844 = vmatprep.subr.bf16.mxu0 0
    %2845 = vmatpush1.bf16.msra.mxu0 %v2140
    %2846 = vmatprep.subr.bf16.mxu0 0
    %2847 = vmatpush1.bf16.msra.mxu0 %v2139
    %2848 = vmatprep.subr.bf16.mxu0 0
    %2849 = vmatpush1.bf16.msra.mxu0 %v2138
    %2850 = vmatprep.subr.bf16.mxu0 0
    %2851 = vmatpush2.bf16.msra.mxu0 %v2153
    %2852 = vmatprep.subr.bf16.mxu0 0
    %2853 = vmatpush2.bf16.msra.mxu0 %v2152
    %2854 = vmatprep.subr.bf16.mxu0 0
    %2855 = vmatpush2.bf16.msra.mxu0 %v2151
    %2856 = vmatprep.subr.bf16.mxu0 0
    %2857 = vmatpush2.bf16.msra.mxu0 %v2150
    %2858 = vmatprep.subr.bf16.mxu0 0
    %2859 = vmatpush2.bf16.msra.mxu0 %v2149
    %2860 = vmatprep.subr.bf16.mxu0 0
    %2861 = vmatpush2.bf16.msra.mxu0 %v2148
    %2862 = vmatprep.subr.bf16.mxu0 0
    %2863 = vmatpush2.bf16.msra.mxu0 %v2147
    %2864 = vmatprep.subr.bf16.mxu0 0
    %2865 = vmatpush2.bf16.msra.mxu0 %v2146
    %2866 = vmatprep.mubr.bf16.mxu0 %v746
    %2867 = vmatmul.mubr.bf16.gmra.mxu0 %v744
    %v2868 = vpop.f32.mrf.mxu0
    %v2869 = vadd.f32 %v2829, %v2868
    %v2870 = vpop.f32.mrf.mxu0
    %v2871 = vpop.f32.mrf.mxu0
    %v2872 = vpop.f32.mrf.mxu0
    %2873 = vdwg.mxu0
    %2874 = vmatprep.subr.bf16.mxu0 0
    %2875 = vmatpush1.bf16.msra.mxu0 %v2161
    %2876 = vmatprep.subr.bf16.mxu0 0
    %2877 = vmatpush1.bf16.msra.mxu0 %v2160
    %2878 = vmatprep.subr.bf16.mxu0 0
    %2879 = vmatpush1.bf16.msra.mxu0 %v2159
    %2880 = vmatprep.subr.bf16.mxu0 0
    %2881 = vmatpush1.bf16.msra.mxu0 %v2158
    %2882 = vmatprep.subr.bf16.mxu0 0
    %2883 = vmatpush1.bf16.msra.mxu0 %v2157
    %2884 = vmatprep.subr.bf16.mxu0 0
    %2885 = vmatpush1.bf16.msra.mxu0 %v2156
    %2886 = vmatprep.subr.bf16.mxu0 0
    %2887 = vmatpush1.bf16.msra.mxu0 %v2155
    %2888 = vmatprep.subr.bf16.mxu0 0
    %2889 = vmatpush1.bf16.msra.mxu0 %v2154
    %2890 = vmatprep.subr.bf16.mxu0 0
    %2891 = vmatpush2.bf16.msra.mxu0 %v2169
    %2892 = vmatprep.subr.bf16.mxu0 0
    %2893 = vmatpush2.bf16.msra.mxu0 %v2168
    %2894 = vmatprep.subr.bf16.mxu0 0
    %2895 = vmatpush2.bf16.msra.mxu0 %v2167
    %2896 = vmatprep.subr.bf16.mxu0 0
    %2897 = vmatpush2.bf16.msra.mxu0 %v2166
    %2898 = vmatprep.subr.bf16.mxu0 0
    %2899 = vmatpush2.bf16.msra.mxu0 %v2165
    %2900 = vmatprep.subr.bf16.mxu0 0
    %2901 = vmatpush2.bf16.msra.mxu0 %v2164
    %2902 = vmatprep.subr.bf16.mxu0 0
    %2903 = vmatpush2.bf16.msra.mxu0 %v2163
    %2904 = vmatprep.subr.bf16.mxu0 0
    %2905 = vmatpush2.bf16.msra.mxu0 %v2162
    %2906 = vmatprep.mubr.bf16.mxu0 %v743
    %2907 = vmatmul.mubr.bf16.gmra.mxu0 %v729
    %v2908 = vpop.f32.mrf.mxu0
    %v2909 = vadd.f32 %v2869, %v2908
    %v2910 = vpop.f32.mrf.mxu0
    %v2911 = vpop.f32.mrf.mxu0
    %v2912 = vpop.f32.mrf.mxu0
    %2913 = vdwg.mxu0
    %2914 = vmatprep.subr.bf16.mxu0 0
    %2915 = vmatpush1.bf16.msra.mxu0 %v2177
    %2916 = vmatprep.subr.bf16.mxu0 0
    %2917 = vmatpush1.bf16.msra.mxu0 %v2176
    %2918 = vmatprep.subr.bf16.mxu0 0
    %2919 = vmatpush1.bf16.msra.mxu0 %v2175
    %2920 = vmatprep.subr.bf16.mxu0 0
    %2921 = vmatpush1.bf16.msra.mxu0 %v2174
    %2922 = vmatprep.subr.bf16.mxu0 0
    %2923 = vmatpush1.bf16.msra.mxu0 %v2173
    %2924 = vmatprep.subr.bf16.mxu0 0
    %2925 = vmatpush1.bf16.msra.mxu0 %v2172
    %2926 = vmatprep.subr.bf16.mxu0 0
    %2927 = vmatpush1.bf16.msra.mxu0 %v2171
    %2928 = vmatprep.subr.bf16.mxu0 0
    %2929 = vmatpush1.bf16.msra.mxu0 %v2170
    %2930 = vmatprep.subr.bf16.mxu0 0
    %2931 = vmatpush2.bf16.msra.mxu0 %v2185
    %2932 = vmatprep.subr.bf16.mxu0 0
    %2933 = vmatpush2.bf16.msra.mxu0 %v2184
    %2934 = vmatprep.subr.bf16.mxu0 0
    %2935 = vmatpush2.bf16.msra.mxu0 %v2183
    %2936 = vmatprep.subr.bf16.mxu0 0
    %2937 = vmatpush2.bf16.msra.mxu0 %v2182
    %2938 = vmatprep.subr.bf16.mxu0 0
    %2939 = vmatpush2.bf16.msra.mxu0 %v2181
    %2940 = vmatprep.subr.bf16.mxu0 0
    %2941 = vmatpush2.bf16.msra.mxu0 %v2180
    %2942 = vmatprep.subr.bf16.mxu0 0
    %2943 = vmatpush2.bf16.msra.mxu0 %v2179
    %2944 = vmatprep.subr.bf16.mxu0 0
    %2945 = vmatpush2.bf16.msra.mxu0 %v2178
    %2946 = vmatprep.mubr.bf16.mxu0 %v747
    %2947 = vmatmul.mubr.bf16.gmra.mxu0 %v745
    %v2948 = vpop.f32.mrf.mxu0
    %v2949 = vadd.f32 %v2909, %v2948
    %v2950 = vpop.f32.mrf.mxu0
    %v2951 = vpop.f32.mrf.mxu0
    %v2952 = vpop.f32.mrf.mxu0
    %2953 = vdwg.mxu0
    %2954 = vmatprep.subr.bf16.mxu0 0
    %2955 = vmatpush1.bf16.msra.mxu0 %v2193
    %2956 = vmatprep.subr.bf16.mxu0 0
    %2957 = vmatpush1.bf16.msra.mxu0 %v2192
    %2958 = vmatprep.subr.bf16.mxu0 0
    %2959 = vmatpush1.bf16.msra.mxu0 %v2191
    %2960 = vmatprep.subr.bf16.mxu0 0
    %2961 = vmatpush1.bf16.msra.mxu0 %v2190
    %2962 = vmatprep.subr.bf16.mxu0 0
    %2963 = vmatpush1.bf16.msra.mxu0 %v2189
    %2964 = vmatprep.subr.bf16.mxu0 0
    %2965 = vmatpush1.bf16.msra.mxu0 %v2188
    %2966 = vmatprep.subr.bf16.mxu0 0
    %2967 = vmatpush1.bf16.msra.mxu0 %v2187
    %2968 = vmatprep.subr.bf16.mxu0 0
    %2969 = vmatpush1.bf16.msra.mxu0 %v2186
    %2970 = vmatprep.subr.bf16.mxu0 0
    %2971 = vmatpush2.bf16.msra.mxu0 %v2201
    %2972 = vmatprep.subr.bf16.mxu0 0
    %2973 = vmatpush2.bf16.msra.mxu0 %v2200
    %2974 = vmatprep.subr.bf16.mxu0 0
    %2975 = vmatpush2.bf16.msra.mxu0 %v2199
    %2976 = vmatprep.subr.bf16.mxu0 0
    %2977 = vmatpush2.bf16.msra.mxu0 %v2198
    %2978 = vmatprep.subr.bf16.mxu0 0
    %2979 = vmatpush2.bf16.msra.mxu0 %v2197
    %2980 = vmatprep.subr.bf16.mxu0 0
    %2981 = vmatpush2.bf16.msra.mxu0 %v2196
    %2982 = vmatprep.subr.bf16.mxu0 0
    %2983 = vmatpush2.bf16.msra.mxu0 %v2195
    %2984 = vmatprep.subr.bf16.mxu0 0
    %2985 = vmatpush2.bf16.msra.mxu0 %v2194
    %2986 = vmatprep.mubr.bf16.mxu0 %v785
    %2987 = vmatmul.mubr.bf16.gmra.mxu0 %v771
    %v2988 = vpop.f32.mrf.mxu0
    %v2989 = vadd.f32 %v2949, %v2988
    %v2990 = vpop.f32.mrf.mxu0
    %v2991 = vpop.f32.mrf.mxu0
    %v2992 = vpop.f32.mrf.mxu0
    %2993 = vdwg.mxu0
    %2994 = vmatprep.subr.bf16.mxu0 0
    %2995 = vmatpush1.bf16.msra.mxu0 %v2209
    %2996 = vmatprep.subr.bf16.mxu0 0
    %2997 = vmatpush1.bf16.msra.mxu0 %v2208
    %2998 = vmatprep.subr.bf16.mxu0 0
    %2999 = vmatpush1.bf16.msra.mxu0 %v2207
    %3000 = vmatprep.subr.bf16.mxu0 0
    %3001 = vmatpush1.bf16.msra.mxu0 %v2206
    %3002 = vmatprep.subr.bf16.mxu0 0
    %3003 = vmatpush1.bf16.msra.mxu0 %v2205
    %3004 = vmatprep.subr.bf16.mxu0 0
    %3005 = vmatpush1.bf16.msra.mxu0 %v2204
    %3006 = vmatprep.subr.bf16.mxu0 0
    %3007 = vmatpush1.bf16.msra.mxu0 %v2203
    %3008 = vmatprep.subr.bf16.mxu0 0
    %3009 = vmatpush1.bf16.msra.mxu0 %v2202
    %3010 = vmatprep.subr.bf16.mxu0 0
    %3011 = vmatpush2.bf16.msra.mxu0 %v2217
    %3012 = vmatprep.subr.bf16.mxu0 0
    %3013 = vmatpush2.bf16.msra.mxu0 %v2216
    %3014 = vmatprep.subr.bf16.mxu0 0
    %3015 = vmatpush2.bf16.msra.mxu0 %v2215
    %3016 = vmatprep.subr.bf16.mxu0 0
    %3017 = vmatpush2.bf16.msra.mxu0 %v2214
    %3018 = vmatprep.subr.bf16.mxu0 0
    %3019 = vmatpush2.bf16.msra.mxu0 %v2213
    %3020 = vmatprep.subr.bf16.mxu0 0
    %3021 = vmatpush2.bf16.msra.mxu0 %v2212
    %3022 = vmatprep.subr.bf16.mxu0 0
    %3023 = vmatpush2.bf16.msra.mxu0 %v2211
    %3024 = vmatprep.subr.bf16.mxu0 0
    %3025 = vmatpush2.bf16.msra.mxu0 %v2210
    %3026 = vmatprep.mubr.bf16.mxu0 %v795
    %3027 = vmatmul.mubr.bf16.gmra.mxu0 %v793
    %v3028 = vpop.f32.mrf.mxu0
    %v3029 = vadd.f32 %v2989, %v3028
    %v3030 = vpop.f32.mrf.mxu0
    %v3031 = vpop.f32.mrf.mxu0
    %v3032 = vpop.f32.mrf.mxu0
    %3033 = vdwg.mxu0
    %3034 = vmatprep.subr.bf16.mxu0 0
    %3035 = vmatpush1.bf16.msra.mxu0 %v2225
    %3036 = vmatprep.subr.bf16.mxu0 0
    %3037 = vmatpush1.bf16.msra.mxu0 %v2224
    %3038 = vmatprep.subr.bf16.mxu0 0
    %3039 = vmatpush1.bf16.msra.mxu0 %v2223
    %3040 = vmatprep.subr.bf16.mxu0 0
    %3041 = vmatpush1.bf16.msra.mxu0 %v2222
    %3042 = vmatprep.subr.bf16.mxu0 0
    %3043 = vmatpush1.bf16.msra.mxu0 %v2221
    %3044 = vmatprep.subr.bf16.mxu0 0
    %3045 = vmatpush1.bf16.msra.mxu0 %v2220
    %3046 = vmatprep.subr.bf16.mxu0 0
    %3047 = vmatpush1.bf16.msra.mxu0 %v2219
    %3048 = vmatprep.subr.bf16.mxu0 0
    %3049 = vmatpush1.bf16.msra.mxu0 %v2218
    %3050 = vmatprep.subr.bf16.mxu0 0
    %3051 = vmatpush2.bf16.msra.mxu0 %v2233
    %3052 = vmatprep.subr.bf16.mxu0 0
    %3053 = vmatpush2.bf16.msra.mxu0 %v2232
    %3054 = vmatprep.subr.bf16.mxu0 0
    %3055 = vmatpush2.bf16.msra.mxu0 %v2231
    %3056 = vmatprep.subr.bf16.mxu0 0
    %3057 = vmatpush2.bf16.msra.mxu0 %v2230
    %3058 = vmatprep.subr.bf16.mxu0 0
    %3059 = vmatpush2.bf16.msra.mxu0 %v2229
    %3060 = vmatprep.subr.bf16.mxu0 0
    %3061 = vmatpush2.bf16.msra.mxu0 %v2228
    %3062 = vmatprep.subr.bf16.mxu0 0
    %3063 = vmatpush2.bf16.msra.mxu0 %v2227
    %3064 = vmatprep.subr.bf16.mxu0 0
    %3065 = vmatpush2.bf16.msra.mxu0 %v2226
    %3066 = vmatprep.mubr.bf16.mxu0 %v792
    %3067 = vmatmul.mubr.bf16.gmra.mxu0 %v778
    %v3068 = vpop.f32.mrf.mxu0
    %v3069 = vadd.f32 %v3029, %v3068
    %v3070 = vpop.f32.mrf.mxu0
    %v3071 = vpop.f32.mrf.mxu0
    %v3072 = vpop.f32.mrf.mxu0
    %3073 = vdwg.mxu0
    %3074 = vmatprep.subr.bf16.mxu0 0
    %3075 = vmatpush1.bf16.msra.mxu0 %v2241
    %3076 = vmatprep.subr.bf16.mxu0 0
    %3077 = vmatpush1.bf16.msra.mxu0 %v2240
    %3078 = vmatprep.subr.bf16.mxu0 0
    %3079 = vmatpush1.bf16.msra.mxu0 %v2239
    %3080 = vmatprep.subr.bf16.mxu0 0
    %3081 = vmatpush1.bf16.msra.mxu0 %v2238
    %3082 = vmatprep.subr.bf16.mxu0 0
    %3083 = vmatpush1.bf16.msra.mxu0 %v2237
    %3084 = vmatprep.subr.bf16.mxu0 0
    %3085 = vmatpush1.bf16.msra.mxu0 %v2236
    %3086 = vmatprep.subr.bf16.mxu0 0
    %3087 = vmatpush1.bf16.msra.mxu0 %v2235
    %3088 = vmatprep.subr.bf16.mxu0 0
    %3089 = vmatpush1.bf16.msra.mxu0 %v2234
    %3090 = vmatprep.subr.bf16.mxu0 0
    %3091 = vmatpush2.bf16.msra.mxu0 %v2249
    %3092 = vmatprep.subr.bf16.mxu0 0
    %3093 = vmatpush2.bf16.msra.mxu0 %v2248
    %3094 = vmatprep.subr.bf16.mxu0 0
    %3095 = vmatpush2.bf16.msra.mxu0 %v2247
    %3096 = vmatprep.subr.bf16.mxu0 0
    %3097 = vmatpush2.bf16.msra.mxu0 %v2246
    %3098 = vmatprep.subr.bf16.mxu0 0
    %3099 = vmatpush2.bf16.msra.mxu0 %v2245
    %3100 = vmatprep.subr.bf16.mxu0 0
    %3101 = vmatpush2.bf16.msra.mxu0 %v2244
    %3102 = vmatprep.subr.bf16.mxu0 0
    %3103 = vmatpush2.bf16.msra.mxu0 %v2243
    %3104 = vmatprep.subr.bf16.mxu0 0
    %3105 = vmatpush2.bf16.msra.mxu0 %v2242
    %3106 = vmatprep.mubr.bf16.mxu0 %v796
    %3107 = vmatmul.mubr.bf16.gmra.mxu0 %v794
    %v3108 = vpop.f32.mrf.mxu0
    %v3109 = vadd.f32 %v3069, %v3108
    %v3110 = vpop.f32.mrf.mxu0
    %v3111 = vpop.f32.mrf.mxu0
    %v3112 = vpop.f32.mrf.mxu0
    %3113 = vdwg.mxu0
    %3114 = vmatprep.subr.bf16.mxu0 0
    %3115 = vmatpush1.bf16.msra.mxu0 %v2257
    %3116 = vmatprep.subr.bf16.mxu0 0
    %3117 = vmatpush1.bf16.msra.mxu0 %v2256
    %3118 = vmatprep.subr.bf16.mxu0 0
    %3119 = vmatpush1.bf16.msra.mxu0 %v2255
    %3120 = vmatprep.subr.bf16.mxu0 0
    %3121 = vmatpush1.bf16.msra.mxu0 %v2254
    %3122 = vmatprep.subr.bf16.mxu0 0
    %3123 = vmatpush1.bf16.msra.mxu0 %v2253
    %3124 = vmatprep.subr.bf16.mxu0 0
    %3125 = vmatpush1.bf16.msra.mxu0 %v2252
    %3126 = vmatprep.subr.bf16.mxu0 0
    %3127 = vmatpush1.bf16.msra.mxu0 %v2251
    %3128 = vmatprep.subr.bf16.mxu0 0
    %3129 = vmatpush1.bf16.msra.mxu0 %v2250
    %3130 = vmatprep.subr.bf16.mxu0 0
    %3131 = vmatpush2.bf16.msra.mxu0 %v2265
    %3132 = vmatprep.subr.bf16.mxu0 0
    %3133 = vmatpush2.bf16.msra.mxu0 %v2264
    %3134 = vmatprep.subr.bf16.mxu0 0
    %3135 = vmatpush2.bf16.msra.mxu0 %v2263
    %3136 = vmatprep.subr.bf16.mxu0 0
    %3137 = vmatpush2.bf16.msra.mxu0 %v2262
    %3138 = vmatprep.subr.bf16.mxu0 0
    %3139 = vmatpush2.bf16.msra.mxu0 %v2261
    %3140 = vmatprep.subr.bf16.mxu0 0
    %3141 = vmatpush2.bf16.msra.mxu0 %v2260
    %3142 = vmatprep.subr.bf16.mxu0 0
    %3143 = vmatpush2.bf16.msra.mxu0 %v2259
    %3144 = vmatprep.subr.bf16.mxu0 0
    %3145 = vmatpush2.bf16.msra.mxu0 %v2258
    %3146 = vmatprep.mubr.bf16.mxu0 %v834
    %3147 = vmatmul.mubr.bf16.gmra.mxu0 %v820
    %v3148 = vpop.f32.mrf.mxu0
    %v3149 = vadd.f32 %v3109, %v3148
    %v3150 = vpop.f32.mrf.mxu0
    %v3151 = vpop.f32.mrf.mxu0
    %v3152 = vpop.f32.mrf.mxu0
    %3153 = vdwg.mxu0
    %3154 = vmatprep.subr.bf16.mxu0 0
    %3155 = vmatpush1.bf16.msra.mxu0 %v2273
    %3156 = vmatprep.subr.bf16.mxu0 0
    %3157 = vmatpush1.bf16.msra.mxu0 %v2272
    %3158 = vmatprep.subr.bf16.mxu0 0
    %3159 = vmatpush1.bf16.msra.mxu0 %v2271
    %3160 = vmatprep.subr.bf16.mxu0 0
    %3161 = vmatpush1.bf16.msra.mxu0 %v2270
    %3162 = vmatprep.subr.bf16.mxu0 0
    %3163 = vmatpush1.bf16.msra.mxu0 %v2269
    %3164 = vmatprep.subr.bf16.mxu0 0
    %3165 = vmatpush1.bf16.msra.mxu0 %v2268
    %3166 = vmatprep.subr.bf16.mxu0 0
    %3167 = vmatpush1.bf16.msra.mxu0 %v2267
    %3168 = vmatprep.subr.bf16.mxu0 0
    %3169 = vmatpush1.bf16.msra.mxu0 %v2266
    %3170 = vmatprep.subr.bf16.mxu0 0
    %3171 = vmatpush2.bf16.msra.mxu0 %v2281
    %3172 = vmatprep.subr.bf16.mxu0 0
    %3173 = vmatpush2.bf16.msra.mxu0 %v2280
    %3174 = vmatprep.subr.bf16.mxu0 0
    %3175 = vmatpush2.bf16.msra.mxu0 %v2279
    %3176 = vmatprep.subr.bf16.mxu0 0
    %3177 = vmatpush2.bf16.msra.mxu0 %v2278
    %3178 = vmatprep.subr.bf16.mxu0 0
    %3179 = vmatpush2.bf16.msra.mxu0 %v2277
    %3180 = vmatprep.subr.bf16.mxu0 0
    %3181 = vmatpush2.bf16.msra.mxu0 %v2276
    %3182 = vmatprep.subr.bf16.mxu0 0
    %3183 = vmatpush2.bf16.msra.mxu0 %v2275
    %3184 = vmatprep.subr.bf16.mxu0 0
    %3185 = vmatpush2.bf16.msra.mxu0 %v2274
    %3186 = vmatprep.mubr.bf16.mxu0 %v844
    %3187 = vmatmul.mubr.bf16.gmra.mxu0 %v842
    %v3188 = vpop.f32.mrf.mxu0
    %v3189 = vadd.f32 %v3149, %v3188
    %v3190 = vpop.f32.mrf.mxu0
    %v3191 = vpop.f32.mrf.mxu0
    %v3192 = vpop.f32.mrf.mxu0
    %3193 = vdwg.mxu0
    %3194 = vmatprep.subr.bf16.mxu0 0
    %3195 = vmatpush1.bf16.msra.mxu0 %v2289
    %3196 = vmatprep.subr.bf16.mxu0 0
    %3197 = vmatpush1.bf16.msra.mxu0 %v2288
    %3198 = vmatprep.subr.bf16.mxu0 0
    %3199 = vmatpush1.bf16.msra.mxu0 %v2287
    %3200 = vmatprep.subr.bf16.mxu0 0
    %3201 = vmatpush1.bf16.msra.mxu0 %v2286
    %3202 = vmatprep.subr.bf16.mxu0 0
    %3203 = vmatpush1.bf16.msra.mxu0 %v2285
    %3204 = vmatprep.subr.bf16.mxu0 0
    %3205 = vmatpush1.bf16.msra.mxu0 %v2284
    %3206 = vmatprep.subr.bf16.mxu0 0
    %3207 = vmatpush1.bf16.msra.mxu0 %v2283
    %3208 = vmatprep.subr.bf16.mxu0 0
    %3209 = vmatpush1.bf16.msra.mxu0 %v2282
    %3210 = vmatprep.subr.bf16.mxu0 0
    %3211 = vmatpush2.bf16.msra.mxu0 %v2297
    %3212 = vmatprep.subr.bf16.mxu0 0
    %3213 = vmatpush2.bf16.msra.mxu0 %v2296
    %3214 = vmatprep.subr.bf16.mxu0 0
    %3215 = vmatpush2.bf16.msra.mxu0 %v2295
    %3216 = vmatprep.subr.bf16.mxu0 0
    %3217 = vmatpush2.bf16.msra.mxu0 %v2294
    %3218 = vmatprep.subr.bf16.mxu0 0
    %3219 = vmatpush2.bf16.msra.mxu0 %v2293
    %3220 = vmatprep.subr.bf16.mxu0 0
    %3221 = vmatpush2.bf16.msra.mxu0 %v2292
    %3222 = vmatprep.subr.bf16.mxu0 0
    %3223 = vmatpush2.bf16.msra.mxu0 %v2291
    %3224 = vmatprep.subr.bf16.mxu0 0
    %3225 = vmatpush2.bf16.msra.mxu0 %v2290
    %3226 = vmatprep.mubr.bf16.mxu0 %v841
    %3227 = vmatmul.mubr.bf16.gmra.mxu0 %v827
    %v3228 = vpop.f32.mrf.mxu0
    %v3229 = vadd.f32 %v3189, %v3228
    %v3230 = vpop.f32.mrf.mxu0
    %v3231 = vpop.f32.mrf.mxu0
    %v3232 = vpop.f32.mrf.mxu0
    %3233 = vdwg.mxu0
    %3234 = vmatprep.subr.bf16.mxu0 0
    %3235 = vmatpush1.bf16.msra.mxu0 %v2305
    %3236 = vmatprep.subr.bf16.mxu0 0
    %3237 = vmatpush1.bf16.msra.mxu0 %v2304
    %3238 = vmatprep.subr.bf16.mxu0 0
    %3239 = vmatpush1.bf16.msra.mxu0 %v2303
    %3240 = vmatprep.subr.bf16.mxu0 0
    %3241 = vmatpush1.bf16.msra.mxu0 %v2302
    %3242 = vmatprep.subr.bf16.mxu0 0
    %3243 = vmatpush1.bf16.msra.mxu0 %v2301
    %3244 = vmatprep.subr.bf16.mxu0 0
    %3245 = vmatpush1.bf16.msra.mxu0 %v2300
    %3246 = vmatprep.subr.bf16.mxu0 0
    %3247 = vmatpush1.bf16.msra.mxu0 %v2299
    %3248 = vmatprep.subr.bf16.mxu0 0
    %3249 = vmatpush1.bf16.msra.mxu0 %v2298
    %3250 = vmatprep.subr.bf16.mxu0 0
    %3251 = vmatpush2.bf16.msra.mxu0 %v2313
    %3252 = vmatprep.subr.bf16.mxu0 0
    %3253 = vmatpush2.bf16.msra.mxu0 %v2312
    %3254 = vmatprep.subr.bf16.mxu0 0
    %3255 = vmatpush2.bf16.msra.mxu0 %v2311
    %3256 = vmatprep.subr.bf16.mxu0 0
    %3257 = vmatpush2.bf16.msra.mxu0 %v2310
    %3258 = vmatprep.subr.bf16.mxu0 0
    %3259 = vmatpush2.bf16.msra.mxu0 %v2309
    %3260 = vmatprep.subr.bf16.mxu0 0
    %3261 = vmatpush2.bf16.msra.mxu0 %v2308
    %3262 = vmatprep.subr.bf16.mxu0 0
    %3263 = vmatpush2.bf16.msra.mxu0 %v2307
    %3264 = vmatprep.subr.bf16.mxu0 0
    %3265 = vmatpush2.bf16.msra.mxu0 %v2306
    %3266 = vmatprep.mubr.bf16.mxu0 %v845
    %3267 = vmatmul.mubr.bf16.gmra.mxu0 %v843
    %v3268 = vpop.f32.mrf.mxu0
    %v3269 = vadd.f32 %v3229, %v3268
    %v3270 = vpop.f32.mrf.mxu0
    %v3271 = vpop.f32.mrf.mxu0
    %v3272 = vpop.f32.mrf.mxu0
    %3273 = vdwg.mxu0
    %3274 = vmatprep.subr.bf16.mxu0 0
    %3275 = vmatpush1.bf16.msra.mxu0 %v2321
    %3276 = vmatprep.subr.bf16.mxu0 0
    %3277 = vmatpush1.bf16.msra.mxu0 %v2320
    %3278 = vmatprep.subr.bf16.mxu0 0
    %3279 = vmatpush1.bf16.msra.mxu0 %v2319
    %3280 = vmatprep.subr.bf16.mxu0 0
    %3281 = vmatpush1.bf16.msra.mxu0 %v2318
    %3282 = vmatprep.subr.bf16.mxu0 0
    %3283 = vmatpush1.bf16.msra.mxu0 %v2317
    %3284 = vmatprep.subr.bf16.mxu0 0
    %3285 = vmatpush1.bf16.msra.mxu0 %v2316
    %3286 = vmatprep.subr.bf16.mxu0 0
    %3287 = vmatpush1.bf16.msra.mxu0 %v2315
    %3288 = vmatprep.subr.bf16.mxu0 0
    %3289 = vmatpush1.bf16.msra.mxu0 %v2314
    %3290 = vmatprep.subr.bf16.mxu0 0
    %3291 = vmatpush2.bf16.msra.mxu0 %v2329
    %3292 = vmatprep.subr.bf16.mxu0 0
    %3293 = vmatpush2.bf16.msra.mxu0 %v2328
    %3294 = vmatprep.subr.bf16.mxu0 0
    %3295 = vmatpush2.bf16.msra.mxu0 %v2327
    %3296 = vmatprep.subr.bf16.mxu0 0
    %3297 = vmatpush2.bf16.msra.mxu0 %v2326
    %3298 = vmatprep.subr.bf16.mxu0 0
    %3299 = vmatpush2.bf16.msra.mxu0 %v2325
    %3300 = vmatprep.subr.bf16.mxu0 0
    %3301 = vmatpush2.bf16.msra.mxu0 %v2324
    %3302 = vmatprep.subr.bf16.mxu0 0
    %3303 = vmatpush2.bf16.msra.mxu0 %v2323
    %3304 = vmatprep.subr.bf16.mxu0 0
    %3305 = vmatpush2.bf16.msra.mxu0 %v2322
    %3306 = vmatprep.mubr.bf16.mxu0 %v867
    %3307 = vmatmul.mubr.bf16.gmra.mxu0 %v860
    %v3308 = vpop.f32.mrf.mxu0
    %v3309 = vadd.f32 %v3269, %v3308
    %v3310 = vpop.f32.mrf.mxu0
    %v3311 = vpop.f32.mrf.mxu0
    %v3312 = vpop.f32.mrf.mxu0
    %3313 = vdwg.mxu0
    %3314 = vmatprep.subr.bf16.mxu0 0
    %3315 = vmatpush1.bf16.msra.mxu0 %v2337
    %3316 = vmatprep.subr.bf16.mxu0 0
    %3317 = vmatpush1.bf16.msra.mxu0 %v2336
    %3318 = vmatprep.subr.bf16.mxu0 0
    %3319 = vmatpush1.bf16.msra.mxu0 %v2335
    %3320 = vmatprep.subr.bf16.mxu0 0
    %3321 = vmatpush1.bf16.msra.mxu0 %v2334
    %3322 = vmatprep.subr.bf16.mxu0 0
    %3323 = vmatpush1.bf16.msra.mxu0 %v2333
    %3324 = vmatprep.subr.bf16.mxu0 0
    %3325 = vmatpush1.bf16.msra.mxu0 %v2332
    %3326 = vmatprep.subr.bf16.mxu0 0
    %3327 = vmatpush1.bf16.msra.mxu0 %v2331
    %3328 = vmatprep.subr.bf16.mxu0 0
    %3329 = vmatpush1.bf16.msra.mxu0 %v2330
    %3330 = vmatprep.subr.bf16.mxu0 0
    %3331 = vmatpush2.bf16.msra.mxu0 %v2345
    %3332 = vmatprep.subr.bf16.mxu0 0
    %3333 = vmatpush2.bf16.msra.mxu0 %v2344
    %3334 = vmatprep.subr.bf16.mxu0 0
    %3335 = vmatpush2.bf16.msra.mxu0 %v2343
    %3336 = vmatprep.subr.bf16.mxu0 0
    %3337 = vmatpush2.bf16.msra.mxu0 %v2342
    %3338 = vmatprep.subr.bf16.mxu0 0
    %3339 = vmatpush2.bf16.msra.mxu0 %v2341
    %3340 = vmatprep.subr.bf16.mxu0 0
    %3341 = vmatpush2.bf16.msra.mxu0 %v2340
    %3342 = vmatprep.subr.bf16.mxu0 0
    %3343 = vmatpush2.bf16.msra.mxu0 %v2339
    %3344 = vmatprep.subr.bf16.mxu0 0
    %3345 = vmatpush2.bf16.msra.mxu0 %v2338
    %3346 = vmatprep.mubr.bf16.mxu0 %v869
    %3347 = vmatmul.mubr.bf16.gmra.mxu0 %v868
    %v3348 = vpop.f32.mrf.mxu0
    %v3349 = vadd.f32 %v3309, %v3348
    %v3350 = vpop.f32.mrf.mxu0
    %v3351 = vpop.f32.mrf.mxu0
    %v3352 = vpop.f32.mrf.mxu0
    %3353 = vdwg.mxu0
    %v3354 = vld [vmem:[%s1] sm:$0xff]
    %v3355 = vld [vmem:[%s1 + $0x8] sm:$0xff]
    %v3356 = vld [vmem:[%s1 + $0x10] sm:$0xff]
    %v3357 = vld [vmem:[%s1 + $0x18] sm:$0xff]
    %v3358 = vld [vmem:[%s1 + $0x20] sm:$0xf]
    %v3359 = vld [vmem:[%s5] sm:$0xf]
    %v3360 = vld [vmem:[%s5 + $0x4] sm:$0xf]
    %v3361 = vld [vmem:[%s5 + $0x8] sm:$0xf]
    %v3362 = vld [vmem:[%s5 + $0xc] sm:$0xf]
    %v3363 = vld [vmem:[%s5 + $0x10] sm:$0xf]
    %v3364 = vld [vmem:[%s5 + $0x14] sm:$0xf]
    %v3365 = vld [vmem:[%s5 + $0x18] sm:$0xf]
    %v3366 = vld [vmem:[%s5 + $0x1c] sm:$0xf]
    %v3367 = vld [vmem:[%s5 + $0x20] sm:$0xf]
    %v3368 = vld [vmem:[%s5 + $0x24] sm:$0xf]
    %v3369 = vld [vmem:[%s5 + $0x28] sm:$0xf]
    %v3370 = vld [vmem:[%s5 + $0x2c] sm:$0xf]
    %v3371 = vld [vmem:[%s5 + $0x30] sm:$0xf]
    %v3372 = vld [vmem:[%s5 + $0x34] sm:$0xf]
    %v3373 = vld [vmem:[%s5 + $0x38] sm:$0xf]
    %v3374 = vld [vmem:[%s5 + $0x3c] sm:$0xf]
    %v3375 = vld [vmem:[%s5 + $0x40] sm:$0xf]
    %v3376 = vld [vmem:[%s5 + $0x44] sm:$0xf]
    %v3377 = vld [vmem:[%s5 + $0x48] sm:$0xf]
    %v3378 = vld [vmem:[%s5 + $0x4c] sm:$0xf]
    %v3379 = vld [vmem:[%s5 + $0x50] sm:$0xf]
    %v3380 = vld [vmem:[%s5 + $0x54] sm:$0xf]
    %v3381 = vld [vmem:[%s5 + $0x58] sm:$0xf]
    %v3382 = vld [vmem:[%s5 + $0x5c] sm:$0xf]
    %v3383 = vld [vmem:[%s5 + $0x60] sm:$0xf]
    %v3384 = vld [vmem:[%s5 + $0x64] sm:$0xf]
    %v3385 = vld [vmem:[%s5 + $0x68] sm:$0xf]
    %v3386 = vld [vmem:[%s5 + $0x6c] sm:$0xf]
    %v3387 = vld [vmem:[%s5 + $0x70] sm:$0xf]
    %v3388 = vld [vmem:[%s5 + $0x74] sm:$0xf]
    %v3389 = vld [vmem:[%s5 + $0x78] sm:$0xf]
    %v3390 = vld [vmem:[%s5 + $0x7c] sm:$0xf]
    %v3391 = vld [vmem:[%s5 + $0x80] sm:$0xf]
    %v3392 = vld [vmem:[%s5 + $0x84] sm:$0xf]
    %v3393 = vld [vmem:[%s5 + $0x88] sm:$0xf]
    %v3394 = vld [vmem:[%s5 + $0x8c] sm:$0xf]
    %v3395 = vld [vmem:[%s5 + $0x90] sm:$0xf]
    %v3396 = vld [vmem:[%s5 + $0x94] sm:$0xf]
    %v3397 = vld [vmem:[%s5 + $0x98] sm:$0xf]
    %v3398 = vld [vmem:[%s5 + $0x9c] sm:$0xf]
    %v3399 = vld [vmem:[%s5 + $0xa0] sm:$0xf]
    %v3400 = vld [vmem:[%s5 + $0xa4] sm:$0xf]
    %v3401 = vld [vmem:[%s5 + $0xa8] sm:$0xf]
    %v3402 = vld [vmem:[%s5 + $0xac] sm:$0xf]
    %v3403 = vld [vmem:[%s5 + $0xb0] sm:$0xf]
    %v3404 = vld [vmem:[%s5 + $0xb4] sm:$0xf]
    %v3405 = vld [vmem:[%s5 + $0xb8] sm:$0xf]
    %v3406 = vld [vmem:[%s5 + $0xbc] sm:$0xf]
    %v3407 = vld [vmem:[%s5 + $0xc0] sm:$0xf]
    %v3408 = vld [vmem:[%s5 + $0xc4] sm:$0xf]
    %v3409 = vld [vmem:[%s5 + $0xc8] sm:$0xf]
    %v3410 = vld [vmem:[%s5 + $0xcc] sm:$0xf]
    %v3411 = vld [vmem:[%s5 + $0xd0] sm:$0xf]
    %v3412 = vld [vmem:[%s5 + $0xd4] sm:$0xf]
    %v3413 = vld [vmem:[%s5 + $0xd8] sm:$0xf]
    %v3414 = vld [vmem:[%s5 + $0xdc] sm:$0xf]
    %v3415 = vld [vmem:[%s5 + $0xe0] sm:$0xf]
    %v3416 = vld [vmem:[%s5 + $0xe4] sm:$0xf]
    %v3417 = vld [vmem:[%s5 + $0xe8] sm:$0xf]
    %v3418 = vld [vmem:[%s5 + $0xec] sm:$0xf]
    %v3419 = vld [vmem:[%s5 + $0xf0] sm:$0xf]
    %v3420 = vld [vmem:[%s5 + $0xf4] sm:$0xf]
    %v3421 = vld [vmem:[%s5 + $0xf8] sm:$0xf]
    %v3422 = vld [vmem:[%s5 + $0xfc] sm:$0xf]
    %v3423 = vld [vmem:[%s5 + $0x100] sm:$0xf]
    %v3424 = vld [vmem:[%s5 + $0x104] sm:$0xf]
    %v3425 = vld [vmem:[%s5 + $0x108] sm:$0xf]
    %v3426 = vld [vmem:[%s5 + $0x10c] sm:$0xf]
    %v3427 = vld [vmem:[%s5 + $0x110] sm:$0xf]
    %v3428 = vld [vmem:[%s5 + $0x114] sm:$0xf]
    %v3429 = vld [vmem:[%s5 + $0x118] sm:$0xf]
    %v3430 = vld [vmem:[%s5 + $0x11c] sm:$0xf]
    %v3431 = vld [vmem:[%s5 + $0x120] sm:$0xf]
    %v3432 = vld [vmem:[%s5 + $0x124] sm:$0xf]
    %v3433 = vld [vmem:[%s5 + $0x128] sm:$0xf]
    %v3434 = vld [vmem:[%s5 + $0x12c] sm:$0xf]
    %v3435 = vld [vmem:[%s5 + $0x130] sm:$0xf]
    %v3436 = vld [vmem:[%s5 + $0x134] sm:$0xf]
    %v3437 = vld [vmem:[%s5 + $0x138] sm:$0xf]
    %v3438 = vld [vmem:[%s5 + $0x13c] sm:$0xf]
    %v3439 = vld [vmem:[%s5 + $0x140] sm:$0xf]
    %v3440 = vld [vmem:[%s5 + $0x144] sm:$0xf]
    %v3441 = vld [vmem:[%s5 + $0x148] sm:$0xf]
    %v3442 = vld [vmem:[%s5 + $0x14c] sm:$0xf]
    %v3443 = vld [vmem:[%s5 + $0x150] sm:$0xf]
    %v3444 = vld [vmem:[%s5 + $0x154] sm:$0xf]
    %v3445 = vld [vmem:[%s5 + $0x158] sm:$0xf]
    %v3446 = vld [vmem:[%s5 + $0x15c] sm:$0xf]
    %v3447 = vld [vmem:[%s5 + $0x160] sm:$0xf]
    %v3448 = vld [vmem:[%s5 + $0x164] sm:$0xf]
    %v3449 = vld [vmem:[%s5 + $0x168] sm:$0xf]
    %v3450 = vld [vmem:[%s5 + $0x16c] sm:$0xf]
    %v3451 = vld [vmem:[%s5 + $0x170] sm:$0xf]
    %v3452 = vld [vmem:[%s5 + $0x174] sm:$0xf]
    %v3453 = vld [vmem:[%s5 + $0x178] sm:$0xf]
    %v3454 = vld [vmem:[%s5 + $0x17c] sm:$0xf]
    %v3455 = vld [vmem:[%s5 + $0x180] sm:$0xf]
    %v3456 = vld [vmem:[%s5 + $0x184] sm:$0xf]
    %v3457 = vld [vmem:[%s5 + $0x188] sm:$0xf]
    %v3458 = vld [vmem:[%s5 + $0x18c] sm:$0xf]
    %v3459 = vld [vmem:[%s5 + $0x190] sm:$0xf]
    %v3460 = vld [vmem:[%s5 + $0x194] sm:$0xf]
    %v3461 = vld [vmem:[%s5 + $0x198] sm:$0xf]
    %v3462 = vld [vmem:[%s5 + $0x19c] sm:$0xf]
    %v3463 = vld [vmem:[%s5 + $0x1a0] sm:$0xf]
    %v3464 = vld [vmem:[%s5 + $0x1a4] sm:$0xf]
    %v3465 = vld [vmem:[%s5 + $0x1a8] sm:$0xf]
    %v3466 = vld [vmem:[%s5 + $0x1ac] sm:$0xf]
    %v3467 = vld [vmem:[%s5 + $0x1b0] sm:$0xf]
    %v3468 = vld [vmem:[%s5 + $0x1b4] sm:$0xf]
    %v3469 = vld [vmem:[%s5 + $0x1b8] sm:$0xf]
    %v3470 = vld [vmem:[%s5 + $0x1bc] sm:$0xf]
    %v3471 = vld [vmem:[%s5 + $0x1c0] sm:$0xf]
    %v3472 = vld [vmem:[%s5 + $0x1c4] sm:$0xf]
    %v3473 = vld [vmem:[%s5 + $0x1c8] sm:$0xf]
    %v3474 = vld [vmem:[%s5 + $0x1cc] sm:$0xf]
    %v3475 = vld [vmem:[%s5 + $0x1d0] sm:$0xf]
    %v3476 = vld [vmem:[%s5 + $0x1d4] sm:$0xf]
    %v3477 = vld [vmem:[%s5 + $0x1d8] sm:$0xf]
    %v3478 = vld [vmem:[%s5 + $0x1dc] sm:$0xf]
    %v3479 = vld [vmem:[%s5 + $0x1e0] sm:$0xf]
    %v3480 = vld [vmem:[%s5 + $0x1e4] sm:$0xf]
    %v3481 = vld [vmem:[%s5 + $0x1e8] sm:$0xf]
    %v3482 = vld [vmem:[%s5 + $0x1ec] sm:$0xf]
    %v3483 = vld [vmem:[%s5 + $0x1f0] sm:$0xf]
    %v3484 = vld [vmem:[%s5 + $0x1f4] sm:$0xf]
    %v3485 = vld [vmem:[%s5 + $0x1f8] sm:$0xf]
    %v3486 = vld [vmem:[%s5 + $0x1fc] sm:$0xf]
    %v3487 = vld [vmem:[%s5 + $0x200] sm:$0xf]
    %v3488 = vld [vmem:[%s5 + $0x204] sm:$0xf]
    %v3489 = vld [vmem:[%s5 + $0x208] sm:$0xf]
    %v3490 = vld [vmem:[%s5 + $0x20c] sm:$0xf]
    %v3491 = vld [vmem:[%s5 + $0x210] sm:$0xf]
    %v3492 = vld [vmem:[%s5 + $0x214] sm:$0xf]
    %v3493 = vld [vmem:[%s5 + $0x218] sm:$0xf]
    %v3494 = vld [vmem:[%s5 + $0x21c] sm:$0xf]
    %v3495 = vld [vmem:[%s5 + $0x220] sm:$0xf]
    %v3496 = vld [vmem:[%s5 + $0x224] sm:$0xf]
    %v3497 = vld [vmem:[%s5 + $0x228] sm:$0xf]
    %v3498 = vld [vmem:[%s5 + $0x22c] sm:$0xf]
    %v3499 = vld [vmem:[%s5 + $0x230] sm:$0xf]
    %v3500 = vld [vmem:[%s5 + $0x234] sm:$0xf]
    %v3501 = vld [vmem:[%s5 + $0x238] sm:$0xf]
    %v3502 = vld [vmem:[%s5 + $0x23c] sm:$0xf]
    %v3503 = vld [vmem:[%s5 + $0x240] sm:$0xf]
    %v3504 = vld [vmem:[%s5 + $0x244] sm:$0xf]
    %v3505 = vld [vmem:[%s5 + $0x248] sm:$0xf]
    %v3506 = vld [vmem:[%s5 + $0x24c] sm:$0xf]
    %v3507 = vld [vmem:[%s5 + $0x250] sm:$0xf]
    %v3508 = vld [vmem:[%s5 + $0x254] sm:$0xf]
    %v3509 = vld [vmem:[%s5 + $0x258] sm:$0xf]
    %v3510 = vld [vmem:[%s5 + $0x25c] sm:$0xf]
    %v3511 = vld [vmem:[%s5 + $0x260] sm:$0xf]
    %v3512 = vld [vmem:[%s5 + $0x264] sm:$0xf]
    %v3513 = vld [vmem:[%s5 + $0x268] sm:$0xf]
    %v3514 = vld [vmem:[%s5 + $0x26c] sm:$0xf]
    %v3515 = vld [vmem:[%s5 + $0x270] sm:$0xf]
    %v3516 = vld [vmem:[%s5 + $0x274] sm:$0xf]
    %v3517 = vld [vmem:[%s5 + $0x278] sm:$0xf]
    %v3518 = vld [vmem:[%s5 + $0x27c] sm:$0xf]
    %v3519 = vld [vmem:[%s5 + $0x280] sm:$0xf]
    %v3520 = vld [vmem:[%s5 + $0x284] sm:$0xf]
    %v3521 = vld [vmem:[%s5 + $0x288] sm:$0xf]
    %v3522 = vld [vmem:[%s5 + $0x28c] sm:$0xf]
    %v3523 = vld [vmem:[%s5 + $0x290] sm:$0xf]
    %v3524 = vld [vmem:[%s5 + $0x294] sm:$0xf]
    %v3525 = vld [vmem:[%s5 + $0x298] sm:$0xf]
    %v3526 = vld [vmem:[%s5 + $0x29c] sm:$0xf]
    %v3527 = vld [vmem:[%s5 + $0x2a0] sm:$0xf]
    %v3528 = vld [vmem:[%s5 + $0x2a4] sm:$0xf]
    %v3529 = vld [vmem:[%s5 + $0x2a8] sm:$0xf]
    %v3530 = vld [vmem:[%s5 + $0x2ac] sm:$0xf]
    %v3531 = vld [vmem:[%s5 + $0x2b0] sm:$0xf]
    %v3532 = vld [vmem:[%s5 + $0x2b4] sm:$0xf]
    %v3533 = vld [vmem:[%s5 + $0x2b8] sm:$0xf]
    %v3534 = vld [vmem:[%s5 + $0x2bc] sm:$0xf]
    %v3535 = vld [vmem:[%s5 + $0x2c0] sm:$0xf]
    %v3536 = vld [vmem:[%s5 + $0x2c4] sm:$0xf]
    %v3537 = vld [vmem:[%s5 + $0x2c8] sm:$0xf]
    %v3538 = vld [vmem:[%s5 + $0x2cc] sm:$0xf]
    %v3539 = vld [vmem:[%s5 + $0x2d0] sm:$0xf]
    %v3540 = vld [vmem:[%s5 + $0x2d4] sm:$0xf]
    %v3541 = vld [vmem:[%s5 + $0x2d8] sm:$0xf]
    %v3542 = vld [vmem:[%s5 + $0x2dc] sm:$0xf]
    %v3543 = vld [vmem:[%s5 + $0x2e0] sm:$0xf]
    %v3544 = vld [vmem:[%s5 + $0x2e4] sm:$0xf]
    %v3545 = vld [vmem:[%s5 + $0x2e8] sm:$0xf]
    %v3546 = vld [vmem:[%s5 + $0x2ec] sm:$0xf]
    %v3547 = vld [vmem:[%s5 + $0x2f0] sm:$0xf]
    %v3548 = vld [vmem:[%s5 + $0x2f4] sm:$0xf]
    %v3549 = vld [vmem:[%s5 + $0x2f8] sm:$0xf]
    %v3550 = vld [vmem:[%s5 + $0x2fc] sm:$0xf]
    %v3551 = vld [vmem:[%s5 + $0x300] sm:$0xf]
    %v3552 = vld [vmem:[%s5 + $0x304] sm:$0xf]
    %v3553 = vld [vmem:[%s5 + $0x308] sm:$0xf]
    %v3554 = vld [vmem:[%s5 + $0x30c] sm:$0xf]
    %v3555 = vld [vmem:[%s5 + $0x310] sm:$0xf]
    %v3556 = vld [vmem:[%s5 + $0x314] sm:$0xf]
    %v3557 = vld [vmem:[%s5 + $0x318] sm:$0xf]
    %v3558 = vld [vmem:[%s5 + $0x31c] sm:$0xf]
    %v3559 = vld [vmem:[%s5 + $0x320] sm:$0xf]
    %v3560 = vld [vmem:[%s5 + $0x324] sm:$0xf]
    %v3561 = vld [vmem:[%s5 + $0x328] sm:$0xf]
    %v3562 = vld [vmem:[%s5 + $0x32c] sm:$0xf]
    %v3563 = vld [vmem:[%s5 + $0x330] sm:$0xf]
    %v3564 = vld [vmem:[%s5 + $0x334] sm:$0xf]
    %v3565 = vld [vmem:[%s5 + $0x338] sm:$0xf]
    %v3566 = vld [vmem:[%s5 + $0x33c] sm:$0xf]
    %v3567 = vld [vmem:[%s5 + $0x340] sm:$0xf]
    %v3568 = vld [vmem:[%s5 + $0x344] sm:$0xf]
    %v3569 = vld [vmem:[%s5 + $0x348] sm:$0xf]
    %v3570 = vld [vmem:[%s5 + $0x34c] sm:$0xf]
    %v3571 = vld [vmem:[%s5 + $0x350] sm:$0xf]
    %v3572 = vld [vmem:[%s5 + $0x354] sm:$0xf]
    %v3573 = vld [vmem:[%s5 + $0x358] sm:$0xf]
    %v3574 = vld [vmem:[%s5 + $0x35c] sm:$0xf]
    %v3575 = vld [vmem:[%s5 + $0x360] sm:$0xf]
    %v3576 = vld [vmem:[%s5 + $0x364] sm:$0xf]
    %v3577 = vld [vmem:[%s5 + $0x368] sm:$0xf]
    %v3578 = vld [vmem:[%s5 + $0x36c] sm:$0xf]
    %v3579 = vld [vmem:[%s5 + $0x370] sm:$0xf]
    %v3580 = vld [vmem:[%s5 + $0x374] sm:$0xf]
    %v3581 = vld [vmem:[%s5 + $0x378] sm:$0xf]
    %v3582 = vld [vmem:[%s5 + $0x37c] sm:$0xf]
    %v3583 = vld [vmem:[%s5 + $0x380] sm:$0xf]
    %v3584 = vld [vmem:[%s5 + $0x384] sm:$0xf]
    %v3585 = vld [vmem:[%s5 + $0x388] sm:$0xf]
    %v3586 = vld [vmem:[%s5 + $0x38c] sm:$0xf]
    %v3587 = vld [vmem:[%s5 + $0x390] sm:$0xf]
    %v3588 = vld [vmem:[%s5 + $0x394] sm:$0xf]
    %v3589 = vld [vmem:[%s5 + $0x398] sm:$0xf]
    %v3590 = vld [vmem:[%s5 + $0x39c] sm:$0xf]
    %v3591 = vld [vmem:[%s5 + $0x3a0] sm:$0xf]
    %v3592 = vld [vmem:[%s5 + $0x3a4] sm:$0xf]
    %v3593 = vld [vmem:[%s5 + $0x3a8] sm:$0xf]
    %v3594 = vld [vmem:[%s5 + $0x3ac] sm:$0xf]
    %v3595 = vld [vmem:[%s5 + $0x3b0] sm:$0xf]
    %v3596 = vld [vmem:[%s5 + $0x3b4] sm:$0xf]
    %v3597 = vld [vmem:[%s5 + $0x3b8] sm:$0xf]
    %v3598 = vld [vmem:[%s5 + $0x3bc] sm:$0xf]
    %v3599 = vld [vmem:[%s5 + $0x3c0] sm:$0xf]
    %v3600 = vld [vmem:[%s5 + $0x3c4] sm:$0xf]
    %v3601 = vld [vmem:[%s5 + $0x3c8] sm:$0xf]
    %v3602 = vld [vmem:[%s5 + $0x3cc] sm:$0xf]
    %v3603 = vld [vmem:[%s5 + $0x3d0] sm:$0xf]
    %v3604 = vld [vmem:[%s5 + $0x3d4] sm:$0xf]
    %v3605 = vld [vmem:[%s5 + $0x3d8] sm:$0xf]
    %v3606 = vld [vmem:[%s5 + $0x3dc] sm:$0xf]
    %v3607 = vld [vmem:[%s5 + $0x3e0] sm:$0xf]
    %v3608 = vld [vmem:[%s5 + $0x3e4] sm:$0xf]
    %v3609 = vld [vmem:[%s5 + $0x3e8] sm:$0xf]
    %v3610 = vld [vmem:[%s5 + $0x3ec] sm:$0xf]
    %v3611 = vld [vmem:[%s5 + $0x3f0] sm:$0xf]
    %v3612 = vld [vmem:[%s5 + $0x3f4] sm:$0xf]
    %v3613 = vld [vmem:[%s5 + $0x3f8] sm:$0xf]
    %v3614 = vld [vmem:[%s5 + $0x3fc] sm:$0xf]
    %v3615 = vld [vmem:[%s5 + $0x400] sm:$0xf]
    %v3616 = vld [vmem:[%s5 + $0x404] sm:$0xf]
    %v3617 = vld [vmem:[%s5 + $0x408] sm:$0xf]
    %v3618 = vld [vmem:[%s5 + $0x40c] sm:$0xf]
    %v3619 = vld [vmem:[%s5 + $0x410] sm:$0xf]
    %v3620 = vld [vmem:[%s5 + $0x414] sm:$0xf]
    %v3621 = vld [vmem:[%s5 + $0x418] sm:$0xf]
    %v3622 = vld [vmem:[%s5 + $0x41c] sm:$0xf]
    %v3623 = vld [vmem:[%s5 + $0x420] sm:$0xf]
    %v3624 = vld [vmem:[%s5 + $0x424] sm:$0xf]
    %v3625 = vld [vmem:[%s5 + $0x428] sm:$0xf]
    %v3626 = vld [vmem:[%s5 + $0x42c] sm:$0xf]
    %v3627 = vld [vmem:[%s5 + $0x430] sm:$0xf]
    %v3628 = vld [vmem:[%s5 + $0x434] sm:$0xf]
    %v3629 = vld [vmem:[%s5 + $0x438] sm:$0xf]
    %v3630 = vld [vmem:[%s5 + $0x43c] sm:$0xf]
    %v3631 = vld [vmem:[%s5 + $0x440] sm:$0xf]
    %v3632 = vld [vmem:[%s5 + $0x444] sm:$0xf]
    %v3633 = vld [vmem:[%s5 + $0x448] sm:$0xf]
    %v3634 = vld [vmem:[%s5 + $0x44c] sm:$0xf]
    %v3635 = vld [vmem:[%s5 + $0x450] sm:$0xf]
    %v3636 = vld [vmem:[%s5 + $0x454] sm:$0xf]
    %v3637 = vld [vmem:[%s5 + $0x458] sm:$0xf]
    %v3638 = vld [vmem:[%s5 + $0x45c] sm:$0xf]
    %v3639 = vld [vmem:[%s5 + $0x460] sm:$0xf]
    %v3640 = vld [vmem:[%s5 + $0x464] sm:$0xf]
    %v3641 = vld [vmem:[%s5 + $0x468] sm:$0xf]
    %v3642 = vld [vmem:[%s5 + $0x46c] sm:$0xf]
    %v3643 = vld [vmem:[%s5 + $0x470] sm:$0xf]
    %v3644 = vld [vmem:[%s5 + $0x474] sm:$0xf]
    %v3645 = vld [vmem:[%s5 + $0x478] sm:$0xf]
    %v3646 = vld [vmem:[%s5 + $0x47c] sm:$0xf]
    %v3647 = vld [vmem:[%s5 + $0x480] sm:$0xf]
    %v3648 = vld [vmem:[%s5 + $0x484] sm:$0xf]
    %v3649 = vld [vmem:[%s5 + $0x488] sm:$0xf]
    %v3650 = vld [vmem:[%s5 + $0x48c] sm:$0xf]
    %v3651 = vld [vmem:[%s5 + $0x490] sm:$0xf]
    %v3652 = vld [vmem:[%s5 + $0x494] sm:$0xf]
    %v3653 = vld [vmem:[%s5 + $0x498] sm:$0xf]
    %v3654 = vld [vmem:[%s5 + $0x49c] sm:$0xf]
    %v3655 = vld [vmem:[%s5 + $0x4a0] sm:$0xf]
    %v3656 = vld [vmem:[%s5 + $0x4a4] sm:$0xf]
    %v3657 = vld [vmem:[%s5 + $0x4a8] sm:$0xf]
    %v3658 = vld [vmem:[%s5 + $0x4ac] sm:$0xf]
    %v3659 = vld [vmem:[%s5 + $0x4b0] sm:$0xf]
    %v3660 = vld [vmem:[%s5 + $0x4b4] sm:$0xf]
    %v3661 = vld [vmem:[%s5 + $0x4b8] sm:$0xf]
    %v3662 = vld [vmem:[%s5 + $0x4bc] sm:$0xf]
    %v3663 = vld [vmem:[%s5 + $0x4c0] sm:$0xf]
    %v3664 = vld [vmem:[%s5 + $0x4c4] sm:$0xf]
    %v3665 = vld [vmem:[%s5 + $0x4c8] sm:$0xf]
    %v3666 = vld [vmem:[%s5 + $0x4cc] sm:$0xf]
    %v3667 = vld [vmem:[%s5 + $0x4d0] sm:$0xf]
    %v3668 = vld [vmem:[%s5 + $0x4d4] sm:$0xf]
    %v3669 = vld [vmem:[%s5 + $0x4d8] sm:$0xf]
    %v3670 = vld [vmem:[%s5 + $0x4dc] sm:$0xf]
    %v3671 = vld [vmem:[%s5 + $0x4e0] sm:$0xf]
    %v3672 = vld [vmem:[%s5 + $0x4e4] sm:$0xf]
    %v3673 = vld [vmem:[%s5 + $0x4e8] sm:$0xf]
    %v3674 = vld [vmem:[%s5 + $0x4ec] sm:$0xf]
    %v3675 = vld [vmem:[%s5 + $0x4f0] sm:$0xf]
    %v3676 = vld [vmem:[%s5 + $0x4f4] sm:$0xf]
    %v3677 = vld [vmem:[%s5 + $0x4f8] sm:$0xf]
    %v3678 = vld [vmem:[%s5 + $0x4fc] sm:$0xf]
    %v3679 = vld [vmem:[%s5 + $0x500] sm:$0xf]
    %v3680 = vld [vmem:[%s5 + $0x504] sm:$0xf]
    %v3681 = vld [vmem:[%s5 + $0x508] sm:$0xf]
    %v3682 = vld [vmem:[%s5 + $0x50c] sm:$0xf]
    %v3683 = vld [vmem:[%s5 + $0x510] sm:$0xf]
    %v3684 = vld [vmem:[%s5 + $0x514] sm:$0xf]
    %v3685 = vld [vmem:[%s5 + $0x518] sm:$0xf]
    %v3686 = vld [vmem:[%s5 + $0x51c] sm:$0xf]
    %v3687 = vld [vmem:[%s5 + $0x520] sm:$0xf]
    %v3688 = vld [vmem:[%s5 + $0x524] sm:$0xf]
    %v3689 = vld [vmem:[%s5 + $0x528] sm:$0xf]
    %v3690 = vld [vmem:[%s5 + $0x52c] sm:$0xf]
    %v3691 = vld [vmem:[%s5 + $0x530] sm:$0xf]
    %v3692 = vld [vmem:[%s5 + $0x534] sm:$0xf]
    %v3693 = vld [vmem:[%s5 + $0x538] sm:$0xf]
    %v3694 = vld [vmem:[%s5 + $0x53c] sm:$0xf]
    %v3695 = vld [vmem:[%s5 + $0x540] sm:$0xf]
    %v3696 = vld [vmem:[%s5 + $0x544] sm:$0xf]
    %v3697 = vld [vmem:[%s5 + $0x548] sm:$0xf]
    %v3698 = vld [vmem:[%s5 + $0x54c] sm:$0xf]
    %v3699 = vld [vmem:[%s5 + $0x550] sm:$0xf]
    %v3700 = vld [vmem:[%s5 + $0x554] sm:$0xf]
    %v3701 = vld [vmem:[%s5 + $0x558] sm:$0xf]
    %v3702 = vld [vmem:[%s5 + $0x55c] sm:$0xf]
    %v3703 = vld [vmem:[%s5 + $0x560] sm:$0xf]
    %v3704 = vld [vmem:[%s5 + $0x564] sm:$0xf]
    %v3705 = vld [vmem:[%s5 + $0x568] sm:$0xf]
    %v3706 = vld [vmem:[%s5 + $0x56c] sm:$0xf]
    %v3707 = vld [vmem:[%s5 + $0x570] sm:$0xf]
    %v3708 = vld [vmem:[%s5 + $0x574] sm:$0xf]
    %v3709 = vld [vmem:[%s5 + $0x578] sm:$0xf]
    %v3710 = vld [vmem:[%s5 + $0x57c] sm:$0xf]
    %v3711 = vld [vmem:[%s5 + $0x580] sm:$0xf]
    %v3712 = vld [vmem:[%s5 + $0x584] sm:$0xf]
    %v3713 = vld [vmem:[%s5 + $0x588] sm:$0xf]
    %v3714 = vld [vmem:[%s5 + $0x58c] sm:$0xf]
    %v3715 = vld [vmem:[%s5 + $0x590] sm:$0xf]
    %v3716 = vld [vmem:[%s5 + $0x594] sm:$0xf]
    %v3717 = vld [vmem:[%s5 + $0x598] sm:$0xf]
    %v3718 = vld [vmem:[%s5 + $0x59c] sm:$0xf]
    %v3719 = vld [vmem:[%s5 + $0x5a0] sm:$0xf]
    %v3720 = vld [vmem:[%s5 + $0x5a4] sm:$0xf]
    %v3721 = vld [vmem:[%s5 + $0x5a8] sm:$0xf]
    %v3722 = vld [vmem:[%s5 + $0x5ac] sm:$0xf]
    %v3723 = vld [vmem:[%s5 + $0x5b0] sm:$0xf]
    %v3724 = vld [vmem:[%s5 + $0x5b4] sm:$0xf]
    %v3725 = vld [vmem:[%s5 + $0x5b8] sm:$0xf]
    %v3726 = vld [vmem:[%s5 + $0x5bc] sm:$0xf]
    %v3727 = vld [vmem:[%s5 + $0x5c0] sm:$0xf]
    %v3728 = vld [vmem:[%s5 + $0x5c4] sm:$0xf]
    %v3729 = vld [vmem:[%s5 + $0x5c8] sm:$0xf]
    %v3730 = vld [vmem:[%s5 + $0x5cc] sm:$0xf]
    %v3731 = vld [vmem:[%s5 + $0x5d0] sm:$0xf]
    %v3732 = vld [vmem:[%s5 + $0x5d4] sm:$0xf]
    %v3733 = vld [vmem:[%s5 + $0x5d8] sm:$0xf]
    %v3734 = vld [vmem:[%s5 + $0x5dc] sm:$0xf]
    %v3735 = vld [vmem:[%s5 + $0x5e0] sm:$0xf]
    %v3736 = vld [vmem:[%s5 + $0x5e4] sm:$0xf]
    %v3737 = vld [vmem:[%s5 + $0x5e8] sm:$0xf]
    %v3738 = vld [vmem:[%s5 + $0x5ec] sm:$0xf]
    %v3739 = vld [vmem:[%s5 + $0x5f0] sm:$0xf]
    %v3740 = vld [vmem:[%s5 + $0x5f4] sm:$0xf]
    %v3741 = vld [vmem:[%s5 + $0x5f8] sm:$0xf]
    %v3742 = vld [vmem:[%s5 + $0x5fc] sm:$0xf]
    %v3743 = vld [vmem:[%s5 + $0x600] sm:$0xf]
    %v3744 = vld [vmem:[%s5 + $0x604] sm:$0xf]
    %v3745 = vld [vmem:[%s5 + $0x608] sm:$0xf]
    %v3746 = vld [vmem:[%s5 + $0x60c] sm:$0xf]
    %v3747 = vld [vmem:[%s5 + $0x610] sm:$0xf]
    %v3748 = vld [vmem:[%s5 + $0x614] sm:$0xf]
    %v3749 = vld [vmem:[%s5 + $0x618] sm:$0xf]
    %v3750 = vld [vmem:[%s5 + $0x61c] sm:$0xf]
    %v3751 = vld [vmem:[%s5 + $0x620] sm:$0xf]
    %v3752 = vld [vmem:[%s5 + $0x624] sm:$0xf]
    %v3753 = vld [vmem:[%s5 + $0x628] sm:$0xf]
    %v3754 = vld [vmem:[%s5 + $0x62c] sm:$0xf]
    %v3755 = vld [vmem:[%s5 + $0x630] sm:$0xf]
    %v3756 = vld [vmem:[%s5 + $0x634] sm:$0xf]
    %v3757 = vld [vmem:[%s5 + $0x638] sm:$0xf]
    %v3758 = vld [vmem:[%s5 + $0x63c] sm:$0xf]
    %v3759 = vld [vmem:[%s5 + $0x640] sm:$0xf]
    %v3760 = vld [vmem:[%s5 + $0x644] sm:$0xf]
    %v3761 = vld [vmem:[%s5 + $0x648] sm:$0xf]
    %v3762 = vld [vmem:[%s5 + $0x64c] sm:$0xf]
    %v3763 = vld [vmem:[%s5 + $0x650] sm:$0xf]
    %v3764 = vld [vmem:[%s5 + $0x654] sm:$0xf]
    %v3765 = vld [vmem:[%s5 + $0x658] sm:$0xf]
    %v3766 = vld [vmem:[%s5 + $0x65c] sm:$0xf]
    %v3767 = vld [vmem:[%s5 + $0x660] sm:$0xf]
    %v3768 = vld [vmem:[%s5 + $0x664] sm:$0xf]
    %v3769 = vld [vmem:[%s5 + $0x668] sm:$0xf]
    %v3770 = vld [vmem:[%s5 + $0x66c] sm:$0xf]
    %v3771 = vld [vmem:[%s5 + $0x670] sm:$0xf]
    %v3772 = vld [vmem:[%s5 + $0x674] sm:$0xf]
    %v3773 = vld [vmem:[%s5 + $0x678] sm:$0xf]
    %v3774 = vld [vmem:[%s5 + $0x67c] sm:$0xf]
    %v3775 = vld [vmem:[%s5 + $0x680] sm:$0xf]
    %v3776 = vld [vmem:[%s5 + $0x684] sm:$0xf]
    %v3777 = vld [vmem:[%s5 + $0x688] sm:$0xf]
    %v3778 = vld [vmem:[%s5 + $0x68c] sm:$0xf]
    %v3779 = vld [vmem:[%s5 + $0x690] sm:$0xf]
    %v3780 = vld [vmem:[%s5 + $0x694] sm:$0xf]
    %v3781 = vld [vmem:[%s5 + $0x698] sm:$0xf]
    %v3782 = vld [vmem:[%s5 + $0x69c] sm:$0xf]
    %v3783 = vld [vmem:[%s5 + $0x6a0] sm:$0xf]
    %v3784 = vld [vmem:[%s5 + $0x6a4] sm:$0xf]
    %v3785 = vld [vmem:[%s5 + $0x6a8] sm:$0xf]
    %v3786 = vld [vmem:[%s5 + $0x6ac] sm:$0xf]
    %v3787 = vld [vmem:[%s5 + $0x6b0] sm:$0xf]
    %v3788 = vld [vmem:[%s5 + $0x6b4] sm:$0xf]
    %v3789 = vld [vmem:[%s5 + $0x6b8] sm:$0xf]
    %v3790 = vld [vmem:[%s5 + $0x6bc] sm:$0xf]
    %v3791 = vld [vmem:[%s5 + $0x6c0] sm:$0xf]
    %v3792 = vld [vmem:[%s5 + $0x6c4] sm:$0xf]
    %v3793 = vld [vmem:[%s5 + $0x6c8] sm:$0xf]
    %v3794 = vld [vmem:[%s5 + $0x6cc] sm:$0xf]
    %v3795 = vld [vmem:[%s5 + $0x6d0] sm:$0xf]
    %v3796 = vld [vmem:[%s5 + $0x6d4] sm:$0xf]
    %v3797 = vld [vmem:[%s5 + $0x6d8] sm:$0xf]
    %v3798 = vld [vmem:[%s5 + $0x6dc] sm:$0xf]
    %v3799 = vld [vmem:[%s5 + $0x6e0] sm:$0xf]
    %v3800 = vld [vmem:[%s5 + $0x6e4] sm:$0xf]
    %v3801 = vld [vmem:[%s5 + $0x6e8] sm:$0xf]
    %v3802 = vld [vmem:[%s5 + $0x6ec] sm:$0xf]
    %v3803 = vld [vmem:[%s5 + $0x6f0] sm:$0xf]
    %v3804 = vld [vmem:[%s5 + $0x6f4] sm:$0xf]
    %v3805 = vld [vmem:[%s5 + $0x6f8] sm:$0xf]
    %v3806 = vld [vmem:[%s5 + $0x6fc] sm:$0xf]
    %v3807 = vld [vmem:[%s5 + $0x700] sm:$0xf]
    %v3808 = vld [vmem:[%s5 + $0x704] sm:$0xf]
    %v3809 = vld [vmem:[%s5 + $0x708] sm:$0xf]
    %v3810 = vld [vmem:[%s5 + $0x70c] sm:$0xf]
    %v3811 = vld [vmem:[%s5 + $0x710] sm:$0xf]
    %v3812 = vld [vmem:[%s5 + $0x714] sm:$0xf]
    %v3813 = vld [vmem:[%s5 + $0x718] sm:$0xf]
    %v3814 = vld [vmem:[%s5 + $0x71c] sm:$0xf]
    %v3815 = vld [vmem:[%s5 + $0x720] sm:$0xf]
    %v3816 = vld [vmem:[%s5 + $0x724] sm:$0xf]
    %v3817 = vld [vmem:[%s5 + $0x728] sm:$0xf]
    %v3818 = vld [vmem:[%s5 + $0x72c] sm:$0xf]
    %v3819 = vld [vmem:[%s5 + $0x730] sm:$0xf]
    %v3820 = vld [vmem:[%s5 + $0x734] sm:$0xf]
    %v3821 = vld [vmem:[%s5 + $0x738] sm:$0xf]
    %v3822 = vld [vmem:[%s5 + $0x73c] sm:$0xf]
    %v3823 = vld [vmem:[%s5 + $0x740] sm:$0xf]
    %v3824 = vld [vmem:[%s5 + $0x744] sm:$0xf]
    %v3825 = vld [vmem:[%s5 + $0x748] sm:$0xf]
    %v3826 = vld [vmem:[%s5 + $0x74c] sm:$0xf]
    %v3827 = vld [vmem:[%s5 + $0x750] sm:$0xf]
    %v3828 = vld [vmem:[%s5 + $0x754] sm:$0xf]
    %v3829 = vld [vmem:[%s5 + $0x758] sm:$0xf]
    %v3830 = vld [vmem:[%s5 + $0x75c] sm:$0xf]
    %v3831 = vld [vmem:[%s5 + $0x760] sm:$0xf]
    %v3832 = vld [vmem:[%s5 + $0x764] sm:$0xf]
    %v3833 = vld [vmem:[%s5 + $0x768] sm:$0xf]
    %v3834 = vld [vmem:[%s5 + $0x76c] sm:$0xf]
    %v3835 = vld [vmem:[%s5 + $0x770] sm:$0xf]
    %v3836 = vld [vmem:[%s5 + $0x774] sm:$0xf]
    %v3837 = vld [vmem:[%s5 + $0x778] sm:$0xf]
    %v3838 = vld [vmem:[%s5 + $0x77c] sm:$0xf]
    %v3839 = vld [vmem:[%s5 + $0x780] sm:$0xf]
    %v3840 = vld [vmem:[%s5 + $0x784] sm:$0xf]
    %v3841 = vld [vmem:[%s5 + $0x788] sm:$0xf]
    %v3842 = vld [vmem:[%s5 + $0x78c] sm:$0xf]
    %v3843 = vld [vmem:[%s5 + $0x790] sm:$0xf]
    %v3844 = vld [vmem:[%s5 + $0x794] sm:$0xf]
    %v3845 = vld [vmem:[%s5 + $0x798] sm:$0xf]
    %v3846 = vld [vmem:[%s5 + $0x79c] sm:$0xf]
    %v3847 = vld [vmem:[%s5 + $0x7a0] sm:$0xf]
    %v3848 = vld [vmem:[%s5 + $0x7a4] sm:$0xf]
    %v3849 = vld [vmem:[%s5 + $0x7a8] sm:$0xf]
    %v3850 = vld [vmem:[%s5 + $0x7ac] sm:$0xf]
    %v3851 = vld [vmem:[%s5 + $0x7b0] sm:$0xf]
    %v3852 = vld [vmem:[%s5 + $0x7b4] sm:$0xf]
    %v3853 = vld [vmem:[%s5 + $0x7b8] sm:$0xf]
    %v3854 = vld [vmem:[%s5 + $0x7bc] sm:$0xf]
    %v3855 = vld [vmem:[%s5 + $0x7c0] sm:$0xf]
    %v3856 = vld [vmem:[%s5 + $0x7c4] sm:$0xf]
    %v3857 = vld [vmem:[%s5 + $0x7c8] sm:$0xf]
    %v3858 = vld [vmem:[%s5 + $0x7cc] sm:$0xf]
    %v3859 = vld [vmem:[%s5 + $0x7d0] sm:$0xf]
    %v3860 = vld [vmem:[%s5 + $0x7d4] sm:$0xf]
    %v3861 = vld [vmem:[%s5 + $0x7d8] sm:$0xf]
    %v3862 = vld [vmem:[%s5 + $0x7dc] sm:$0xf]
    %v3863 = vld [vmem:[%s5 + $0x7e0] sm:$0xf]
    %v3864 = vld [vmem:[%s5 + $0x7e4] sm:$0xf]
    %v3865 = vld [vmem:[%s5 + $0x7e8] sm:$0xf]
    %v3866 = vld [vmem:[%s5 + $0x7ec] sm:$0xf]
    %v3867 = vld [vmem:[%s5 + $0x7f0] sm:$0xf]
    %v3868 = vld [vmem:[%s5 + $0x7f4] sm:$0xf]
    %v3869 = vld [vmem:[%s5 + $0x7f8] sm:$0xf]
    %v3870 = vld [vmem:[%s5 + $0x7fc] sm:$0xf]
    %v3871 = vld [vmem:[%s5 + $0x800] sm:$0xf]
    %v3872 = vld [vmem:[%s5 + $0x804] sm:$0xf]
    %v3873 = vld [vmem:[%s5 + $0x808] sm:$0xf]
    %v3874 = vld [vmem:[%s5 + $0x80c] sm:$0xf]
    %v3875 = vld [vmem:[%s5 + $0x810] sm:$0xf]
    %v3876 = vld [vmem:[%s5 + $0x814] sm:$0xf]
    %v3877 = vld [vmem:[%s5 + $0x818] sm:$0xf]
    %v3878 = vld [vmem:[%s5 + $0x81c] sm:$0xf]
    %v3879 = vld [vmem:[%s5 + $0x820] sm:$0xf]
    %v3880 = vld [vmem:[%s5 + $0x824] sm:$0xf]
    %v3881 = vld [vmem:[%s5 + $0x828] sm:$0xf]
    %v3882 = vld [vmem:[%s5 + $0x82c] sm:$0xf]
    %v3883 = vld [vmem:[%s5 + $0x830] sm:$0xf]
    %v3884 = vld [vmem:[%s5 + $0x834] sm:$0xf]
    %v3885 = vld [vmem:[%s5 + $0x838] sm:$0xf]
    %v3886 = vld [vmem:[%s5 + $0x83c] sm:$0xf]
    %v3887 = vld [vmem:[%s5 + $0x840] sm:$0xf]
    %v3888 = vld [vmem:[%s5 + $0x844] sm:$0xf]
    %v3889 = vld [vmem:[%s5 + $0x848] sm:$0xf]
    %v3890 = vld [vmem:[%s5 + $0x84c] sm:$0xf]
    %v3891 = vld [vmem:[%s5 + $0x850] sm:$0xf]
    %v3892 = vld [vmem:[%s5 + $0x854] sm:$0xf]
    %v3893 = vld [vmem:[%s5 + $0x858] sm:$0xf]
    %v3894 = vld [vmem:[%s5 + $0x85c] sm:$0xf]
    %v3895 = vld [vmem:[%s5 + $0x860] sm:$0xf]
    %v3896 = vld [vmem:[%s5 + $0x864] sm:$0xf]
    %v3897 = vld [vmem:[%s5 + $0x868] sm:$0xf]
    %v3898 = vld [vmem:[%s5 + $0x86c] sm:$0xf]
    %v3899 = vld [vmem:[%s5 + $0x870] sm:$0xf]
    %v3900 = vld [vmem:[%s5 + $0x874] sm:$0xf]
    %v3901 = vld [vmem:[%s5 + $0x878] sm:$0xf]
    %v3902 = vld [vmem:[%s5 + $0x87c] sm:$0xf]
    %v3903 = vld [vmem:[%s5 + $0x880] sm:$0xf]
    %v3904 = vld [vmem:[%s5 + $0x884] sm:$0xf]
    %v3905 = vld [vmem:[%s5 + $0x888] sm:$0xf]
    %v3906 = vld [vmem:[%s5 + $0x88c] sm:$0xf]
    %v3907 = vld [vmem:[%s5 + $0x890] sm:$0xf]
    %v3908 = vld [vmem:[%s5 + $0x894] sm:$0xf]
    %v3909 = vld [vmem:[%s5 + $0x898] sm:$0xf]
    %v3910 = vld [vmem:[%s5 + $0x89c] sm:$0xf]
    %v3911 = vld [vmem:[%s5 + $0x8a0] sm:$0xf]
    %v3912 = vld [vmem:[%s5 + $0x8a4] sm:$0xf]
    %v3913 = vld [vmem:[%s5 + $0x8a8] sm:$0xf]
    %v3914 = vld [vmem:[%s5 + $0x8ac] sm:$0xf]
    %v3915 = vld [vmem:[%s5 + $0x8b0] sm:$0xf]
    %v3916 = vld [vmem:[%s5 + $0x8b4] sm:$0xf]
    %v3917 = vld [vmem:[%s5 + $0x8b8] sm:$0xf]
    %v3918 = vld [vmem:[%s5 + $0x8bc] sm:$0xf]
    %v3919 = vld [vmem:[%s5 + $0x8c0] sm:$0xf]
    %v3920 = vld [vmem:[%s5 + $0x8c4] sm:$0xf]
    %v3921 = vld [vmem:[%s5 + $0x8c8] sm:$0xf]
    %v3922 = vld [vmem:[%s5 + $0x8cc] sm:$0xf]
    %v3923 = vld [vmem:[%s5 + $0x8d0] sm:$0xf]
    %v3924 = vld [vmem:[%s5 + $0x8d4] sm:$0xf]
    %v3925 = vld [vmem:[%s5 + $0x8d8] sm:$0xf]
    %v3926 = vld [vmem:[%s5 + $0x8dc] sm:$0xf]
    %v3927 = vld [vmem:[%s5 + $0x8e0] sm:$0xf]
    %v3928 = vld [vmem:[%s5 + $0x8e4] sm:$0xf]
    %v3929 = vld [vmem:[%s5 + $0x8e8] sm:$0xf]
    %v3930 = vld [vmem:[%s5 + $0x8ec] sm:$0xf]
    %v3931 = vld [vmem:[%s5 + $0x8f0] sm:$0xf]
    %v3932 = vld [vmem:[%s5 + $0x8f4] sm:$0xf]
    %v3933 = vld [vmem:[%s5 + $0x8f8] sm:$0xf]
    %v3934 = vld [vmem:[%s5 + $0x8fc] sm:$0xf]
    %v3940 = vcombine.high %v3354, %v3354
    %v3942 = vunpack.c.l.s4 1966171168
    %v3943 = vunpack.c.0.s8 %v3942
    %v3944 = vlaneseq
    %v3945 = vshrl.u32 %v3944, 7
    %v3946 = vsub.s32 %v3943, %v3945
    %v3947 = vrot.slane %v3354, %v3946
    %v3949 = vunpack.c.l.s4 1966171168
    %v3950 = vunpack.c.0.s8 %v3949
    %v3951 = vlaneseq
    %v3952 = vshrl.u32 %v3951, 7
    %v3953 = vsub.s32 %v3950, %v3952
    %v3954 = vrot.slane %v3940, %v3953
    %v3955 = vcombine.high %v3947, %v3947
    %v3956 = vcombine.high %v3954, %v3954
    %v3958 = vunpack.c.l.s4 1966171168
    %v3959 = vunpack.c.0.s8 %v3958
    %v3960 = vlaneseq
    %v3961 = vshrl.u32 %v3960, 7
    %v3962 = vsub.s32 %v3959, %v3961
    %v3963 = vrot.slane %v3947, %v3962
    %v3965 = vunpack.c.l.s4 1966171168
    %v3966 = vunpack.c.0.s8 %v3965
    %v3967 = vlaneseq
    %v3968 = vshrl.u32 %v3967, 7
    %v3969 = vsub.s32 %v3966, %v3968
    %v3970 = vrot.slane %v3954, %v3969
    %v3972 = vunpack.c.l.s4 1966171168
    %v3973 = vunpack.c.0.s8 %v3972
    %v3974 = vlaneseq
    %v3975 = vshrl.u32 %v3974, 7
    %v3976 = vsub.s32 %v3973, %v3975
    %v3977 = vrot.slane %v3955, %v3976
    %v3979 = vunpack.c.l.s4 1966171168
    %v3980 = vunpack.c.0.s8 %v3979
    %v3981 = vlaneseq
    %v3982 = vshrl.u32 %v3981, 7
    %v3983 = vsub.s32 %v3980, %v3982
    %v3984 = vrot.slane %v3956, %v3983
    %v3985 = vcombine.high %v3963, %v3963
    %v3986 = vcombine.high %v3970, %v3970
    %v3987 = vcombine.high %v3977, %v3977
    %v3988 = vcombine.high %v3984, %v3984
    %v3989 = vcombine.high %v3355, %v3355
    %v3991 = vunpack.c.l.s4 1966171168
    %v3992 = vunpack.c.0.s8 %v3991
    %v3993 = vlaneseq
    %v3994 = vshrl.u32 %v3993, 7
    %v3995 = vsub.s32 %v3992, %v3994
    %v3996 = vrot.slane %v3355, %v3995
    %v3998 = vunpack.c.l.s4 1966171168
    %v3999 = vunpack.c.0.s8 %v3998
    %v4000 = vlaneseq
    %v4001 = vshrl.u32 %v4000, 7
    %v4002 = vsub.s32 %v3999, %v4001
    %v4003 = vrot.slane %v3989, %v4002
    %v4004 = vcombine.high %v3996, %v3996
    %v4005 = vcombine.high %v4003, %v4003
    %v4007 = vunpack.c.l.s4 1966171168
    %v4008 = vunpack.c.0.s8 %v4007
    %v4009 = vlaneseq
    %v4010 = vshrl.u32 %v4009, 7
    %v4011 = vsub.s32 %v4008, %v4010
    %v4012 = vrot.slane %v3996, %v4011
    %v4014 = vunpack.c.l.s4 1966171168
    %v4015 = vunpack.c.0.s8 %v4014
    %v4016 = vlaneseq
    %v4017 = vshrl.u32 %v4016, 7
    %v4018 = vsub.s32 %v4015, %v4017
    %v4019 = vrot.slane %v4003, %v4018
    %v4021 = vunpack.c.l.s4 1966171168
    %v4022 = vunpack.c.0.s8 %v4021
    %v4023 = vlaneseq
    %v4024 = vshrl.u32 %v4023, 7
    %v4025 = vsub.s32 %v4022, %v4024
    %v4026 = vrot.slane %v4004, %v4025
    %v4028 = vunpack.c.l.s4 1966171168
    %v4029 = vunpack.c.0.s8 %v4028
    %v4030 = vlaneseq
    %v4031 = vshrl.u32 %v4030, 7
    %v4032 = vsub.s32 %v4029, %v4031
    %v4033 = vrot.slane %v4005, %v4032
    %v4034 = vcombine.high %v4012, %v4012
    %v4035 = vcombine.high %v4019, %v4019
    %v4036 = vcombine.high %v4026, %v4026
    %v4037 = vcombine.high %v4033, %v4033
    %v4038 = vcombine.high %v3356, %v3356
    %v4040 = vunpack.c.l.s4 1966171168
    %v4041 = vunpack.c.0.s8 %v4040
    %v4042 = vlaneseq
    %v4043 = vshrl.u32 %v4042, 7
    %v4044 = vsub.s32 %v4041, %v4043
    %v4045 = vrot.slane %v3356, %v4044
    %v4047 = vunpack.c.l.s4 1966171168
    %v4048 = vunpack.c.0.s8 %v4047
    %v4049 = vlaneseq
    %v4050 = vshrl.u32 %v4049, 7
    %v4051 = vsub.s32 %v4048, %v4050
    %v4052 = vrot.slane %v4038, %v4051
    %v4053 = vcombine.high %v4045, %v4045
    %v4054 = vcombine.high %v4052, %v4052
    %v4056 = vunpack.c.l.s4 1966171168
    %v4057 = vunpack.c.0.s8 %v4056
    %v4058 = vlaneseq
    %v4059 = vshrl.u32 %v4058, 7
    %v4060 = vsub.s32 %v4057, %v4059
    %v4061 = vrot.slane %v4045, %v4060
    %v4063 = vunpack.c.l.s4 1966171168
    %v4064 = vunpack.c.0.s8 %v4063
    %v4065 = vlaneseq
    %v4066 = vshrl.u32 %v4065, 7
    %v4067 = vsub.s32 %v4064, %v4066
    %v4068 = vrot.slane %v4052, %v4067
    %v4070 = vunpack.c.l.s4 1966171168
    %v4071 = vunpack.c.0.s8 %v4070
    %v4072 = vlaneseq
    %v4073 = vshrl.u32 %v4072, 7
    %v4074 = vsub.s32 %v4071, %v4073
    %v4075 = vrot.slane %v4053, %v4074
    %v4077 = vunpack.c.l.s4 1966171168
    %v4078 = vunpack.c.0.s8 %v4077
    %v4079 = vlaneseq
    %v4080 = vshrl.u32 %v4079, 7
    %v4081 = vsub.s32 %v4078, %v4080
    %v4082 = vrot.slane %v4054, %v4081
    %v4083 = vcombine.high %v4061, %v4061
    %v4084 = vcombine.high %v4068, %v4068
    %v4085 = vcombine.high %v4075, %v4075
    %v4086 = vcombine.high %v4082, %v4082
    %v4087 = vcombine.high %v3357, %v3357
    %v4089 = vunpack.c.l.s4 1966171168
    %v4090 = vunpack.c.0.s8 %v4089
    %v4091 = vlaneseq
    %v4092 = vshrl.u32 %v4091, 7
    %v4093 = vsub.s32 %v4090, %v4092
    %v4094 = vrot.slane %v3357, %v4093
    %v4096 = vunpack.c.l.s4 1966171168
    %v4097 = vunpack.c.0.s8 %v4096
    %v4098 = vlaneseq
    %v4099 = vshrl.u32 %v4098, 7
    %v4100 = vsub.s32 %v4097, %v4099
    %v4101 = vrot.slane %v4087, %v4100
    %v4102 = vcombine.high %v4094, %v4094
    %v4103 = vcombine.high %v4101, %v4101
    %v4105 = vunpack.c.l.s4 1966171168
    %v4106 = vunpack.c.0.s8 %v4105
    %v4107 = vlaneseq
    %v4108 = vshrl.u32 %v4107, 7
    %v4109 = vsub.s32 %v4106, %v4108
    %v4110 = vrot.slane %v4094, %v4109
    %v4112 = vunpack.c.l.s4 1966171168
    %v4113 = vunpack.c.0.s8 %v4112
    %v4114 = vlaneseq
    %v4115 = vshrl.u32 %v4114, 7
    %v4116 = vsub.s32 %v4113, %v4115
    %v4117 = vrot.slane %v4101, %v4116
    %v4119 = vunpack.c.l.s4 1966171168
    %v4120 = vunpack.c.0.s8 %v4119
    %v4121 = vlaneseq
    %v4122 = vshrl.u32 %v4121, 7
    %v4123 = vsub.s32 %v4120, %v4122
    %v4124 = vrot.slane %v4102, %v4123
    %v4126 = vunpack.c.l.s4 1966171168
    %v4127 = vunpack.c.0.s8 %v4126
    %v4128 = vlaneseq
    %v4129 = vshrl.u32 %v4128, 7
    %v4130 = vsub.s32 %v4127, %v4129
    %v4131 = vrot.slane %v4103, %v4130
    %v4132 = vcombine.high %v4110, %v4110
    %v4133 = vcombine.high %v4117, %v4117
    %v4134 = vcombine.high %v4124, %v4124
    %v4135 = vcombine.high %v4131, %v4131
    %v4137 = vunpack.c.l.s4 1966171168
    %v4138 = vunpack.c.0.s8 %v4137
    %v4139 = vlaneseq
    %v4140 = vshrl.u32 %v4139, 7
    %v4141 = vsub.s32 %v4138, %v4140
    %v4142 = vrot.slane %v3358, %v4141
    %v4143 = vcombine.high %v4142, %v4142
    %v4145 = vunpack.c.l.s4 1966171168
    %v4146 = vunpack.c.0.s8 %v4145
    %v4147 = vlaneseq
    %v4148 = vshrl.u32 %v4147, 7
    %v4149 = vsub.s32 %v4146, %v4148
    %v4150 = vrot.slane %v4142, %v4149
    %v4152 = vunpack.c.l.s4 1966171168
    %v4153 = vunpack.c.0.s8 %v4152
    %v4154 = vlaneseq
    %v4155 = vshrl.u32 %v4154, 7
    %v4156 = vsub.s32 %v4153, %v4155
    %v4157 = vrot.slane %v4143, %v4156
    %v4158 = vcombine.high %v4150, %v4150
    %v4159 = vcombine.high %v4157, %v4157
    %v4772 = vunpack.c.l.b16 %v3359
    %v4773 = vunpack.c.l.b16 %v3360
    %v4774 = vunpack.c.l.b16 %v3361
    %v4775 = vunpack.c.l.b16 %v3362
    %v4776 = vunpack.c.l.b16 %v3363
    %v4777 = vunpack.c.l.b16 %v3364
    %v4778 = vunpack.c.l.b16 %v3365
    %v4779 = vunpack.c.l.b16 %v3366
    %v4780 = vunpack.c.l.b16 %v3367
    %v4781 = vunpack.c.l.b16 %v3368
    %v4782 = vunpack.c.l.b16 %v3369
    %v4783 = vunpack.c.l.b16 %v3370
    %v4784 = vunpack.c.l.b16 %v3371
    %v4785 = vunpack.c.l.b16 %v3372
    %v4786 = vunpack.c.l.b16 %v3373
    %v4787 = vunpack.c.l.b16 %v3374
    %v4788 = vunpack.c.l.b16 %v3375
    %v4789 = vunpack.c.l.b16 %v3376
    %v4790 = vunpack.c.l.b16 %v3377
    %v4791 = vunpack.c.l.b16 %v3378
    %v4792 = vunpack.c.l.b16 %v3379
    %v4793 = vunpack.c.l.b16 %v3380
    %v4794 = vunpack.c.l.b16 %v3381
    %v4795 = vunpack.c.l.b16 %v3382
    %v4796 = vunpack.c.l.b16 %v3383
    %v4797 = vunpack.c.l.b16 %v3384
    %v4798 = vunpack.c.l.b16 %v3385
    %v4799 = vunpack.c.l.b16 %v3386
    %v4800 = vunpack.c.l.b16 %v3387
    %v4801 = vunpack.c.l.b16 %v3388
    %v4802 = vunpack.c.l.b16 %v3389
    %v4803 = vunpack.c.l.b16 %v3390
    %v4804 = vunpack.c.l.b16 %v3391
    %v4805 = vunpack.c.l.b16 %v3392
    %v4806 = vunpack.c.l.b16 %v3393
    %v4807 = vunpack.c.l.b16 %v3394
    %v4808 = vunpack.c.l.b16 %v3395
    %v4809 = vunpack.c.l.b16 %v3396
    %v4810 = vunpack.c.l.b16 %v3397
    %v4811 = vunpack.c.l.b16 %v3398
    %v4812 = vunpack.c.l.b16 %v3399
    %v4813 = vunpack.c.l.b16 %v3400
    %v4814 = vunpack.c.l.b16 %v3401
    %v4815 = vunpack.c.l.b16 %v3402
    %v4816 = vunpack.c.l.b16 %v3403
    %v4817 = vunpack.c.l.b16 %v3404
    %v4818 = vunpack.c.l.b16 %v3405
    %v4819 = vunpack.c.l.b16 %v3406
    %v4820 = vunpack.c.l.b16 %v3407
    %v4821 = vunpack.c.l.b16 %v3408
    %v4822 = vunpack.c.l.b16 %v3409
    %v4823 = vunpack.c.l.b16 %v3410
    %v4824 = vunpack.c.l.b16 %v3411
    %v4825 = vunpack.c.l.b16 %v3412
    %v4826 = vunpack.c.l.b16 %v3413
    %v4827 = vunpack.c.l.b16 %v3414
    %v4828 = vunpack.c.l.b16 %v3415
    %v4829 = vunpack.c.l.b16 %v3416
    %v4830 = vunpack.c.l.b16 %v3417
    %v4831 = vunpack.c.l.b16 %v3418
    %v4832 = vunpack.c.l.b16 %v3419
    %v4833 = vunpack.c.l.b16 %v3420
    %v4834 = vunpack.c.l.b16 %v3421
    %v4835 = vunpack.c.l.b16 %v3422
    %v4836 = vunpack.c.l.b16 %v3423
    %v4837 = vunpack.c.l.b16 %v3424
    %v4838 = vunpack.c.l.b16 %v3425
    %v4839 = vunpack.c.l.b16 %v3426
    %v4840 = vunpack.c.l.b16 %v3427
    %v4841 = vunpack.c.l.b16 %v3428
    %v4842 = vunpack.c.l.b16 %v3429
    %v4843 = vunpack.c.l.b16 %v3430
    %v4844 = vunpack.c.l.b16 %v3431
    %v4845 = vunpack.c.l.b16 %v3432
    %v4846 = vunpack.c.l.b16 %v3433
    %v4847 = vunpack.c.l.b16 %v3434
    %v4848 = vunpack.c.l.b16 %v3435
    %v4849 = vunpack.c.l.b16 %v3436
    %v4850 = vunpack.c.l.b16 %v3437
    %v4851 = vunpack.c.l.b16 %v3438
    %v4852 = vunpack.c.l.b16 %v3439
    %v4853 = vunpack.c.l.b16 %v3440
    %v4854 = vunpack.c.l.b16 %v3441
    %v4855 = vunpack.c.l.b16 %v3442
    %v4856 = vunpack.c.l.b16 %v3443
    %v4857 = vunpack.c.l.b16 %v3444
    %v4858 = vunpack.c.l.b16 %v3445
    %v4859 = vunpack.c.l.b16 %v3446
    %v4860 = vunpack.c.l.b16 %v3447
    %v4861 = vunpack.c.l.b16 %v3448
    %v4862 = vunpack.c.l.b16 %v3449
    %v4863 = vunpack.c.l.b16 %v3450
    %v4864 = vunpack.c.l.b16 %v3451
    %v4865 = vunpack.c.l.b16 %v3452
    %v4866 = vunpack.c.l.b16 %v3453
    %v4867 = vunpack.c.l.b16 %v3454
    %v4868 = vunpack.c.l.b16 %v3455
    %v4869 = vunpack.c.l.b16 %v3456
    %v4870 = vunpack.c.l.b16 %v3457
    %v4871 = vunpack.c.l.b16 %v3458
    %v4872 = vunpack.c.l.b16 %v3459
    %v4873 = vunpack.c.l.b16 %v3460
    %v4874 = vunpack.c.l.b16 %v3461
    %v4875 = vunpack.c.l.b16 %v3462
    %v4876 = vunpack.c.l.b16 %v3463
    %v4877 = vunpack.c.l.b16 %v3464
    %v4878 = vunpack.c.l.b16 %v3465
    %v4879 = vunpack.c.l.b16 %v3466
    %v4880 = vunpack.c.l.b16 %v3467
    %v4881 = vunpack.c.l.b16 %v3468
    %v4882 = vunpack.c.l.b16 %v3469
    %v4883 = vunpack.c.l.b16 %v3470
    %v4884 = vunpack.c.l.b16 %v3471
    %v4885 = vunpack.c.l.b16 %v3472
    %v4886 = vunpack.c.l.b16 %v3473
    %v4887 = vunpack.c.l.b16 %v3474
    %v4888 = vunpack.c.l.b16 %v3475
    %v4889 = vunpack.c.l.b16 %v3476
    %v4890 = vunpack.c.l.b16 %v3477
    %v4891 = vunpack.c.l.b16 %v3478
    %v4892 = vunpack.c.l.b16 %v3479
    %v4893 = vunpack.c.l.b16 %v3480
    %v4894 = vunpack.c.l.b16 %v3481
    %v4895 = vunpack.c.l.b16 %v3482
    %v4896 = vunpack.c.l.b16 %v3483
    %v4897 = vunpack.c.l.b16 %v3484
    %v4898 = vunpack.c.l.b16 %v3485
    %v4899 = vunpack.c.l.b16 %v3486
    %v4900 = vunpack.c.l.b16 %v3487
    %v4901 = vunpack.c.l.b16 %v3488
    %v4902 = vunpack.c.l.b16 %v3489
    %v4903 = vunpack.c.l.b16 %v3490
    %v4904 = vunpack.c.l.b16 %v3491
    %v4905 = vunpack.c.l.b16 %v3492
    %v4906 = vunpack.c.l.b16 %v3493
    %v4907 = vunpack.c.l.b16 %v3494
    %v4908 = vunpack.c.l.b16 %v3495
    %v4909 = vunpack.c.l.b16 %v3496
    %v4910 = vunpack.c.l.b16 %v3497
    %v4911 = vunpack.c.l.b16 %v3498
    %v4912 = vunpack.c.l.b16 %v3499
    %v4913 = vunpack.c.l.b16 %v3500
    %v4914 = vunpack.c.l.b16 %v3501
    %v4915 = vunpack.c.l.b16 %v3502
    %v4916 = vunpack.c.l.b16 %v3503
    %v4917 = vunpack.c.l.b16 %v3504
    %v4918 = vunpack.c.l.b16 %v3505
    %v4919 = vunpack.c.l.b16 %v3506
    %v4920 = vunpack.c.l.b16 %v3507
    %v4921 = vunpack.c.l.b16 %v3508
    %v4922 = vunpack.c.l.b16 %v3509
    %v4923 = vunpack.c.l.b16 %v3510
    %v4924 = vunpack.c.l.b16 %v3511
    %v4925 = vunpack.c.l.b16 %v3512
    %v4926 = vunpack.c.l.b16 %v3513
    %v4927 = vunpack.c.l.b16 %v3514
    %v4928 = vunpack.c.l.b16 %v3515
    %v4929 = vunpack.c.l.b16 %v3516
    %v4930 = vunpack.c.l.b16 %v3517
    %v4931 = vunpack.c.l.b16 %v3518
    %v4932 = vunpack.c.l.b16 %v3519
    %v4933 = vunpack.c.l.b16 %v3520
    %v4934 = vunpack.c.l.b16 %v3521
    %v4935 = vunpack.c.l.b16 %v3522
    %v4936 = vunpack.c.l.b16 %v3523
    %v4937 = vunpack.c.l.b16 %v3524
    %v4938 = vunpack.c.l.b16 %v3525
    %v4939 = vunpack.c.l.b16 %v3526
    %v4940 = vunpack.c.l.b16 %v3527
    %v4941 = vunpack.c.l.b16 %v3528
    %v4942 = vunpack.c.l.b16 %v3529
    %v4943 = vunpack.c.l.b16 %v3530
    %v4944 = vunpack.c.l.b16 %v3531
    %v4945 = vunpack.c.l.b16 %v3532
    %v4946 = vunpack.c.l.b16 %v3533
    %v4947 = vunpack.c.l.b16 %v3534
    %v4948 = vunpack.c.l.b16 %v3535
    %v4949 = vunpack.c.l.b16 %v3536
    %v4950 = vunpack.c.l.b16 %v3537
    %v4951 = vunpack.c.l.b16 %v3538
    %v4952 = vunpack.c.l.b16 %v3539
    %v4953 = vunpack.c.l.b16 %v3540
    %v4954 = vunpack.c.l.b16 %v3541
    %v4955 = vunpack.c.l.b16 %v3542
    %v4956 = vunpack.c.l.b16 %v3543
    %v4957 = vunpack.c.l.b16 %v3544
    %v4958 = vunpack.c.l.b16 %v3545
    %v4959 = vunpack.c.l.b16 %v3546
    %v4960 = vunpack.c.l.b16 %v3547
    %v4961 = vunpack.c.l.b16 %v3548
    %v4962 = vunpack.c.l.b16 %v3549
    %v4963 = vunpack.c.l.b16 %v3550
    %v4964 = vunpack.c.l.b16 %v3551
    %v4965 = vunpack.c.l.b16 %v3552
    %v4966 = vunpack.c.l.b16 %v3553
    %v4967 = vunpack.c.l.b16 %v3554
    %v4968 = vunpack.c.l.b16 %v3555
    %v4969 = vunpack.c.l.b16 %v3556
    %v4970 = vunpack.c.l.b16 %v3557
    %v4971 = vunpack.c.l.b16 %v3558
    %v4972 = vunpack.c.l.b16 %v3559
    %v4973 = vunpack.c.l.b16 %v3560
    %v4974 = vunpack.c.l.b16 %v3561
    %v4975 = vunpack.c.l.b16 %v3562
    %v4976 = vunpack.c.l.b16 %v3563
    %v4977 = vunpack.c.l.b16 %v3564
    %v4978 = vunpack.c.l.b16 %v3565
    %v4979 = vunpack.c.l.b16 %v3566
    %v4980 = vunpack.c.l.b16 %v3567
    %v4981 = vunpack.c.l.b16 %v3568
    %v4982 = vunpack.c.l.b16 %v3569
    %v4983 = vunpack.c.l.b16 %v3570
    %v4984 = vunpack.c.l.b16 %v3571
    %v4985 = vunpack.c.l.b16 %v3572
    %v4986 = vunpack.c.l.b16 %v3573
    %v4987 = vunpack.c.l.b16 %v3574
    %v4988 = vunpack.c.l.b16 %v3575
    %v4989 = vunpack.c.l.b16 %v3576
    %v4990 = vunpack.c.l.b16 %v3577
    %v4991 = vunpack.c.l.b16 %v3578
    %v4992 = vunpack.c.l.b16 %v3579
    %v4993 = vunpack.c.l.b16 %v3580
    %v4994 = vunpack.c.l.b16 %v3581
    %v4995 = vunpack.c.l.b16 %v3582
    %v4996 = vunpack.c.l.b16 %v3583
    %v4997 = vunpack.c.l.b16 %v3584
    %v4998 = vunpack.c.l.b16 %v3585
    %v4999 = vunpack.c.l.b16 %v3586
    %v5000 = vunpack.c.l.b16 %v3587
    %v5001 = vunpack.c.l.b16 %v3588
    %v5002 = vunpack.c.l.b16 %v3589
    %v5003 = vunpack.c.l.b16 %v3590
    %v5004 = vunpack.c.l.b16 %v3591
    %v5005 = vunpack.c.l.b16 %v3592
    %v5006 = vunpack.c.l.b16 %v3593
    %v5007 = vunpack.c.l.b16 %v3594
    %v5008 = vunpack.c.l.b16 %v3595
    %v5009 = vunpack.c.l.b16 %v3596
    %v5010 = vunpack.c.l.b16 %v3597
    %v5011 = vunpack.c.l.b16 %v3598
    %v5012 = vunpack.c.l.b16 %v3599
    %v5013 = vunpack.c.l.b16 %v3600
    %v5014 = vunpack.c.l.b16 %v3601
    %v5015 = vunpack.c.l.b16 %v3602
    %v5016 = vunpack.c.l.b16 %v3603
    %v5017 = vunpack.c.l.b16 %v3604
    %v5018 = vunpack.c.l.b16 %v3605
    %v5019 = vunpack.c.l.b16 %v3606
    %v5020 = vunpack.c.l.b16 %v3607
    %v5021 = vunpack.c.l.b16 %v3608
    %v5022 = vunpack.c.l.b16 %v3609
    %v5023 = vunpack.c.l.b16 %v3610
    %v5024 = vunpack.c.l.b16 %v3611
    %v5025 = vunpack.c.l.b16 %v3612
    %v5026 = vunpack.c.l.b16 %v3613
    %v5027 = vunpack.c.l.b16 %v3614
    %v5028 = vunpack.c.l.b16 %v3615
    %v5029 = vunpack.c.l.b16 %v3616
    %v5030 = vunpack.c.l.b16 %v3617
    %v5031 = vunpack.c.l.b16 %v3618
    %v5032 = vunpack.c.l.b16 %v3619
    %v5033 = vunpack.c.l.b16 %v3620
    %v5034 = vunpack.c.l.b16 %v3621
    %v5035 = vunpack.c.l.b16 %v3622
    %v5036 = vunpack.c.l.b16 %v3623
    %v5037 = vunpack.c.l.b16 %v3624
    %v5038 = vunpack.c.l.b16 %v3625
    %v5039 = vunpack.c.l.b16 %v3626
    %v5040 = vunpack.c.l.b16 %v3627
    %v5041 = vunpack.c.l.b16 %v3628
    %v5042 = vunpack.c.l.b16 %v3629
    %v5043 = vunpack.c.l.b16 %v3630
    %v5044 = vunpack.c.l.b16 %v3631
    %v5045 = vunpack.c.l.b16 %v3632
    %v5046 = vunpack.c.l.b16 %v3633
    %v5047 = vunpack.c.l.b16 %v3634
    %v5048 = vunpack.c.l.b16 %v3635
    %v5049 = vunpack.c.l.b16 %v3636
    %v5050 = vunpack.c.l.b16 %v3637
    %v5051 = vunpack.c.l.b16 %v3638
    %v5052 = vunpack.c.l.b16 %v3639
    %v5053 = vunpack.c.l.b16 %v3640
    %v5054 = vunpack.c.l.b16 %v3641
    %v5055 = vunpack.c.l.b16 %v3642
    %v5056 = vunpack.c.l.b16 %v3643
    %v5057 = vunpack.c.l.b16 %v3644
    %v5058 = vunpack.c.l.b16 %v3645
    %v5059 = vunpack.c.l.b16 %v3646
    %v5060 = vunpack.c.l.b16 %v3647
    %v5061 = vunpack.c.l.b16 %v3648
    %v5062 = vunpack.c.l.b16 %v3649
    %v5063 = vunpack.c.l.b16 %v3650
    %v5064 = vunpack.c.l.b16 %v3651
    %v5065 = vunpack.c.l.b16 %v3652
    %v5066 = vunpack.c.l.b16 %v3653
    %v5067 = vunpack.c.l.b16 %v3654
    %v5068 = vunpack.c.l.b16 %v3655
    %v5069 = vunpack.c.l.b16 %v3656
    %v5070 = vunpack.c.l.b16 %v3657
    %v5071 = vunpack.c.l.b16 %v3658
    %v5072 = vunpack.c.l.b16 %v3659
    %v5073 = vunpack.c.l.b16 %v3660
    %v5074 = vunpack.c.l.b16 %v3661
    %v5075 = vunpack.c.l.b16 %v3662
    %v5076 = vunpack.c.l.b16 %v3663
    %v5077 = vunpack.c.l.b16 %v3664
    %v5078 = vunpack.c.l.b16 %v3665
    %v5079 = vunpack.c.l.b16 %v3666
    %v5080 = vunpack.c.l.b16 %v3667
    %v5081 = vunpack.c.l.b16 %v3668
    %v5082 = vunpack.c.l.b16 %v3669
    %v5083 = vunpack.c.l.b16 %v3670
    %v5084 = vunpack.c.l.b16 %v3671
    %v5085 = vunpack.c.l.b16 %v3672
    %v5086 = vunpack.c.l.b16 %v3673
    %v5087 = vunpack.c.l.b16 %v3674
    %v5088 = vunpack.c.l.b16 %v3675
    %v5089 = vunpack.c.l.b16 %v3676
    %v5090 = vunpack.c.l.b16 %v3677
    %v5091 = vunpack.c.l.b16 %v3678
    %v5092 = vunpack.c.l.b16 %v3679
    %v5093 = vunpack.c.l.b16 %v3680
    %v5094 = vunpack.c.l.b16 %v3681
    %v5095 = vunpack.c.l.b16 %v3682
    %v5096 = vunpack.c.l.b16 %v3683
    %v5097 = vunpack.c.l.b16 %v3684
    %v5098 = vunpack.c.l.b16 %v3685
    %v5099 = vunpack.c.l.b16 %v3686
    %v5100 = vunpack.c.l.b16 %v3687
    %v5101 = vunpack.c.l.b16 %v3688
    %v5102 = vunpack.c.l.b16 %v3689
    %v5103 = vunpack.c.l.b16 %v3690
    %v5104 = vunpack.c.l.b16 %v3691
    %v5105 = vunpack.c.l.b16 %v3692
    %v5106 = vunpack.c.l.b16 %v3693
    %v5107 = vunpack.c.l.b16 %v3694
    %v5108 = vunpack.c.l.b16 %v3695
    %v5109 = vunpack.c.l.b16 %v3696
    %v5110 = vunpack.c.l.b16 %v3697
    %v5111 = vunpack.c.l.b16 %v3698
    %v5112 = vunpack.c.l.b16 %v3699
    %v5113 = vunpack.c.l.b16 %v3700
    %v5114 = vunpack.c.l.b16 %v3701
    %v5115 = vunpack.c.l.b16 %v3702
    %v5116 = vunpack.c.l.b16 %v3703
    %v5117 = vunpack.c.l.b16 %v3704
    %v5118 = vunpack.c.l.b16 %v3705
    %v5119 = vunpack.c.l.b16 %v3706
    %v5120 = vunpack.c.l.b16 %v3707
    %v5121 = vunpack.c.l.b16 %v3708
    %v5122 = vunpack.c.l.b16 %v3709
    %v5123 = vunpack.c.l.b16 %v3710
    %v5124 = vunpack.c.l.b16 %v3711
    %v5125 = vunpack.c.l.b16 %v3712
    %v5126 = vunpack.c.l.b16 %v3713
    %v5127 = vunpack.c.l.b16 %v3714
    %v5128 = vunpack.c.l.b16 %v3715
    %v5129 = vunpack.c.l.b16 %v3716
    %v5130 = vunpack.c.l.b16 %v3717
    %v5131 = vunpack.c.l.b16 %v3718
    %v5132 = vunpack.c.l.b16 %v3719
    %v5133 = vunpack.c.l.b16 %v3720
    %v5134 = vunpack.c.l.b16 %v3721
    %v5135 = vunpack.c.l.b16 %v3722
    %v5136 = vunpack.c.l.b16 %v3723
    %v5137 = vunpack.c.l.b16 %v3724
    %v5138 = vunpack.c.l.b16 %v3725
    %v5139 = vunpack.c.l.b16 %v3726
    %v5140 = vunpack.c.l.b16 %v3727
    %v5141 = vunpack.c.l.b16 %v3728
    %v5142 = vunpack.c.l.b16 %v3729
    %v5143 = vunpack.c.l.b16 %v3730
    %v5144 = vunpack.c.l.b16 %v3731
    %v5145 = vunpack.c.l.b16 %v3732
    %v5146 = vunpack.c.l.b16 %v3733
    %v5147 = vunpack.c.l.b16 %v3734
    %v5148 = vunpack.c.l.b16 %v3735
    %v5149 = vunpack.c.l.b16 %v3736
    %v5150 = vunpack.c.l.b16 %v3737
    %v5151 = vunpack.c.l.b16 %v3738
    %v5152 = vunpack.c.l.b16 %v3739
    %v5153 = vunpack.c.l.b16 %v3740
    %v5154 = vunpack.c.l.b16 %v3741
    %v5155 = vunpack.c.l.b16 %v3742
    %v5156 = vunpack.c.l.b16 %v3743
    %v5157 = vunpack.c.l.b16 %v3744
    %v5158 = vunpack.c.l.b16 %v3745
    %v5159 = vunpack.c.l.b16 %v3746
    %v5160 = vunpack.c.l.b16 %v3747
    %v5161 = vunpack.c.l.b16 %v3748
    %v5162 = vunpack.c.l.b16 %v3749
    %v5163 = vunpack.c.l.b16 %v3750
    %v5164 = vunpack.c.l.b16 %v3751
    %v5165 = vunpack.c.l.b16 %v3752
    %v5166 = vunpack.c.l.b16 %v3753
    %v5167 = vunpack.c.l.b16 %v3754
    %v5168 = vunpack.c.l.b16 %v3755
    %v5169 = vunpack.c.l.b16 %v3756
    %v5170 = vunpack.c.l.b16 %v3757
    %v5171 = vunpack.c.l.b16 %v3758
    %v5172 = vunpack.c.l.b16 %v3759
    %v5173 = vunpack.c.l.b16 %v3760
    %v5174 = vunpack.c.l.b16 %v3761
    %v5175 = vunpack.c.l.b16 %v3762
    %v5176 = vunpack.c.l.b16 %v3763
    %v5177 = vunpack.c.l.b16 %v3764
    %v5178 = vunpack.c.l.b16 %v3765
    %v5179 = vunpack.c.l.b16 %v3766
    %v5180 = vunpack.c.l.b16 %v3767
    %v5181 = vunpack.c.l.b16 %v3768
    %v5182 = vunpack.c.l.b16 %v3769
    %v5183 = vunpack.c.l.b16 %v3770
    %v5184 = vunpack.c.l.b16 %v3771
    %v5185 = vunpack.c.l.b16 %v3772
    %v5186 = vunpack.c.l.b16 %v3773
    %v5187 = vunpack.c.l.b16 %v3774
    %v5188 = vunpack.c.l.b16 %v3775
    %v5189 = vunpack.c.l.b16 %v3776
    %v5190 = vunpack.c.l.b16 %v3777
    %v5191 = vunpack.c.l.b16 %v3778
    %v5192 = vunpack.c.l.b16 %v3779
    %v5193 = vunpack.c.l.b16 %v3780
    %v5194 = vunpack.c.l.b16 %v3781
    %v5195 = vunpack.c.l.b16 %v3782
    %v5196 = vunpack.c.l.b16 %v3783
    %v5197 = vunpack.c.l.b16 %v3784
    %v5198 = vunpack.c.l.b16 %v3785
    %v5199 = vunpack.c.l.b16 %v3786
    %v5200 = vunpack.c.l.b16 %v3787
    %v5201 = vunpack.c.l.b16 %v3788
    %v5202 = vunpack.c.l.b16 %v3789
    %v5203 = vunpack.c.l.b16 %v3790
    %v5204 = vunpack.c.l.b16 %v3791
    %v5205 = vunpack.c.l.b16 %v3792
    %v5206 = vunpack.c.l.b16 %v3793
    %v5207 = vunpack.c.l.b16 %v3794
    %v5208 = vunpack.c.l.b16 %v3795
    %v5209 = vunpack.c.l.b16 %v3796
    %v5210 = vunpack.c.l.b16 %v3797
    %v5211 = vunpack.c.l.b16 %v3798
    %v5212 = vunpack.c.l.b16 %v3799
    %v5213 = vunpack.c.l.b16 %v3800
    %v5214 = vunpack.c.l.b16 %v3801
    %v5215 = vunpack.c.l.b16 %v3802
    %v5216 = vunpack.c.l.b16 %v3803
    %v5217 = vunpack.c.l.b16 %v3804
    %v5218 = vunpack.c.l.b16 %v3805
    %v5219 = vunpack.c.l.b16 %v3806
    %v5220 = vunpack.c.l.b16 %v3807
    %v5221 = vunpack.c.l.b16 %v3808
    %v5222 = vunpack.c.l.b16 %v3809
    %v5223 = vunpack.c.l.b16 %v3810
    %v5224 = vunpack.c.l.b16 %v3811
    %v5225 = vunpack.c.l.b16 %v3812
    %v5226 = vunpack.c.l.b16 %v3813
    %v5227 = vunpack.c.l.b16 %v3814
    %v5228 = vunpack.c.l.b16 %v3815
    %v5229 = vunpack.c.l.b16 %v3816
    %v5230 = vunpack.c.l.b16 %v3817
    %v5231 = vunpack.c.l.b16 %v3818
    %v5232 = vunpack.c.l.b16 %v3819
    %v5233 = vunpack.c.l.b16 %v3820
    %v5234 = vunpack.c.l.b16 %v3821
    %v5235 = vunpack.c.l.b16 %v3822
    %v5236 = vunpack.c.l.b16 %v3823
    %v5237 = vunpack.c.l.b16 %v3824
    %v5238 = vunpack.c.l.b16 %v3825
    %v5239 = vunpack.c.l.b16 %v3826
    %v5240 = vunpack.c.l.b16 %v3827
    %v5241 = vunpack.c.l.b16 %v3828
    %v5242 = vunpack.c.l.b16 %v3829
    %v5243 = vunpack.c.l.b16 %v3830
    %v5244 = vunpack.c.l.b16 %v3831
    %v5245 = vunpack.c.l.b16 %v3832
    %v5246 = vunpack.c.l.b16 %v3833
    %v5247 = vunpack.c.l.b16 %v3834
    %v5248 = vunpack.c.l.b16 %v3835
    %v5249 = vunpack.c.l.b16 %v3836
    %v5250 = vunpack.c.l.b16 %v3837
    %v5251 = vunpack.c.l.b16 %v3838
    %v5252 = vunpack.c.l.b16 %v3839
    %v5253 = vunpack.c.l.b16 %v3840
    %v5254 = vunpack.c.l.b16 %v3841
    %v5255 = vunpack.c.l.b16 %v3842
    %v5256 = vunpack.c.l.b16 %v3843
    %v5257 = vunpack.c.l.b16 %v3844
    %v5258 = vunpack.c.l.b16 %v3845
    %v5259 = vunpack.c.l.b16 %v3846
    %v5260 = vunpack.c.l.b16 %v3847
    %v5261 = vunpack.c.l.b16 %v3848
    %v5262 = vunpack.c.l.b16 %v3849
    %v5263 = vunpack.c.l.b16 %v3850
    %v5264 = vunpack.c.l.b16 %v3851
    %v5265 = vunpack.c.l.b16 %v3852
    %v5266 = vunpack.c.l.b16 %v3853
    %v5267 = vunpack.c.l.b16 %v3854
    %v5268 = vunpack.c.l.b16 %v3855
    %v5269 = vunpack.c.l.b16 %v3856
    %v5270 = vunpack.c.l.b16 %v3857
    %v5271 = vunpack.c.l.b16 %v3858
    %v5272 = vunpack.c.l.b16 %v3859
    %v5273 = vunpack.c.l.b16 %v3860
    %v5274 = vunpack.c.l.b16 %v3861
    %v5275 = vunpack.c.l.b16 %v3862
    %v5276 = vunpack.c.l.b16 %v3863
    %v5277 = vunpack.c.l.b16 %v3864
    %v5278 = vunpack.c.l.b16 %v3865
    %v5279 = vunpack.c.l.b16 %v3866
    %v5280 = vunpack.c.l.b16 %v3867
    %v5281 = vunpack.c.l.b16 %v3868
    %v5282 = vunpack.c.l.b16 %v3869
    %v5283 = vunpack.c.l.b16 %v3870
    %v5284 = vunpack.c.l.b16 %v3871
    %v5285 = vunpack.c.l.b16 %v3872
    %v5286 = vunpack.c.l.b16 %v3873
    %v5287 = vunpack.c.l.b16 %v3874
    %v5288 = vunpack.c.l.b16 %v3875
    %v5289 = vunpack.c.l.b16 %v3876
    %v5290 = vunpack.c.l.b16 %v3877
    %v5291 = vunpack.c.l.b16 %v3878
    %v5292 = vunpack.c.l.b16 %v3879
    %v5293 = vunpack.c.l.b16 %v3880
    %v5294 = vunpack.c.l.b16 %v3881
    %v5295 = vunpack.c.l.b16 %v3882
    %v5296 = vunpack.c.l.b16 %v3883
    %v5297 = vunpack.c.l.b16 %v3884
    %v5298 = vunpack.c.l.b16 %v3885
    %v5299 = vunpack.c.l.b16 %v3886
    %v5300 = vunpack.c.l.b16 %v3887
    %v5301 = vunpack.c.l.b16 %v3888
    %v5302 = vunpack.c.l.b16 %v3889
    %v5303 = vunpack.c.l.b16 %v3890
    %v5304 = vunpack.c.l.b16 %v3891
    %v5305 = vunpack.c.l.b16 %v3892
    %v5306 = vunpack.c.l.b16 %v3893
    %v5307 = vunpack.c.l.b16 %v3894
    %v5308 = vunpack.c.l.b16 %v3895
    %v5309 = vunpack.c.l.b16 %v3896
    %v5310 = vunpack.c.l.b16 %v3897
    %v5311 = vunpack.c.l.b16 %v3898
    %v5312 = vunpack.c.l.b16 %v3899
    %v5313 = vunpack.c.l.b16 %v3900
    %v5314 = vunpack.c.l.b16 %v3901
    %v5315 = vunpack.c.l.b16 %v3902
    %v5316 = vunpack.c.l.b16 %v3903
    %v5317 = vunpack.c.l.b16 %v3904
    %v5318 = vunpack.c.l.b16 %v3905
    %v5319 = vunpack.c.l.b16 %v3906
    %v5320 = vunpack.c.l.b16 %v3907
    %v5321 = vunpack.c.l.b16 %v3908
    %v5322 = vunpack.c.l.b16 %v3909
    %v5323 = vunpack.c.l.b16 %v3910
    %v5324 = vunpack.c.l.b16 %v3911
    %v5325 = vunpack.c.l.b16 %v3912
    %v5326 = vunpack.c.l.b16 %v3913
    %v5327 = vunpack.c.l.b16 %v3914
    %v5328 = vunpack.c.l.b16 %v3915
    %v5329 = vunpack.c.l.b16 %v3916
    %v5330 = vunpack.c.l.b16 %v3917
    %v5331 = vunpack.c.l.b16 %v3918
    %v5332 = vunpack.c.l.b16 %v3919
    %v5333 = vunpack.c.l.b16 %v3920
    %v5334 = vunpack.c.l.b16 %v3921
    %v5335 = vunpack.c.l.b16 %v3922
    %v5336 = vunpack.c.l.b16 %v3923
    %v5337 = vunpack.c.l.b16 %v3924
    %v5338 = vunpack.c.l.b16 %v3925
    %v5339 = vunpack.c.l.b16 %v3926
    %v5340 = vunpack.c.l.b16 %v3927
    %v5341 = vunpack.c.l.b16 %v3928
    %v5342 = vunpack.c.l.b16 %v3929
    %v5343 = vunpack.c.l.b16 %v3930
    %v5344 = vunpack.c.l.b16 %v3931
    %v5345 = vunpack.c.l.b16 %v3932
    %v5346 = vunpack.c.l.b16 %v3933
    %v5347 = vunpack.c.l.b16 %v3934
    %v5348 = vpack.c.b16 %v4773, %v4772
    %v5349 = vpack.c.b16 %v4775, %v4774
    %v5350 = vpack.c.b16 %v4777, %v4776
    %v5351 = vpack.c.b16 %v4779, %v4778
    %v5352 = vpack.c.b16 %v4781, %v4780
    %v5353 = vpack.c.b16 %v4783, %v4782
    %v5354 = vpack.c.b16 %v4785, %v4784
    %v5355 = vpack.c.b16 %v4787, %v4786
    %v5356 = vpack.c.b16 %v4789, %v4788
    %v5357 = vpack.c.b16 %v4791, %v4790
    %v5358 = vpack.c.b16 %v4793, %v4792
    %v5359 = vpack.c.b16 %v4795, %v4794
    %v5360 = vpack.c.b16 %v4797, %v4796
    %v5361 = vpack.c.b16 %v4799, %v4798
    %v5362 = vpack.c.b16 %v4801, %v4800
    %v5363 = vpack.c.b16 %v4803, %v4802
    %v5364 = vpack.c.b16 %v4805, %v4804
    %v5365 = vpack.c.b16 %v4807, %v4806
    %v5366 = vpack.c.b16 %v4809, %v4808
    %v5367 = vpack.c.b16 %v4811, %v4810
    %v5368 = vpack.c.b16 %v4813, %v4812
    %v5369 = vpack.c.b16 %v4815, %v4814
    %v5370 = vpack.c.b16 %v4817, %v4816
    %v5371 = vpack.c.b16 %v4819, %v4818
    %v5372 = vpack.c.b16 %v4821, %v4820
    %v5373 = vpack.c.b16 %v4823, %v4822
    %v5374 = vpack.c.b16 %v4825, %v4824
    %v5375 = vpack.c.b16 %v4827, %v4826
    %v5376 = vpack.c.b16 %v4829, %v4828
    %v5377 = vpack.c.b16 %v4831, %v4830
    %v5378 = vpack.c.b16 %v4833, %v4832
    %v5379 = vpack.c.b16 %v4835, %v4834
    %v5380 = vpack.c.b16 %v4837, %v4836
    %v5381 = vpack.c.b16 %v4839, %v4838
    %v5382 = vpack.c.b16 %v4841, %v4840
    %v5383 = vpack.c.b16 %v4843, %v4842
    %v5384 = vpack.c.b16 %v4845, %v4844
    %v5385 = vpack.c.b16 %v4847, %v4846
    %v5386 = vpack.c.b16 %v4849, %v4848
    %v5387 = vpack.c.b16 %v4851, %v4850
    %v5388 = vpack.c.b16 %v4853, %v4852
    %v5389 = vpack.c.b16 %v4855, %v4854
    %v5390 = vpack.c.b16 %v4857, %v4856
    %v5391 = vpack.c.b16 %v4859, %v4858
    %v5392 = vpack.c.b16 %v4861, %v4860
    %v5393 = vpack.c.b16 %v4863, %v4862
    %v5394 = vpack.c.b16 %v4865, %v4864
    %v5395 = vpack.c.b16 %v4867, %v4866
    %v5396 = vpack.c.b16 %v4869, %v4868
    %v5397 = vpack.c.b16 %v4871, %v4870
    %v5398 = vpack.c.b16 %v4873, %v4872
    %v5399 = vpack.c.b16 %v4875, %v4874
    %v5400 = vpack.c.b16 %v4877, %v4876
    %v5401 = vpack.c.b16 %v4879, %v4878
    %v5402 = vpack.c.b16 %v4881, %v4880
    %v5403 = vpack.c.b16 %v4883, %v4882
    %v5404 = vpack.c.b16 %v4885, %v4884
    %v5405 = vpack.c.b16 %v4887, %v4886
    %v5406 = vpack.c.b16 %v4889, %v4888
    %v5407 = vpack.c.b16 %v4891, %v4890
    %v5408 = vpack.c.b16 %v4893, %v4892
    %v5409 = vpack.c.b16 %v4895, %v4894
    %v5410 = vpack.c.b16 %v4897, %v4896
    %v5411 = vpack.c.b16 %v4899, %v4898
    %v5412 = vpack.c.b16 %v4901, %v4900
    %v5413 = vpack.c.b16 %v4903, %v4902
    %v5414 = vpack.c.b16 %v4905, %v4904
    %v5415 = vpack.c.b16 %v4907, %v4906
    %v5416 = vpack.c.b16 %v4909, %v4908
    %v5417 = vpack.c.b16 %v4911, %v4910
    %v5418 = vpack.c.b16 %v4913, %v4912
    %v5419 = vpack.c.b16 %v4915, %v4914
    %v5420 = vpack.c.b16 %v4917, %v4916
    %v5421 = vpack.c.b16 %v4919, %v4918
    %v5422 = vpack.c.b16 %v4921, %v4920
    %v5423 = vpack.c.b16 %v4923, %v4922
    %v5424 = vpack.c.b16 %v4925, %v4924
    %v5425 = vpack.c.b16 %v4927, %v4926
    %v5426 = vpack.c.b16 %v4929, %v4928
    %v5427 = vpack.c.b16 %v4931, %v4930
    %v5428 = vpack.c.b16 %v4933, %v4932
    %v5429 = vpack.c.b16 %v4935, %v4934
    %v5430 = vpack.c.b16 %v4937, %v4936
    %v5431 = vpack.c.b16 %v4939, %v4938
    %v5432 = vpack.c.b16 %v4941, %v4940
    %v5433 = vpack.c.b16 %v4943, %v4942
    %v5434 = vpack.c.b16 %v4945, %v4944
    %v5435 = vpack.c.b16 %v4947, %v4946
    %v5436 = vpack.c.b16 %v4949, %v4948
    %v5437 = vpack.c.b16 %v4951, %v4950
    %v5438 = vpack.c.b16 %v4953, %v4952
    %v5439 = vpack.c.b16 %v4955, %v4954
    %v5440 = vpack.c.b16 %v4957, %v4956
    %v5441 = vpack.c.b16 %v4959, %v4958
    %v5442 = vpack.c.b16 %v4961, %v4960
    %v5443 = vpack.c.b16 %v4963, %v4962
    %v5444 = vpack.c.b16 %v4965, %v4964
    %v5445 = vpack.c.b16 %v4967, %v4966
    %v5446 = vpack.c.b16 %v4969, %v4968
    %v5447 = vpack.c.b16 %v4971, %v4970
    %v5448 = vpack.c.b16 %v4973, %v4972
    %v5449 = vpack.c.b16 %v4975, %v4974
    %v5450 = vpack.c.b16 %v4977, %v4976
    %v5451 = vpack.c.b16 %v4979, %v4978
    %v5452 = vpack.c.b16 %v4981, %v4980
    %v5453 = vpack.c.b16 %v4983, %v4982
    %v5454 = vpack.c.b16 %v4985, %v4984
    %v5455 = vpack.c.b16 %v4987, %v4986
    %v5456 = vpack.c.b16 %v4989, %v4988
    %v5457 = vpack.c.b16 %v4991, %v4990
    %v5458 = vpack.c.b16 %v4993, %v4992
    %v5459 = vpack.c.b16 %v4995, %v4994
    %v5460 = vpack.c.b16 %v4997, %v4996
    %v5461 = vpack.c.b16 %v4999, %v4998
    %v5462 = vpack.c.b16 %v5001, %v5000
    %v5463 = vpack.c.b16 %v5003, %v5002
    %v5464 = vpack.c.b16 %v5005, %v5004
    %v5465 = vpack.c.b16 %v5007, %v5006
    %v5466 = vpack.c.b16 %v5009, %v5008
    %v5467 = vpack.c.b16 %v5011, %v5010
    %v5468 = vpack.c.b16 %v5013, %v5012
    %v5469 = vpack.c.b16 %v5015, %v5014
    %v5470 = vpack.c.b16 %v5017, %v5016
    %v5471 = vpack.c.b16 %v5019, %v5018
    %v5472 = vpack.c.b16 %v5021, %v5020
    %v5473 = vpack.c.b16 %v5023, %v5022
    %v5474 = vpack.c.b16 %v5025, %v5024
    %v5475 = vpack.c.b16 %v5027, %v5026
    %v5476 = vpack.c.b16 %v5029, %v5028
    %v5477 = vpack.c.b16 %v5031, %v5030
    %v5478 = vpack.c.b16 %v5033, %v5032
    %v5479 = vpack.c.b16 %v5035, %v5034
    %v5480 = vpack.c.b16 %v5037, %v5036
    %v5481 = vpack.c.b16 %v5039, %v5038
    %v5482 = vpack.c.b16 %v5041, %v5040
    %v5483 = vpack.c.b16 %v5043, %v5042
    %v5484 = vpack.c.b16 %v5045, %v5044
    %v5485 = vpack.c.b16 %v5047, %v5046
    %v5486 = vpack.c.b16 %v5049, %v5048
    %v5487 = vpack.c.b16 %v5051, %v5050
    %v5488 = vpack.c.b16 %v5053, %v5052
    %v5489 = vpack.c.b16 %v5055, %v5054
    %v5490 = vpack.c.b16 %v5057, %v5056
    %v5491 = vpack.c.b16 %v5059, %v5058
    %v5492 = vpack.c.b16 %v5061, %v5060
    %v5493 = vpack.c.b16 %v5063, %v5062
    %v5494 = vpack.c.b16 %v5065, %v5064
    %v5495 = vpack.c.b16 %v5067, %v5066
    %v5496 = vpack.c.b16 %v5069, %v5068
    %v5497 = vpack.c.b16 %v5071, %v5070
    %v5498 = vpack.c.b16 %v5073, %v5072
    %v5499 = vpack.c.b16 %v5075, %v5074
    %v5500 = vpack.c.b16 %v5077, %v5076
    %v5501 = vpack.c.b16 %v5079, %v5078
    %v5502 = vpack.c.b16 %v5081, %v5080
    %v5503 = vpack.c.b16 %v5083, %v5082
    %v5504 = vpack.c.b16 %v5085, %v5084
    %v5505 = vpack.c.b16 %v5087, %v5086
    %v5506 = vpack.c.b16 %v5089, %v5088
    %v5507 = vpack.c.b16 %v5091, %v5090
    %v5508 = vpack.c.b16 %v5093, %v5092
    %v5509 = vpack.c.b16 %v5095, %v5094
    %v5510 = vpack.c.b16 %v5097, %v5096
    %v5511 = vpack.c.b16 %v5099, %v5098
    %v5512 = vpack.c.b16 %v5101, %v5100
    %v5513 = vpack.c.b16 %v5103, %v5102
    %v5514 = vpack.c.b16 %v5105, %v5104
    %v5515 = vpack.c.b16 %v5107, %v5106
    %v5516 = vpack.c.b16 %v5109, %v5108
    %v5517 = vpack.c.b16 %v5111, %v5110
    %v5518 = vpack.c.b16 %v5113, %v5112
    %v5519 = vpack.c.b16 %v5115, %v5114
    %v5520 = vpack.c.b16 %v5117, %v5116
    %v5521 = vpack.c.b16 %v5119, %v5118
    %v5522 = vpack.c.b16 %v5121, %v5120
    %v5523 = vpack.c.b16 %v5123, %v5122
    %v5524 = vpack.c.b16 %v5125, %v5124
    %v5525 = vpack.c.b16 %v5127, %v5126
    %v5526 = vpack.c.b16 %v5129, %v5128
    %v5527 = vpack.c.b16 %v5131, %v5130
    %v5528 = vpack.c.b16 %v5133, %v5132
    %v5529 = vpack.c.b16 %v5135, %v5134
    %v5530 = vpack.c.b16 %v5137, %v5136
    %v5531 = vpack.c.b16 %v5139, %v5138
    %v5532 = vpack.c.b16 %v5141, %v5140
    %v5533 = vpack.c.b16 %v5143, %v5142
    %v5534 = vpack.c.b16 %v5145, %v5144
    %v5535 = vpack.c.b16 %v5147, %v5146
    %v5536 = vpack.c.b16 %v5149, %v5148
    %v5537 = vpack.c.b16 %v5151, %v5150
    %v5538 = vpack.c.b16 %v5153, %v5152
    %v5539 = vpack.c.b16 %v5155, %v5154
    %v5540 = vpack.c.b16 %v5157, %v5156
    %v5541 = vpack.c.b16 %v5159, %v5158
    %v5542 = vpack.c.b16 %v5161, %v5160
    %v5543 = vpack.c.b16 %v5163, %v5162
    %v5544 = vpack.c.b16 %v5165, %v5164
    %v5545 = vpack.c.b16 %v5167, %v5166
    %v5546 = vpack.c.b16 %v5169, %v5168
    %v5547 = vpack.c.b16 %v5171, %v5170
    %v5548 = vpack.c.b16 %v5173, %v5172
    %v5549 = vpack.c.b16 %v5175, %v5174
    %v5550 = vpack.c.b16 %v5177, %v5176
    %v5551 = vpack.c.b16 %v5179, %v5178
    %v5552 = vpack.c.b16 %v5181, %v5180
    %v5553 = vpack.c.b16 %v5183, %v5182
    %v5554 = vpack.c.b16 %v5185, %v5184
    %v5555 = vpack.c.b16 %v5187, %v5186
    %v5556 = vpack.c.b16 %v5189, %v5188
    %v5557 = vpack.c.b16 %v5191, %v5190
    %v5558 = vpack.c.b16 %v5193, %v5192
    %v5559 = vpack.c.b16 %v5195, %v5194
    %v5560 = vpack.c.b16 %v5197, %v5196
    %v5561 = vpack.c.b16 %v5199, %v5198
    %v5562 = vpack.c.b16 %v5201, %v5200
    %v5563 = vpack.c.b16 %v5203, %v5202
    %v5564 = vpack.c.b16 %v5205, %v5204
    %v5565 = vpack.c.b16 %v5207, %v5206
    %v5566 = vpack.c.b16 %v5209, %v5208
    %v5567 = vpack.c.b16 %v5211, %v5210
    %v5568 = vpack.c.b16 %v5213, %v5212
    %v5569 = vpack.c.b16 %v5215, %v5214
    %v5570 = vpack.c.b16 %v5217, %v5216
    %v5571 = vpack.c.b16 %v5219, %v5218
    %v5572 = vpack.c.b16 %v5221, %v5220
    %v5573 = vpack.c.b16 %v5223, %v5222
    %v5574 = vpack.c.b16 %v5225, %v5224
    %v5575 = vpack.c.b16 %v5227, %v5226
    %v5576 = vpack.c.b16 %v5229, %v5228
    %v5577 = vpack.c.b16 %v5231, %v5230
    %v5578 = vpack.c.b16 %v5233, %v5232
    %v5579 = vpack.c.b16 %v5235, %v5234
    %v5580 = vpack.c.b16 %v5237, %v5236
    %v5581 = vpack.c.b16 %v5239, %v5238
    %v5582 = vpack.c.b16 %v5241, %v5240
    %v5583 = vpack.c.b16 %v5243, %v5242
    %v5584 = vpack.c.b16 %v5245, %v5244
    %v5585 = vpack.c.b16 %v5247, %v5246
    %v5586 = vpack.c.b16 %v5249, %v5248
    %v5587 = vpack.c.b16 %v5251, %v5250
    %v5588 = vpack.c.b16 %v5253, %v5252
    %v5589 = vpack.c.b16 %v5255, %v5254
    %v5590 = vpack.c.b16 %v5257, %v5256
    %v5591 = vpack.c.b16 %v5259, %v5258
    %v5592 = vpack.c.b16 %v5261, %v5260
    %v5593 = vpack.c.b16 %v5263, %v5262
    %v5594 = vpack.c.b16 %v5265, %v5264
    %v5595 = vpack.c.b16 %v5267, %v5266
    %v5596 = vpack.c.b16 %v5269, %v5268
    %v5597 = vpack.c.b16 %v5271, %v5270
    %v5598 = vpack.c.b16 %v5273, %v5272
    %v5599 = vpack.c.b16 %v5275, %v5274
    %v5600 = vpack.c.b16 %v5277, %v5276
    %v5601 = vpack.c.b16 %v5279, %v5278
    %v5602 = vpack.c.b16 %v5281, %v5280
    %v5603 = vpack.c.b16 %v5283, %v5282
    %v5604 = vpack.c.b16 %v5285, %v5284
    %v5605 = vpack.c.b16 %v5287, %v5286
    %v5606 = vpack.c.b16 %v5289, %v5288
    %v5607 = vpack.c.b16 %v5291, %v5290
    %v5608 = vpack.c.b16 %v5293, %v5292
    %v5609 = vpack.c.b16 %v5295, %v5294
    %v5610 = vpack.c.b16 %v5297, %v5296
    %v5611 = vpack.c.b16 %v5299, %v5298
    %v5612 = vpack.c.b16 %v5301, %v5300
    %v5613 = vpack.c.b16 %v5303, %v5302
    %v5614 = vpack.c.b16 %v5305, %v5304
    %v5615 = vpack.c.b16 %v5307, %v5306
    %v5616 = vpack.c.b16 %v5309, %v5308
    %v5617 = vpack.c.b16 %v5311, %v5310
    %v5618 = vpack.c.b16 %v5313, %v5312
    %v5619 = vpack.c.b16 %v5315, %v5314
    %v5620 = vpack.c.b16 %v5317, %v5316
    %v5621 = vpack.c.b16 %v5319, %v5318
    %v5622 = vpack.c.b16 %v5321, %v5320
    %v5623 = vpack.c.b16 %v5323, %v5322
    %v5624 = vpack.c.b16 %v5325, %v5324
    %v5625 = vpack.c.b16 %v5327, %v5326
    %v5626 = vpack.c.b16 %v5329, %v5328
    %v5627 = vpack.c.b16 %v5331, %v5330
    %v5628 = vpack.c.b16 %v5333, %v5332
    %v5629 = vpack.c.b16 %v5335, %v5334
    %v5630 = vpack.c.b16 %v5337, %v5336
    %v5631 = vpack.c.b16 %v5339, %v5338
    %v5632 = vpack.c.b16 %v5341, %v5340
    %v5633 = vpack.c.b16 %v5343, %v5342
    %v5634 = vpack.c.b16 %v5345, %v5344
    %v5635 = vpack.c.b16 %v5347, %v5346
    %5924 = vmatprep.subr.bf16.mxu0 0
    %5925 = vmatpush1.bf16.msra.mxu0 %v5355
    %5926 = vmatprep.subr.bf16.mxu0 0
    %5927 = vmatpush1.bf16.msra.mxu0 %v5354
    %5928 = vmatprep.subr.bf16.mxu0 0
    %5929 = vmatpush1.bf16.msra.mxu0 %v5353
    %5930 = vmatprep.subr.bf16.mxu0 0
    %5931 = vmatpush1.bf16.msra.mxu0 %v5352
    %5932 = vmatprep.subr.bf16.mxu0 0
    %5933 = vmatpush1.bf16.msra.mxu0 %v5351
    %5934 = vmatprep.subr.bf16.mxu0 0
    %5935 = vmatpush1.bf16.msra.mxu0 %v5350
    %5936 = vmatprep.subr.bf16.mxu0 0
    %5937 = vmatpush1.bf16.msra.mxu0 %v5349
    %5938 = vmatprep.subr.bf16.mxu0 0
    %5939 = vmatpush1.bf16.msra.mxu0 %v5348
    %5940 = vmatprep.subr.bf16.mxu0 0
    %5941 = vmatpush2.bf16.msra.mxu0 %v5363
    %5942 = vmatprep.subr.bf16.mxu0 0
    %5943 = vmatpush2.bf16.msra.mxu0 %v5362
    %5944 = vmatprep.subr.bf16.mxu0 0
    %5945 = vmatpush2.bf16.msra.mxu0 %v5361
    %5946 = vmatprep.subr.bf16.mxu0 0
    %5947 = vmatpush2.bf16.msra.mxu0 %v5360
    %5948 = vmatprep.subr.bf16.mxu0 0
    %5949 = vmatpush2.bf16.msra.mxu0 %v5359
    %5950 = vmatprep.subr.bf16.mxu0 0
    %5951 = vmatpush2.bf16.msra.mxu0 %v5358
    %5952 = vmatprep.subr.bf16.mxu0 0
    %5953 = vmatpush2.bf16.msra.mxu0 %v5357
    %5954 = vmatprep.subr.bf16.mxu0 0
    %5955 = vmatpush2.bf16.msra.mxu0 %v5356
    %5956 = vmatprep.mubr.bf16.mxu0 %v3977
    %5957 = vmatmul.mubr.bf16.gmra.mxu0 %v3963
    %v5958 = vpop.f32.mrf.mxu0
    %v5959 = vadd.f32 0.0, %v5958
    %v5960 = vpop.f32.mrf.mxu0
    %v5961 = vpop.f32.mrf.mxu0
    %v5962 = vpop.f32.mrf.mxu0
    %5963 = vdwg.mxu0
    %5964 = vmatprep.subr.bf16.mxu0 0
    %5965 = vmatpush1.bf16.msra.mxu0 %v5371
    %5966 = vmatprep.subr.bf16.mxu0 0
    %5967 = vmatpush1.bf16.msra.mxu0 %v5370
    %5968 = vmatprep.subr.bf16.mxu0 0
    %5969 = vmatpush1.bf16.msra.mxu0 %v5369
    %5970 = vmatprep.subr.bf16.mxu0 0
    %5971 = vmatpush1.bf16.msra.mxu0 %v5368
    %5972 = vmatprep.subr.bf16.mxu0 0
    %5973 = vmatpush1.bf16.msra.mxu0 %v5367
    %5974 = vmatprep.subr.bf16.mxu0 0
    %5975 = vmatpush1.bf16.msra.mxu0 %v5366
    %5976 = vmatprep.subr.bf16.mxu0 0
    %5977 = vmatpush1.bf16.msra.mxu0 %v5365
    %5978 = vmatprep.subr.bf16.mxu0 0
    %5979 = vmatpush1.bf16.msra.mxu0 %v5364
    %5980 = vmatprep.subr.bf16.mxu0 0
    %5981 = vmatpush2.bf16.msra.mxu0 %v5379
    %5982 = vmatprep.subr.bf16.mxu0 0
    %5983 = vmatpush2.bf16.msra.mxu0 %v5378
    %5984 = vmatprep.subr.bf16.mxu0 0
    %5985 = vmatpush2.bf16.msra.mxu0 %v5377
    %5986 = vmatprep.subr.bf16.mxu0 0
    %5987 = vmatpush2.bf16.msra.mxu0 %v5376
    %5988 = vmatprep.subr.bf16.mxu0 0
    %5989 = vmatpush2.bf16.msra.mxu0 %v5375
    %5990 = vmatprep.subr.bf16.mxu0 0
    %5991 = vmatpush2.bf16.msra.mxu0 %v5374
    %5992 = vmatprep.subr.bf16.mxu0 0
    %5993 = vmatpush2.bf16.msra.mxu0 %v5373
    %5994 = vmatprep.subr.bf16.mxu0 0
    %5995 = vmatpush2.bf16.msra.mxu0 %v5372
    %5996 = vmatprep.mubr.bf16.mxu0 %v3987
    %5997 = vmatmul.mubr.bf16.gmra.mxu0 %v3985
    %v5998 = vpop.f32.mrf.mxu0
    %v5999 = vadd.f32 %v5959, %v5998
    %v6000 = vpop.f32.mrf.mxu0
    %v6001 = vpop.f32.mrf.mxu0
    %v6002 = vpop.f32.mrf.mxu0
    %6003 = vdwg.mxu0
    %6004 = vmatprep.subr.bf16.mxu0 0
    %6005 = vmatpush1.bf16.msra.mxu0 %v5387
    %6006 = vmatprep.subr.bf16.mxu0 0
    %6007 = vmatpush1.bf16.msra.mxu0 %v5386
    %6008 = vmatprep.subr.bf16.mxu0 0
    %6009 = vmatpush1.bf16.msra.mxu0 %v5385
    %6010 = vmatprep.subr.bf16.mxu0 0
    %6011 = vmatpush1.bf16.msra.mxu0 %v5384
    %6012 = vmatprep.subr.bf16.mxu0 0
    %6013 = vmatpush1.bf16.msra.mxu0 %v5383
    %6014 = vmatprep.subr.bf16.mxu0 0
    %6015 = vmatpush1.bf16.msra.mxu0 %v5382
    %6016 = vmatprep.subr.bf16.mxu0 0
    %6017 = vmatpush1.bf16.msra.mxu0 %v5381
    %6018 = vmatprep.subr.bf16.mxu0 0
    %6019 = vmatpush1.bf16.msra.mxu0 %v5380
    %6020 = vmatprep.subr.bf16.mxu0 0
    %6021 = vmatpush2.bf16.msra.mxu0 %v5395
    %6022 = vmatprep.subr.bf16.mxu0 0
    %6023 = vmatpush2.bf16.msra.mxu0 %v5394
    %6024 = vmatprep.subr.bf16.mxu0 0
    %6025 = vmatpush2.bf16.msra.mxu0 %v5393
    %6026 = vmatprep.subr.bf16.mxu0 0
    %6027 = vmatpush2.bf16.msra.mxu0 %v5392
    %6028 = vmatprep.subr.bf16.mxu0 0
    %6029 = vmatpush2.bf16.msra.mxu0 %v5391
    %6030 = vmatprep.subr.bf16.mxu0 0
    %6031 = vmatpush2.bf16.msra.mxu0 %v5390
    %6032 = vmatprep.subr.bf16.mxu0 0
    %6033 = vmatpush2.bf16.msra.mxu0 %v5389
    %6034 = vmatprep.subr.bf16.mxu0 0
    %6035 = vmatpush2.bf16.msra.mxu0 %v5388
    %6036 = vmatprep.mubr.bf16.mxu0 %v3984
    %6037 = vmatmul.mubr.bf16.gmra.mxu0 %v3970
    %v6038 = vpop.f32.mrf.mxu0
    %v6039 = vadd.f32 %v5999, %v6038
    %v6040 = vpop.f32.mrf.mxu0
    %v6041 = vpop.f32.mrf.mxu0
    %v6042 = vpop.f32.mrf.mxu0
    %6043 = vdwg.mxu0
    %6044 = vmatprep.subr.bf16.mxu0 0
    %6045 = vmatpush1.bf16.msra.mxu0 %v5403
    %6046 = vmatprep.subr.bf16.mxu0 0
    %6047 = vmatpush1.bf16.msra.mxu0 %v5402
    %6048 = vmatprep.subr.bf16.mxu0 0
    %6049 = vmatpush1.bf16.msra.mxu0 %v5401
    %6050 = vmatprep.subr.bf16.mxu0 0
    %6051 = vmatpush1.bf16.msra.mxu0 %v5400
    %6052 = vmatprep.subr.bf16.mxu0 0
    %6053 = vmatpush1.bf16.msra.mxu0 %v5399
    %6054 = vmatprep.subr.bf16.mxu0 0
    %6055 = vmatpush1.bf16.msra.mxu0 %v5398
    %6056 = vmatprep.subr.bf16.mxu0 0
    %6057 = vmatpush1.bf16.msra.mxu0 %v5397
    %6058 = vmatprep.subr.bf16.mxu0 0
    %6059 = vmatpush1.bf16.msra.mxu0 %v5396
    %6060 = vmatprep.subr.bf16.mxu0 0
    %6061 = vmatpush2.bf16.msra.mxu0 %v5411
    %6062 = vmatprep.subr.bf16.mxu0 0
    %6063 = vmatpush2.bf16.msra.mxu0 %v5410
    %6064 = vmatprep.subr.bf16.mxu0 0
    %6065 = vmatpush2.bf16.msra.mxu0 %v5409
    %6066 = vmatprep.subr.bf16.mxu0 0
    %6067 = vmatpush2.bf16.msra.mxu0 %v5408
    %6068 = vmatprep.subr.bf16.mxu0 0
    %6069 = vmatpush2.bf16.msra.mxu0 %v5407
    %6070 = vmatprep.subr.bf16.mxu0 0
    %6071 = vmatpush2.bf16.msra.mxu0 %v5406
    %6072 = vmatprep.subr.bf16.mxu0 0
    %6073 = vmatpush2.bf16.msra.mxu0 %v5405
    %6074 = vmatprep.subr.bf16.mxu0 0
    %6075 = vmatpush2.bf16.msra.mxu0 %v5404
    %6076 = vmatprep.mubr.bf16.mxu0 %v3988
    %6077 = vmatmul.mubr.bf16.gmra.mxu0 %v3986
    %v6078 = vpop.f32.mrf.mxu0
    %v6079 = vadd.f32 %v6039, %v6078
    %v6080 = vpop.f32.mrf.mxu0
    %v6081 = vpop.f32.mrf.mxu0
    %v6082 = vpop.f32.mrf.mxu0
    %6083 = vdwg.mxu0
    %6084 = vmatprep.subr.bf16.mxu0 0
    %6085 = vmatpush1.bf16.msra.mxu0 %v5419
    %6086 = vmatprep.subr.bf16.mxu0 0
    %6087 = vmatpush1.bf16.msra.mxu0 %v5418
    %6088 = vmatprep.subr.bf16.mxu0 0
    %6089 = vmatpush1.bf16.msra.mxu0 %v5417
    %6090 = vmatprep.subr.bf16.mxu0 0
    %6091 = vmatpush1.bf16.msra.mxu0 %v5416
    %6092 = vmatprep.subr.bf16.mxu0 0
    %6093 = vmatpush1.bf16.msra.mxu0 %v5415
    %6094 = vmatprep.subr.bf16.mxu0 0
    %6095 = vmatpush1.bf16.msra.mxu0 %v5414
    %6096 = vmatprep.subr.bf16.mxu0 0
    %6097 = vmatpush1.bf16.msra.mxu0 %v5413
    %6098 = vmatprep.subr.bf16.mxu0 0
    %6099 = vmatpush1.bf16.msra.mxu0 %v5412
    %6100 = vmatprep.subr.bf16.mxu0 0
    %6101 = vmatpush2.bf16.msra.mxu0 %v5427
    %6102 = vmatprep.subr.bf16.mxu0 0
    %6103 = vmatpush2.bf16.msra.mxu0 %v5426
    %6104 = vmatprep.subr.bf16.mxu0 0
    %6105 = vmatpush2.bf16.msra.mxu0 %v5425
    %6106 = vmatprep.subr.bf16.mxu0 0
    %6107 = vmatpush2.bf16.msra.mxu0 %v5424
    %6108 = vmatprep.subr.bf16.mxu0 0
    %6109 = vmatpush2.bf16.msra.mxu0 %v5423
    %6110 = vmatprep.subr.bf16.mxu0 0
    %6111 = vmatpush2.bf16.msra.mxu0 %v5422
    %6112 = vmatprep.subr.bf16.mxu0 0
    %6113 = vmatpush2.bf16.msra.mxu0 %v5421
    %6114 = vmatprep.subr.bf16.mxu0 0
    %6115 = vmatpush2.bf16.msra.mxu0 %v5420
    %6116 = vmatprep.mubr.bf16.mxu0 %v4026
    %6117 = vmatmul.mubr.bf16.gmra.mxu0 %v4012
    %v6118 = vpop.f32.mrf.mxu0
    %v6119 = vadd.f32 %v6079, %v6118
    %v6120 = vpop.f32.mrf.mxu0
    %v6121 = vpop.f32.mrf.mxu0
    %v6122 = vpop.f32.mrf.mxu0
    %6123 = vdwg.mxu0
    %6124 = vmatprep.subr.bf16.mxu0 0
    %6125 = vmatpush1.bf16.msra.mxu0 %v5435
    %6126 = vmatprep.subr.bf16.mxu0 0
    %6127 = vmatpush1.bf16.msra.mxu0 %v5434
    %6128 = vmatprep.subr.bf16.mxu0 0
    %6129 = vmatpush1.bf16.msra.mxu0 %v5433
    %6130 = vmatprep.subr.bf16.mxu0 0
    %6131 = vmatpush1.bf16.msra.mxu0 %v5432
    %6132 = vmatprep.subr.bf16.mxu0 0
    %6133 = vmatpush1.bf16.msra.mxu0 %v5431
    %6134 = vmatprep.subr.bf16.mxu0 0
    %6135 = vmatpush1.bf16.msra.mxu0 %v5430
    %6136 = vmatprep.subr.bf16.mxu0 0
    %6137 = vmatpush1.bf16.msra.mxu0 %v5429
    %6138 = vmatprep.subr.bf16.mxu0 0
    %6139 = vmatpush1.bf16.msra.mxu0 %v5428
    %6140 = vmatprep.subr.bf16.mxu0 0
    %6141 = vmatpush2.bf16.msra.mxu0 %v5443
    %6142 = vmatprep.subr.bf16.mxu0 0
    %6143 = vmatpush2.bf16.msra.mxu0 %v5442
    %6144 = vmatprep.subr.bf16.mxu0 0
    %6145 = vmatpush2.bf16.msra.mxu0 %v5441
    %6146 = vmatprep.subr.bf16.mxu0 0
    %6147 = vmatpush2.bf16.msra.mxu0 %v5440
    %6148 = vmatprep.subr.bf16.mxu0 0
    %6149 = vmatpush2.bf16.msra.mxu0 %v5439
    %6150 = vmatprep.subr.bf16.mxu0 0
    %6151 = vmatpush2.bf16.msra.mxu0 %v5438
    %6152 = vmatprep.subr.bf16.mxu0 0
    %6153 = vmatpush2.bf16.msra.mxu0 %v5437
    %6154 = vmatprep.subr.bf16.mxu0 0
    %6155 = vmatpush2.bf16.msra.mxu0 %v5436
    %6156 = vmatprep.mubr.bf16.mxu0 %v4036
    %6157 = vmatmul.mubr.bf16.gmra.mxu0 %v4034
    %v6158 = vpop.f32.mrf.mxu0
    %v6159 = vadd.f32 %v6119, %v6158
    %v6160 = vpop.f32.mrf.mxu0
    %v6161 = vpop.f32.mrf.mxu0
    %v6162 = vpop.f32.mrf.mxu0
    %6163 = vdwg.mxu0
    %6164 = vmatprep.subr.bf16.mxu0 0
    %6165 = vmatpush1.bf16.msra.mxu0 %v5451
    %6166 = vmatprep.subr.bf16.mxu0 0
    %6167 = vmatpush1.bf16.msra.mxu0 %v5450
    %6168 = vmatprep.subr.bf16.mxu0 0
    %6169 = vmatpush1.bf16.msra.mxu0 %v5449
    %6170 = vmatprep.subr.bf16.mxu0 0
    %6171 = vmatpush1.bf16.msra.mxu0 %v5448
    %6172 = vmatprep.subr.bf16.mxu0 0
    %6173 = vmatpush1.bf16.msra.mxu0 %v5447
    %6174 = vmatprep.subr.bf16.mxu0 0
    %6175 = vmatpush1.bf16.msra.mxu0 %v5446
    %6176 = vmatprep.subr.bf16.mxu0 0
    %6177 = vmatpush1.bf16.msra.mxu0 %v5445
    %6178 = vmatprep.subr.bf16.mxu0 0
    %6179 = vmatpush1.bf16.msra.mxu0 %v5444
    %6180 = vmatprep.subr.bf16.mxu0 0
    %6181 = vmatpush2.bf16.msra.mxu0 %v5459
    %6182 = vmatprep.subr.bf16.mxu0 0
    %6183 = vmatpush2.bf16.msra.mxu0 %v5458
    %6184 = vmatprep.subr.bf16.mxu0 0
    %6185 = vmatpush2.bf16.msra.mxu0 %v5457
    %6186 = vmatprep.subr.bf16.mxu0 0
    %6187 = vmatpush2.bf16.msra.mxu0 %v5456
    %6188 = vmatprep.subr.bf16.mxu0 0
    %6189 = vmatpush2.bf16.msra.mxu0 %v5455
    %6190 = vmatprep.subr.bf16.mxu0 0
    %6191 = vmatpush2.bf16.msra.mxu0 %v5454
    %6192 = vmatprep.subr.bf16.mxu0 0
    %6193 = vmatpush2.bf16.msra.mxu0 %v5453
    %6194 = vmatprep.subr.bf16.mxu0 0
    %6195 = vmatpush2.bf16.msra.mxu0 %v5452
    %6196 = vmatprep.mubr.bf16.mxu0 %v4033
    %6197 = vmatmul.mubr.bf16.gmra.mxu0 %v4019
    %v6198 = vpop.f32.mrf.mxu0
    %v6199 = vadd.f32 %v6159, %v6198
    %v6200 = vpop.f32.mrf.mxu0
    %v6201 = vpop.f32.mrf.mxu0
    %v6202 = vpop.f32.mrf.mxu0
    %6203 = vdwg.mxu0
    %6204 = vmatprep.subr.bf16.mxu0 0
    %6205 = vmatpush1.bf16.msra.mxu0 %v5467
    %6206 = vmatprep.subr.bf16.mxu0 0
    %6207 = vmatpush1.bf16.msra.mxu0 %v5466
    %6208 = vmatprep.subr.bf16.mxu0 0
    %6209 = vmatpush1.bf16.msra.mxu0 %v5465
    %6210 = vmatprep.subr.bf16.mxu0 0
    %6211 = vmatpush1.bf16.msra.mxu0 %v5464
    %6212 = vmatprep.subr.bf16.mxu0 0
    %6213 = vmatpush1.bf16.msra.mxu0 %v5463
    %6214 = vmatprep.subr.bf16.mxu0 0
    %6215 = vmatpush1.bf16.msra.mxu0 %v5462
    %6216 = vmatprep.subr.bf16.mxu0 0
    %6217 = vmatpush1.bf16.msra.mxu0 %v5461
    %6218 = vmatprep.subr.bf16.mxu0 0
    %6219 = vmatpush1.bf16.msra.mxu0 %v5460
    %6220 = vmatprep.subr.bf16.mxu0 0
    %6221 = vmatpush2.bf16.msra.mxu0 %v5475
    %6222 = vmatprep.subr.bf16.mxu0 0
    %6223 = vmatpush2.bf16.msra.mxu0 %v5474
    %6224 = vmatprep.subr.bf16.mxu0 0
    %6225 = vmatpush2.bf16.msra.mxu0 %v5473
    %6226 = vmatprep.subr.bf16.mxu0 0
    %6227 = vmatpush2.bf16.msra.mxu0 %v5472
    %6228 = vmatprep.subr.bf16.mxu0 0
    %6229 = vmatpush2.bf16.msra.mxu0 %v5471
    %6230 = vmatprep.subr.bf16.mxu0 0
    %6231 = vmatpush2.bf16.msra.mxu0 %v5470
    %6232 = vmatprep.subr.bf16.mxu0 0
    %6233 = vmatpush2.bf16.msra.mxu0 %v5469
    %6234 = vmatprep.subr.bf16.mxu0 0
    %6235 = vmatpush2.bf16.msra.mxu0 %v5468
    %6236 = vmatprep.mubr.bf16.mxu0 %v4037
    %6237 = vmatmul.mubr.bf16.gmra.mxu0 %v4035
    %v6238 = vpop.f32.mrf.mxu0
    %v6239 = vadd.f32 %v6199, %v6238
    %v6240 = vpop.f32.mrf.mxu0
    %v6241 = vpop.f32.mrf.mxu0
    %v6242 = vpop.f32.mrf.mxu0
    %6243 = vdwg.mxu0
    %6244 = vmatprep.subr.bf16.mxu0 0
    %6245 = vmatpush1.bf16.msra.mxu0 %v5483
    %6246 = vmatprep.subr.bf16.mxu0 0
    %6247 = vmatpush1.bf16.msra.mxu0 %v5482
    %6248 = vmatprep.subr.bf16.mxu0 0
    %6249 = vmatpush1.bf16.msra.mxu0 %v5481
    %6250 = vmatprep.subr.bf16.mxu0 0
    %6251 = vmatpush1.bf16.msra.mxu0 %v5480
    %6252 = vmatprep.subr.bf16.mxu0 0
    %6253 = vmatpush1.bf16.msra.mxu0 %v5479
    %6254 = vmatprep.subr.bf16.mxu0 0
    %6255 = vmatpush1.bf16.msra.mxu0 %v5478
    %6256 = vmatprep.subr.bf16.mxu0 0
    %6257 = vmatpush1.bf16.msra.mxu0 %v5477
    %6258 = vmatprep.subr.bf16.mxu0 0
    %6259 = vmatpush1.bf16.msra.mxu0 %v5476
    %6260 = vmatprep.subr.bf16.mxu0 0
    %6261 = vmatpush2.bf16.msra.mxu0 %v5491
    %6262 = vmatprep.subr.bf16.mxu0 0
    %6263 = vmatpush2.bf16.msra.mxu0 %v5490
    %6264 = vmatprep.subr.bf16.mxu0 0
    %6265 = vmatpush2.bf16.msra.mxu0 %v5489
    %6266 = vmatprep.subr.bf16.mxu0 0
    %6267 = vmatpush2.bf16.msra.mxu0 %v5488
    %6268 = vmatprep.subr.bf16.mxu0 0
    %6269 = vmatpush2.bf16.msra.mxu0 %v5487
    %6270 = vmatprep.subr.bf16.mxu0 0
    %6271 = vmatpush2.bf16.msra.mxu0 %v5486
    %6272 = vmatprep.subr.bf16.mxu0 0
    %6273 = vmatpush2.bf16.msra.mxu0 %v5485
    %6274 = vmatprep.subr.bf16.mxu0 0
    %6275 = vmatpush2.bf16.msra.mxu0 %v5484
    %6276 = vmatprep.mubr.bf16.mxu0 %v4075
    %6277 = vmatmul.mubr.bf16.gmra.mxu0 %v4061
    %v6278 = vpop.f32.mrf.mxu0
    %v6279 = vadd.f32 %v6239, %v6278
    %v6280 = vpop.f32.mrf.mxu0
    %v6281 = vpop.f32.mrf.mxu0
    %v6282 = vpop.f32.mrf.mxu0
    %6283 = vdwg.mxu0
    %6284 = vmatprep.subr.bf16.mxu0 0
    %6285 = vmatpush1.bf16.msra.mxu0 %v5499
    %6286 = vmatprep.subr.bf16.mxu0 0
    %6287 = vmatpush1.bf16.msra.mxu0 %v5498
    %6288 = vmatprep.subr.bf16.mxu0 0
    %6289 = vmatpush1.bf16.msra.mxu0 %v5497
    %6290 = vmatprep.subr.bf16.mxu0 0
    %6291 = vmatpush1.bf16.msra.mxu0 %v5496
    %6292 = vmatprep.subr.bf16.mxu0 0
    %6293 = vmatpush1.bf16.msra.mxu0 %v5495
    %6294 = vmatprep.subr.bf16.mxu0 0
    %6295 = vmatpush1.bf16.msra.mxu0 %v5494
    %6296 = vmatprep.subr.bf16.mxu0 0
    %6297 = vmatpush1.bf16.msra.mxu0 %v5493
    %6298 = vmatprep.subr.bf16.mxu0 0
    %6299 = vmatpush1.bf16.msra.mxu0 %v5492
    %6300 = vmatprep.subr.bf16.mxu0 0
    %6301 = vmatpush2.bf16.msra.mxu0 %v5507
    %6302 = vmatprep.subr.bf16.mxu0 0
    %6303 = vmatpush2.bf16.msra.mxu0 %v5506
    %6304 = vmatprep.subr.bf16.mxu0 0
    %6305 = vmatpush2.bf16.msra.mxu0 %v5505
    %6306 = vmatprep.subr.bf16.mxu0 0
    %6307 = vmatpush2.bf16.msra.mxu0 %v5504
    %6308 = vmatprep.subr.bf16.mxu0 0
    %6309 = vmatpush2.bf16.msra.mxu0 %v5503
    %6310 = vmatprep.subr.bf16.mxu0 0
    %6311 = vmatpush2.bf16.msra.mxu0 %v5502
    %6312 = vmatprep.subr.bf16.mxu0 0
    %6313 = vmatpush2.bf16.msra.mxu0 %v5501
    %6314 = vmatprep.subr.bf16.mxu0 0
    %6315 = vmatpush2.bf16.msra.mxu0 %v5500
    %6316 = vmatprep.mubr.bf16.mxu0 %v4085
    %6317 = vmatmul.mubr.bf16.gmra.mxu0 %v4083
    %v6318 = vpop.f32.mrf.mxu0
    %v6319 = vadd.f32 %v6279, %v6318
    %v6320 = vpop.f32.mrf.mxu0
    %v6321 = vpop.f32.mrf.mxu0
    %v6322 = vpop.f32.mrf.mxu0
    %6323 = vdwg.mxu0
    %6324 = vmatprep.subr.bf16.mxu0 0
    %6325 = vmatpush1.bf16.msra.mxu0 %v5515
    %6326 = vmatprep.subr.bf16.mxu0 0
    %6327 = vmatpush1.bf16.msra.mxu0 %v5514
    %6328 = vmatprep.subr.bf16.mxu0 0
    %6329 = vmatpush1.bf16.msra.mxu0 %v5513
    %6330 = vmatprep.subr.bf16.mxu0 0
    %6331 = vmatpush1.bf16.msra.mxu0 %v5512
    %6332 = vmatprep.subr.bf16.mxu0 0
    %6333 = vmatpush1.bf16.msra.mxu0 %v5511
    %6334 = vmatprep.subr.bf16.mxu0 0
    %6335 = vmatpush1.bf16.msra.mxu0 %v5510
    %6336 = vmatprep.subr.bf16.mxu0 0
    %6337 = vmatpush1.bf16.msra.mxu0 %v5509
    %6338 = vmatprep.subr.bf16.mxu0 0
    %6339 = vmatpush1.bf16.msra.mxu0 %v5508
    %6340 = vmatprep.subr.bf16.mxu0 0
    %6341 = vmatpush2.bf16.msra.mxu0 %v5523
    %6342 = vmatprep.subr.bf16.mxu0 0
    %6343 = vmatpush2.bf16.msra.mxu0 %v5522
    %6344 = vmatprep.subr.bf16.mxu0 0
    %6345 = vmatpush2.bf16.msra.mxu0 %v5521
    %6346 = vmatprep.subr.bf16.mxu0 0
    %6347 = vmatpush2.bf16.msra.mxu0 %v5520
    %6348 = vmatprep.subr.bf16.mxu0 0
    %6349 = vmatpush2.bf16.msra.mxu0 %v5519
    %6350 = vmatprep.subr.bf16.mxu0 0
    %6351 = vmatpush2.bf16.msra.mxu0 %v5518
    %6352 = vmatprep.subr.bf16.mxu0 0
    %6353 = vmatpush2.bf16.msra.mxu0 %v5517
    %6354 = vmatprep.subr.bf16.mxu0 0
    %6355 = vmatpush2.bf16.msra.mxu0 %v5516
    %6356 = vmatprep.mubr.bf16.mxu0 %v4082
    %6357 = vmatmul.mubr.bf16.gmra.mxu0 %v4068
    %v6358 = vpop.f32.mrf.mxu0
    %v6359 = vadd.f32 %v6319, %v6358
    %v6360 = vpop.f32.mrf.mxu0
    %v6361 = vpop.f32.mrf.mxu0
    %v6362 = vpop.f32.mrf.mxu0
    %6363 = vdwg.mxu0
    %6364 = vmatprep.subr.bf16.mxu0 0
    %6365 = vmatpush1.bf16.msra.mxu0 %v5531
    %6366 = vmatprep.subr.bf16.mxu0 0
    %6367 = vmatpush1.bf16.msra.mxu0 %v5530
    %6368 = vmatprep.subr.bf16.mxu0 0
    %6369 = vmatpush1.bf16.msra.mxu0 %v5529
    %6370 = vmatprep.subr.bf16.mxu0 0
    %6371 = vmatpush1.bf16.msra.mxu0 %v5528
    %6372 = vmatprep.subr.bf16.mxu0 0
    %6373 = vmatpush1.bf16.msra.mxu0 %v5527
    %6374 = vmatprep.subr.bf16.mxu0 0
    %6375 = vmatpush1.bf16.msra.mxu0 %v5526
    %6376 = vmatprep.subr.bf16.mxu0 0
    %6377 = vmatpush1.bf16.msra.mxu0 %v5525
    %6378 = vmatprep.subr.bf16.mxu0 0
    %6379 = vmatpush1.bf16.msra.mxu0 %v5524
    %6380 = vmatprep.subr.bf16.mxu0 0
    %6381 = vmatpush2.bf16.msra.mxu0 %v5539
    %6382 = vmatprep.subr.bf16.mxu0 0
    %6383 = vmatpush2.bf16.msra.mxu0 %v5538
    %6384 = vmatprep.subr.bf16.mxu0 0
    %6385 = vmatpush2.bf16.msra.mxu0 %v5537
    %6386 = vmatprep.subr.bf16.mxu0 0
    %6387 = vmatpush2.bf16.msra.mxu0 %v5536
    %6388 = vmatprep.subr.bf16.mxu0 0
    %6389 = vmatpush2.bf16.msra.mxu0 %v5535
    %6390 = vmatprep.subr.bf16.mxu0 0
    %6391 = vmatpush2.bf16.msra.mxu0 %v5534
    %6392 = vmatprep.subr.bf16.mxu0 0
    %6393 = vmatpush2.bf16.msra.mxu0 %v5533
    %6394 = vmatprep.subr.bf16.mxu0 0
    %6395 = vmatpush2.bf16.msra.mxu0 %v5532
    %6396 = vmatprep.mubr.bf16.mxu0 %v4086
    %6397 = vmatmul.mubr.bf16.gmra.mxu0 %v4084
    %v6398 = vpop.f32.mrf.mxu0
    %v6399 = vadd.f32 %v6359, %v6398
    %v6400 = vpop.f32.mrf.mxu0
    %v6401 = vpop.f32.mrf.mxu0
    %v6402 = vpop.f32.mrf.mxu0
    %6403 = vdwg.mxu0
    %6404 = vmatprep.subr.bf16.mxu0 0
    %6405 = vmatpush1.bf16.msra.mxu0 %v5547
    %6406 = vmatprep.subr.bf16.mxu0 0
    %6407 = vmatpush1.bf16.msra.mxu0 %v5546
    %6408 = vmatprep.subr.bf16.mxu0 0
    %6409 = vmatpush1.bf16.msra.mxu0 %v5545
    %6410 = vmatprep.subr.bf16.mxu0 0
    %6411 = vmatpush1.bf16.msra.mxu0 %v5544
    %6412 = vmatprep.subr.bf16.mxu0 0
    %6413 = vmatpush1.bf16.msra.mxu0 %v5543
    %6414 = vmatprep.subr.bf16.mxu0 0
    %6415 = vmatpush1.bf16.msra.mxu0 %v5542
    %6416 = vmatprep.subr.bf16.mxu0 0
    %6417 = vmatpush1.bf16.msra.mxu0 %v5541
    %6418 = vmatprep.subr.bf16.mxu0 0
    %6419 = vmatpush1.bf16.msra.mxu0 %v5540
    %6420 = vmatprep.subr.bf16.mxu0 0
    %6421 = vmatpush2.bf16.msra.mxu0 %v5555
    %6422 = vmatprep.subr.bf16.mxu0 0
    %6423 = vmatpush2.bf16.msra.mxu0 %v5554
    %6424 = vmatprep.subr.bf16.mxu0 0
    %6425 = vmatpush2.bf16.msra.mxu0 %v5553
    %6426 = vmatprep.subr.bf16.mxu0 0
    %6427 = vmatpush2.bf16.msra.mxu0 %v5552
    %6428 = vmatprep.subr.bf16.mxu0 0
    %6429 = vmatpush2.bf16.msra.mxu0 %v5551
    %6430 = vmatprep.subr.bf16.mxu0 0
    %6431 = vmatpush2.bf16.msra.mxu0 %v5550
    %6432 = vmatprep.subr.bf16.mxu0 0
    %6433 = vmatpush2.bf16.msra.mxu0 %v5549
    %6434 = vmatprep.subr.bf16.mxu0 0
    %6435 = vmatpush2.bf16.msra.mxu0 %v5548
    %6436 = vmatprep.mubr.bf16.mxu0 %v4124
    %6437 = vmatmul.mubr.bf16.gmra.mxu0 %v4110
    %v6438 = vpop.f32.mrf.mxu0
    %v6439 = vadd.f32 %v6399, %v6438
    %v6440 = vpop.f32.mrf.mxu0
    %v6441 = vpop.f32.mrf.mxu0
    %v6442 = vpop.f32.mrf.mxu0
    %6443 = vdwg.mxu0
    %6444 = vmatprep.subr.bf16.mxu0 0
    %6445 = vmatpush1.bf16.msra.mxu0 %v5563
    %6446 = vmatprep.subr.bf16.mxu0 0
    %6447 = vmatpush1.bf16.msra.mxu0 %v5562
    %6448 = vmatprep.subr.bf16.mxu0 0
    %6449 = vmatpush1.bf16.msra.mxu0 %v5561
    %6450 = vmatprep.subr.bf16.mxu0 0
    %6451 = vmatpush1.bf16.msra.mxu0 %v5560
    %6452 = vmatprep.subr.bf16.mxu0 0
    %6453 = vmatpush1.bf16.msra.mxu0 %v5559
    %6454 = vmatprep.subr.bf16.mxu0 0
    %6455 = vmatpush1.bf16.msra.mxu0 %v5558
    %6456 = vmatprep.subr.bf16.mxu0 0
    %6457 = vmatpush1.bf16.msra.mxu0 %v5557
    %6458 = vmatprep.subr.bf16.mxu0 0
    %6459 = vmatpush1.bf16.msra.mxu0 %v5556
    %6460 = vmatprep.subr.bf16.mxu0 0
    %6461 = vmatpush2.bf16.msra.mxu0 %v5571
    %6462 = vmatprep.subr.bf16.mxu0 0
    %6463 = vmatpush2.bf16.msra.mxu0 %v5570
    %6464 = vmatprep.subr.bf16.mxu0 0
    %6465 = vmatpush2.bf16.msra.mxu0 %v5569
    %6466 = vmatprep.subr.bf16.mxu0 0
    %6467 = vmatpush2.bf16.msra.mxu0 %v5568
    %6468 = vmatprep.subr.bf16.mxu0 0
    %6469 = vmatpush2.bf16.msra.mxu0 %v5567
    %6470 = vmatprep.subr.bf16.mxu0 0
    %6471 = vmatpush2.bf16.msra.mxu0 %v5566
    %6472 = vmatprep.subr.bf16.mxu0 0
    %6473 = vmatpush2.bf16.msra.mxu0 %v5565
    %6474 = vmatprep.subr.bf16.mxu0 0
    %6475 = vmatpush2.bf16.msra.mxu0 %v5564
    %6476 = vmatprep.mubr.bf16.mxu0 %v4134
    %6477 = vmatmul.mubr.bf16.gmra.mxu0 %v4132
    %v6478 = vpop.f32.mrf.mxu0
    %v6479 = vadd.f32 %v6439, %v6478
    %v6480 = vpop.f32.mrf.mxu0
    %v6481 = vpop.f32.mrf.mxu0
    %v6482 = vpop.f32.mrf.mxu0
    %6483 = vdwg.mxu0
    %6484 = vmatprep.subr.bf16.mxu0 0
    %6485 = vmatpush1.bf16.msra.mxu0 %v5579
    %6486 = vmatprep.subr.bf16.mxu0 0
    %6487 = vmatpush1.bf16.msra.mxu0 %v5578
    %6488 = vmatprep.subr.bf16.mxu0 0
    %6489 = vmatpush1.bf16.msra.mxu0 %v5577
    %6490 = vmatprep.subr.bf16.mxu0 0
    %6491 = vmatpush1.bf16.msra.mxu0 %v5576
    %6492 = vmatprep.subr.bf16.mxu0 0
    %6493 = vmatpush1.bf16.msra.mxu0 %v5575
    %6494 = vmatprep.subr.bf16.mxu0 0
    %6495 = vmatpush1.bf16.msra.mxu0 %v5574
    %6496 = vmatprep.subr.bf16.mxu0 0
    %6497 = vmatpush1.bf16.msra.mxu0 %v5573
    %6498 = vmatprep.subr.bf16.mxu0 0
    %6499 = vmatpush1.bf16.msra.mxu0 %v5572
    %6500 = vmatprep.subr.bf16.mxu0 0
    %6501 = vmatpush2.bf16.msra.mxu0 %v5587
    %6502 = vmatprep.subr.bf16.mxu0 0
    %6503 = vmatpush2.bf16.msra.mxu0 %v5586
    %6504 = vmatprep.subr.bf16.mxu0 0
    %6505 = vmatpush2.bf16.msra.mxu0 %v5585
    %6506 = vmatprep.subr.bf16.mxu0 0
    %6507 = vmatpush2.bf16.msra.mxu0 %v5584
    %6508 = vmatprep.subr.bf16.mxu0 0
    %6509 = vmatpush2.bf16.msra.mxu0 %v5583
    %6510 = vmatprep.subr.bf16.mxu0 0
    %6511 = vmatpush2.bf16.msra.mxu0 %v5582
    %6512 = vmatprep.subr.bf16.mxu0 0
    %6513 = vmatpush2.bf16.msra.mxu0 %v5581
    %6514 = vmatprep.subr.bf16.mxu0 0
    %6515 = vmatpush2.bf16.msra.mxu0 %v5580
    %6516 = vmatprep.mubr.bf16.mxu0 %v4131
    %6517 = vmatmul.mubr.bf16.gmra.mxu0 %v4117
    %v6518 = vpop.f32.mrf.mxu0
    %v6519 = vadd.f32 %v6479, %v6518
    %v6520 = vpop.f32.mrf.mxu0
    %v6521 = vpop.f32.mrf.mxu0
    %v6522 = vpop.f32.mrf.mxu0
    %6523 = vdwg.mxu0
    %6524 = vmatprep.subr.bf16.mxu0 0
    %6525 = vmatpush1.bf16.msra.mxu0 %v5595
    %6526 = vmatprep.subr.bf16.mxu0 0
    %6527 = vmatpush1.bf16.msra.mxu0 %v5594
    %6528 = vmatprep.subr.bf16.mxu0 0
    %6529 = vmatpush1.bf16.msra.mxu0 %v5593
    %6530 = vmatprep.subr.bf16.mxu0 0
    %6531 = vmatpush1.bf16.msra.mxu0 %v5592
    %6532 = vmatprep.subr.bf16.mxu0 0
    %6533 = vmatpush1.bf16.msra.mxu0 %v5591
    %6534 = vmatprep.subr.bf16.mxu0 0
    %6535 = vmatpush1.bf16.msra.mxu0 %v5590
    %6536 = vmatprep.subr.bf16.mxu0 0
    %6537 = vmatpush1.bf16.msra.mxu0 %v5589
    %6538 = vmatprep.subr.bf16.mxu0 0
    %6539 = vmatpush1.bf16.msra.mxu0 %v5588
    %6540 = vmatprep.subr.bf16.mxu0 0
    %6541 = vmatpush2.bf16.msra.mxu0 %v5603
    %6542 = vmatprep.subr.bf16.mxu0 0
    %6543 = vmatpush2.bf16.msra.mxu0 %v5602
    %6544 = vmatprep.subr.bf16.mxu0 0
    %6545 = vmatpush2.bf16.msra.mxu0 %v5601
    %6546 = vmatprep.subr.bf16.mxu0 0
    %6547 = vmatpush2.bf16.msra.mxu0 %v5600
    %6548 = vmatprep.subr.bf16.mxu0 0
    %6549 = vmatpush2.bf16.msra.mxu0 %v5599
    %6550 = vmatprep.subr.bf16.mxu0 0
    %6551 = vmatpush2.bf16.msra.mxu0 %v5598
    %6552 = vmatprep.subr.bf16.mxu0 0
    %6553 = vmatpush2.bf16.msra.mxu0 %v5597
    %6554 = vmatprep.subr.bf16.mxu0 0
    %6555 = vmatpush2.bf16.msra.mxu0 %v5596
    %6556 = vmatprep.mubr.bf16.mxu0 %v4135
    %6557 = vmatmul.mubr.bf16.gmra.mxu0 %v4133
    %v6558 = vpop.f32.mrf.mxu0
    %v6559 = vadd.f32 %v6519, %v6558
    %v6560 = vpop.f32.mrf.mxu0
    %v6561 = vpop.f32.mrf.mxu0
    %v6562 = vpop.f32.mrf.mxu0
    %6563 = vdwg.mxu0
    %6564 = vmatprep.subr.bf16.mxu0 0
    %6565 = vmatpush1.bf16.msra.mxu0 %v5611
    %6566 = vmatprep.subr.bf16.mxu0 0
    %6567 = vmatpush1.bf16.msra.mxu0 %v5610
    %6568 = vmatprep.subr.bf16.mxu0 0
    %6569 = vmatpush1.bf16.msra.mxu0 %v5609
    %6570 = vmatprep.subr.bf16.mxu0 0
    %6571 = vmatpush1.bf16.msra.mxu0 %v5608
    %6572 = vmatprep.subr.bf16.mxu0 0
    %6573 = vmatpush1.bf16.msra.mxu0 %v5607
    %6574 = vmatprep.subr.bf16.mxu0 0
    %6575 = vmatpush1.bf16.msra.mxu0 %v5606
    %6576 = vmatprep.subr.bf16.mxu0 0
    %6577 = vmatpush1.bf16.msra.mxu0 %v5605
    %6578 = vmatprep.subr.bf16.mxu0 0
    %6579 = vmatpush1.bf16.msra.mxu0 %v5604
    %6580 = vmatprep.subr.bf16.mxu0 0
    %6581 = vmatpush2.bf16.msra.mxu0 %v5619
    %6582 = vmatprep.subr.bf16.mxu0 0
    %6583 = vmatpush2.bf16.msra.mxu0 %v5618
    %6584 = vmatprep.subr.bf16.mxu0 0
    %6585 = vmatpush2.bf16.msra.mxu0 %v5617
    %6586 = vmatprep.subr.bf16.mxu0 0
    %6587 = vmatpush2.bf16.msra.mxu0 %v5616
    %6588 = vmatprep.subr.bf16.mxu0 0
    %6589 = vmatpush2.bf16.msra.mxu0 %v5615
    %6590 = vmatprep.subr.bf16.mxu0 0
    %6591 = vmatpush2.bf16.msra.mxu0 %v5614
    %6592 = vmatprep.subr.bf16.mxu0 0
    %6593 = vmatpush2.bf16.msra.mxu0 %v5613
    %6594 = vmatprep.subr.bf16.mxu0 0
    %6595 = vmatpush2.bf16.msra.mxu0 %v5612
    %6596 = vmatprep.mubr.bf16.mxu0 %v4157
    %6597 = vmatmul.mubr.bf16.gmra.mxu0 %v4150
    %v6598 = vpop.f32.mrf.mxu0
    %v6599 = vadd.f32 %v6559, %v6598
    %v6600 = vpop.f32.mrf.mxu0
    %v6601 = vpop.f32.mrf.mxu0
    %v6602 = vpop.f32.mrf.mxu0
    %6603 = vdwg.mxu0
    %6604 = vmatprep.subr.bf16.mxu0 0
    %6605 = vmatpush1.bf16.msra.mxu0 %v5627
    %6606 = vmatprep.subr.bf16.mxu0 0
    %6607 = vmatpush1.bf16.msra.mxu0 %v5626
    %6608 = vmatprep.subr.bf16.mxu0 0
    %6609 = vmatpush1.bf16.msra.mxu0 %v5625
    %6610 = vmatprep.subr.bf16.mxu0 0
    %6611 = vmatpush1.bf16.msra.mxu0 %v5624
    %6612 = vmatprep.subr.bf16.mxu0 0
    %6613 = vmatpush1.bf16.msra.mxu0 %v5623
    %6614 = vmatprep.subr.bf16.mxu0 0
    %6615 = vmatpush1.bf16.msra.mxu0 %v5622
    %6616 = vmatprep.subr.bf16.mxu0 0
    %6617 = vmatpush1.bf16.msra.mxu0 %v5621
    %6618 = vmatprep.subr.bf16.mxu0 0
    %6619 = vmatpush1.bf16.msra.mxu0 %v5620
    %6620 = vmatprep.subr.bf16.mxu0 0
    %6621 = vmatpush2.bf16.msra.mxu0 %v5635
    %6622 = vmatprep.subr.bf16.mxu0 0
    %6623 = vmatpush2.bf16.msra.mxu0 %v5634
    %6624 = vmatprep.subr.bf16.mxu0 0
    %6625 = vmatpush2.bf16.msra.mxu0 %v5633
    %6626 = vmatprep.subr.bf16.mxu0 0
    %6627 = vmatpush2.bf16.msra.mxu0 %v5632
    %6628 = vmatprep.subr.bf16.mxu0 0
    %6629 = vmatpush2.bf16.msra.mxu0 %v5631
    %6630 = vmatprep.subr.bf16.mxu0 0
    %6631 = vmatpush2.bf16.msra.mxu0 %v5630
    %6632 = vmatprep.subr.bf16.mxu0 0
    %6633 = vmatpush2.bf16.msra.mxu0 %v5629
    %6634 = vmatprep.subr.bf16.mxu0 0
    %6635 = vmatpush2.bf16.msra.mxu0 %v5628
    %6636 = vmatprep.mubr.bf16.mxu0 %v4159
    %6637 = vmatmul.mubr.bf16.gmra.mxu0 %v4158
    %v6638 = vpop.f32.mrf.mxu0
    %v6639 = vadd.f32 %v6599, %v6638
    %v6640 = vpop.f32.mrf.mxu0
    %v6641 = vpop.f32.mrf.mxu0
    %v6642 = vpop.f32.mrf.mxu0
    %6643 = vdwg.mxu0
    %v6644 = vld [vmem:[%s2] sm:$0x3]
    %v6645 = vld [vmem:[%s6] sm:$0xff]
    %v6646 = vld [vmem:[%s6 + $0x8] sm:$0x1]
    %v6647 = vld [vmem:[%s7] sm:$0x1]
    %v6649 = vlaneseq
    %v6650 = vshrl.u32 %v6649, 7
    %v6651 = vsub.s32 0, %v6650
    %v6652 = vrot.slane %v6647, %v6651
    %vm6654 = vcmask 72704
    %v6656 = vsel %vm6654, %v6644, 0
    %vm6658 = vcmask 1040384
    %v6660 = vsel %vm6658, %v6646, 0
    %6662 = vmatprep.subr.mxu0 0.0
    %6663 = vmatpush1.msra.mxu0 0.0
    %6664 = vmatprep.subr.mxu0 0.0
    %6665 = vmatpush1.msra.mxu0 0.0
    %6666 = vmatprep.subr.mxu0 0.0
    %6667 = vmatpush1.msra.mxu0 0.0
    %6668 = vmatprep.subr.mxu0 0.0
    %6669 = vmatpush1.msra.mxu0 0.0
    %6670 = vmatprep.subr.mxu0 0.0
    %6671 = vmatpush1.msra.mxu0 0.0
    %6672 = vmatprep.subr.mxu0 0.0
    %6673 = vmatpush1.msra.mxu0 0.0
    %6674 = vmatprep.subr.mxu0 0.0
    %6675 = vmatpush1.msra.mxu0 0.0
    %6676 = vmatprep.subr.mxu0 0.0
    %6677 = vmatpush1.msra.mxu0 0.0
    %6678 = vmatprep.subr.mxu0 0.0
    %6679 = vmatpush1.msra.mxu0 0.0
    %6680 = vmatprep.subr.mxu0 0.0
    %6681 = vmatpush1.msra.mxu0 0.0
    %6682 = vmatprep.subr.mxu0 0.0
    %6683 = vmatpush1.msra.mxu0 0.0
    %6684 = vmatprep.subr.mxu0 0.0
    %6685 = vmatpush1.msra.mxu0 0.0
    %6686 = vmatprep.subr.mxu0 0.0
    %6687 = vmatpush1.msra.mxu0 0.0
    %6688 = vmatprep.subr.mxu0 0.0
    %6689 = vmatpush1.msra.mxu0 0.0
    %6690 = vmatprep.subr.mxu0 0.0
    %6691 = vmatpush1.msra.mxu0 %v6660
    %6692 = vmatprep.subr.mxu0 0.0
    %6693 = vmatpush1.msra.mxu0 %v6645
    %6694 = vmatprep.subr.mxu0 0.0
    %6695 = vmatpush2.msra.mxu0 0.0
    %6696 = vmatprep.subr.mxu0 0.0
    %6697 = vmatpush2.msra.mxu0 0.0
    %6698 = vmatprep.subr.mxu0 0.0
    %6699 = vmatpush2.msra.mxu0 0.0
    %6700 = vmatprep.subr.mxu0 0.0
    %6701 = vmatpush2.msra.mxu0 0.0
    %6702 = vmatprep.subr.mxu0 0.0
    %6703 = vmatpush2.msra.mxu0 0.0
    %6704 = vmatprep.subr.mxu0 0.0
    %6705 = vmatpush2.msra.mxu0 0.0
    %6706 = vmatprep.subr.mxu0 0.0
    %6707 = vmatpush2.msra.mxu0 0.0
    %6708 = vmatprep.subr.mxu0 0.0
    %6709 = vmatpush2.msra.mxu0 0.0
    %6710 = vmatprep.subr.mxu0 0.0
    %6711 = vmatpush2.msra.mxu0 0.0
    %6712 = vmatprep.subr.mxu0 0.0
    %6713 = vmatpush2.msra.mxu0 0.0
    %6714 = vmatprep.subr.mxu0 0.0
    %6715 = vmatpush2.msra.mxu0 0.0
    %6716 = vmatprep.subr.mxu0 0.0
    %6717 = vmatpush2.msra.mxu0 0.0
    %6718 = vmatprep.subr.mxu0 0.0
    %6719 = vmatpush2.msra.mxu0 0.0
    %6720 = vmatprep.subr.mxu0 0.0
    %6721 = vmatpush2.msra.mxu0 0.0
    %6722 = vmatprep.subr.mxu0 0.0
    %6723 = vmatpush2.msra.mxu0 0.0
    %6724 = vmatprep.subr.mxu0 0.0
    %6725 = vmatpush2.msra.mxu0 0.0
    %6726 = vmatprep.mubr.f32.mxu0 0.0
    %6727 = vmatmul.mubr.f32.gmra.mxu0 %v6656
    %v6728 = vpop.f32.mrf.mxu0
    %v6729 = vadd.f32 %v6652, %v6728
    %v6730 = vpop.f32.mrf.mxu0
    %6731 = vdwg.mxu0
    %v6732 = vld [vmem:[%s3] sm:$0x3]
    %v6733 = vld [vmem:[%s8] sm:$0xf]
    %v6734 = vld [vmem:[%s9] sm:$0x1]
    %v6736 = vlaneseq
    %v6737 = vshrl.u32 %v6736, 7
    %v6738 = vsub.s32 0, %v6737
    %v6739 = vrot.slane %v6734, %v6738
    %vm6741 = vcmask 31744
    %v6743 = vsel %vm6741, %v6732, 0
    %vm6745 = vcmask 1043456
    %v6747 = vsel %vm6745, %v6733, 0
    %6749 = vmatprep.subr.mxu0 0.0
    %6750 = vmatpush1.msra.mxu0 0.0
    %6751 = vmatprep.subr.mxu0 0.0
    %6752 = vmatpush1.msra.mxu0 0.0
    %6753 = vmatprep.subr.mxu0 0.0
    %6754 = vmatpush1.msra.mxu0 0.0
    %6755 = vmatprep.subr.mxu0 0.0
    %6756 = vmatpush1.msra.mxu0 0.0
    %6757 = vmatprep.subr.mxu0 0.0
    %6758 = vmatpush1.msra.mxu0 0.0
    %6759 = vmatprep.subr.mxu0 0.0
    %6760 = vmatpush1.msra.mxu0 0.0
    %6761 = vmatprep.subr.mxu0 0.0
    %6762 = vmatpush1.msra.mxu0 0.0
    %6763 = vmatprep.subr.mxu0 0.0
    %6764 = vmatpush1.msra.mxu0 0.0
    %6765 = vmatprep.subr.mxu0 0.0
    %6766 = vmatpush1.msra.mxu0 0.0
    %6767 = vmatprep.subr.mxu0 0.0
    %6768 = vmatpush1.msra.mxu0 0.0
    %6769 = vmatprep.subr.mxu0 0.0
    %6770 = vmatpush1.msra.mxu0 0.0
    %6771 = vmatprep.subr.mxu0 0.0
    %6772 = vmatpush1.msra.mxu0 0.0
    %6773 = vmatprep.subr.mxu0 0.0
    %6774 = vmatpush1.msra.mxu0 0.0
    %6775 = vmatprep.subr.mxu0 0.0
    %6776 = vmatpush1.msra.mxu0 0.0
    %6777 = vmatprep.subr.mxu0 0.0
    %6778 = vmatpush1.msra.mxu0 0.0
    %6779 = vmatprep.subr.mxu0 0.0
    %6780 = vmatpush1.msra.mxu0 %v6747
    %6781 = vmatprep.subr.mxu0 0.0
    %6782 = vmatpush2.msra.mxu0 0.0
    %6783 = vmatprep.subr.mxu0 0.0
    %6784 = vmatpush2.msra.mxu0 0.0
    %6785 = vmatprep.subr.mxu0 0.0
    %6786 = vmatpush2.msra.mxu0 0.0
    %6787 = vmatprep.subr.mxu0 0.0
    %6788 = vmatpush2.msra.mxu0 0.0
    %6789 = vmatprep.subr.mxu0 0.0
    %6790 = vmatpush2.msra.mxu0 0.0
    %6791 = vmatprep.subr.mxu0 0.0
    %6792 = vmatpush2.msra.mxu0 0.0
    %6793 = vmatprep.subr.mxu0 0.0
    %6794 = vmatpush2.msra.mxu0 0.0
    %6795 = vmatprep.subr.mxu0 0.0
    %6796 = vmatpush2.msra.mxu0 0.0
    %6797 = vmatprep.subr.mxu0 0.0
    %6798 = vmatpush2.msra.mxu0 0.0
    %6799 = vmatprep.subr.mxu0 0.0
    %6800 = vmatpush2.msra.mxu0 0.0
    %6801 = vmatprep.subr.mxu0 0.0
    %6802 = vmatpush2.msra.mxu0 0.0
    %6803 = vmatprep.subr.mxu0 0.0
    %6804 = vmatpush2.msra.mxu0 0.0
    %6805 = vmatprep.subr.mxu0 0.0
    %6806 = vmatpush2.msra.mxu0 0.0
    %6807 = vmatprep.subr.mxu0 0.0
    %6808 = vmatpush2.msra.mxu0 0.0
    %6809 = vmatprep.subr.mxu0 0.0
    %6810 = vmatpush2.msra.mxu0 0.0
    %6811 = vmatprep.subr.mxu0 0.0
    %6812 = vmatpush2.msra.mxu0 0.0
    %6813 = vmatprep.mubr.f32.mxu0 0.0
    %6814 = vmatmul.mubr.f32.gmra.mxu0 %v6743
    %v6815 = vpop.f32.mrf.mxu0
    %v6816 = vadd.f32 %v6739, %v6815
    %v6817 = vpop.f32.mrf.mxu0
    %6818 = vdwg.mxu0
    %v6819 = vld [vmem:[%s10] sm:$0xff]
    %v6820 = vld [vmem:[%s10 + $0x8] sm:$0xff]
    %v6821 = vld [vmem:[%s10 + $0x10] sm:$0xff]
    %v6822 = vld [vmem:[%s10 + $0x18] sm:$0xff]
    %v6823 = vld [vmem:[%s10 + $0x20] sm:$0xff]
    %v6824 = vld [vmem:[%s10 + $0x28] sm:$0xff]
    %v6825 = vld [vmem:[%s10 + $0x30] sm:$0xff]
    %v6826 = vld [vmem:[%s10 + $0x38] sm:$0xff]
    %v6827 = vld [vmem:[%s11] sm:$0xff]
    %v6828 = vld [vmem:[%s11 + $0x8] sm:$0xff]
    %v6829 = vld [vmem:[%s11 + $0x10] sm:$0xff]
    %v6830 = vld [vmem:[%s11 + $0x18] sm:$0xff]
    %v6831 = vld [vmem:[%s11 + $0x20] sm:$0xff]
    %v6832 = vld [vmem:[%s11 + $0x28] sm:$0xff]
    %v6833 = vld [vmem:[%s11 + $0x30] sm:$0xff]
    %v6834 = vld [vmem:[%s11 + $0x38] sm:$0xff]
    %vm6835 = vcmask 523264
    %v6837 = vsel %vm6835, %v6639, 0
    %6839 = vmatprep.subr.mxu0 0.0
    %6840 = vmatpush1.msra.mxu0 0.0
    %6841 = vmatprep.subr.mxu0 0.0
    %6842 = vmatpush1.msra.mxu0 0.0
    %6843 = vmatprep.subr.mxu0 0.0
    %6844 = vmatpush1.msra.mxu0 0.0
    %6845 = vmatprep.subr.mxu0 0.0
    %6846 = vmatpush1.msra.mxu0 0.0
    %6847 = vmatprep.subr.mxu0 0.0
    %6848 = vmatpush1.msra.mxu0 0.0
    %6849 = vmatprep.subr.mxu0 0.0
    %6850 = vmatpush1.msra.mxu0 0.0
    %6851 = vmatprep.subr.mxu0 0.0
    %6852 = vmatpush1.msra.mxu0 0.0
    %6853 = vmatprep.subr.mxu0 0.0
    %6854 = vmatpush1.msra.mxu0 0.0
    %6855 = vmatprep.subr.mxu0 0.0
    %6856 = vmatpush1.msra.mxu0 %v6834
    %6857 = vmatprep.subr.mxu0 0.0
    %6858 = vmatpush1.msra.mxu0 %v6833
    %6859 = vmatprep.subr.mxu0 0.0
    %6860 = vmatpush1.msra.mxu0 %v6832
    %6861 = vmatprep.subr.mxu0 0.0
    %6862 = vmatpush1.msra.mxu0 %v6831
    %6863 = vmatprep.subr.mxu0 0.0
    %6864 = vmatpush1.msra.mxu0 %v6830
    %6865 = vmatprep.subr.mxu0 0.0
    %6866 = vmatpush1.msra.mxu0 %v6829
    %6867 = vmatprep.subr.mxu0 0.0
    %6868 = vmatpush1.msra.mxu0 %v6828
    %6869 = vmatprep.subr.mxu0 0.0
    %6870 = vmatpush1.msra.mxu0 %v6827
    %6871 = vmatprep.subr.mxu0 0.0
    %6872 = vmatpush2.msra.mxu0 0.0
    %6873 = vmatprep.subr.mxu0 0.0
    %6874 = vmatpush2.msra.mxu0 0.0
    %6875 = vmatprep.subr.mxu0 0.0
    %6876 = vmatpush2.msra.mxu0 0.0
    %6877 = vmatprep.subr.mxu0 0.0
    %6878 = vmatpush2.msra.mxu0 0.0
    %6879 = vmatprep.subr.mxu0 0.0
    %6880 = vmatpush2.msra.mxu0 0.0
    %6881 = vmatprep.subr.mxu0 0.0
    %6882 = vmatpush2.msra.mxu0 0.0
    %6883 = vmatprep.subr.mxu0 0.0
    %6884 = vmatpush2.msra.mxu0 0.0
    %6885 = vmatprep.subr.mxu0 0.0
    %6886 = vmatpush2.msra.mxu0 0.0
    %6887 = vmatprep.subr.mxu0 0.0
    %6888 = vmatpush2.msra.mxu0 0.0
    %6889 = vmatprep.subr.mxu0 0.0
    %6890 = vmatpush2.msra.mxu0 0.0
    %6891 = vmatprep.subr.mxu0 0.0
    %6892 = vmatpush2.msra.mxu0 0.0
    %6893 = vmatprep.subr.mxu0 0.0
    %6894 = vmatpush2.msra.mxu0 0.0
    %6895 = vmatprep.subr.mxu0 0.0
    %6896 = vmatpush2.msra.mxu0 0.0
    %6897 = vmatprep.subr.mxu0 0.0
    %6898 = vmatpush2.msra.mxu0 0.0
    %6899 = vmatprep.subr.mxu0 0.0
    %6900 = vmatpush2.msra.mxu0 0.0
    %6901 = vmatprep.subr.mxu0 0.0
    %6902 = vmatpush2.msra.mxu0 0.0
    %6903 = vmatprep.mubr.f32.mxu0 0.0
    %6904 = vmatmul.mubr.f32.gmra.mxu0 %v6837
    %v6905 = vpop.f32.mrf.mxu0
    %v6906 = vadd.f32 0.0, %v6905
    %v6907 = vpop.f32.mrf.mxu0
    %6908 = vdwg.mxu0
    %v6910 = vsel %vm6835, %v3349, 0
    %6912 = vmatprep.subr.mxu0 0.0
    %6913 = vmatpush1.msra.mxu0 0.0
    %6914 = vmatprep.subr.mxu0 0.0
    %6915 = vmatpush1.msra.mxu0 0.0
    %6916 = vmatprep.subr.mxu0 0.0
    %6917 = vmatpush1.msra.mxu0 0.0
    %6918 = vmatprep.subr.mxu0 0.0
    %6919 = vmatpush1.msra.mxu0 0.0
    %6920 = vmatprep.subr.mxu0 0.0
    %6921 = vmatpush1.msra.mxu0 0.0
    %6922 = vmatprep.subr.mxu0 0.0
    %6923 = vmatpush1.msra.mxu0 0.0
    %6924 = vmatprep.subr.mxu0 0.0
    %6925 = vmatpush1.msra.mxu0 0.0
    %6926 = vmatprep.subr.mxu0 0.0
    %6927 = vmatpush1.msra.mxu0 0.0
    %6928 = vmatprep.subr.mxu0 0.0
    %6929 = vmatpush1.msra.mxu0 %v6826
    %6930 = vmatprep.subr.mxu0 0.0
    %6931 = vmatpush1.msra.mxu0 %v6825
    %6932 = vmatprep.subr.mxu0 0.0
    %6933 = vmatpush1.msra.mxu0 %v6824
    %6934 = vmatprep.subr.mxu0 0.0
    %6935 = vmatpush1.msra.mxu0 %v6823
    %6936 = vmatprep.subr.mxu0 0.0
    %6937 = vmatpush1.msra.mxu0 %v6822
    %6938 = vmatprep.subr.mxu0 0.0
    %6939 = vmatpush1.msra.mxu0 %v6821
    %6940 = vmatprep.subr.mxu0 0.0
    %6941 = vmatpush1.msra.mxu0 %v6820
    %6942 = vmatprep.subr.mxu0 0.0
    %6943 = vmatpush1.msra.mxu0 %v6819
    %6944 = vmatprep.subr.mxu0 0.0
    %6945 = vmatpush2.msra.mxu0 0.0
    %6946 = vmatprep.subr.mxu0 0.0
    %6947 = vmatpush2.msra.mxu0 0.0
    %6948 = vmatprep.subr.mxu0 0.0
    %6949 = vmatpush2.msra.mxu0 0.0
    %6950 = vmatprep.subr.mxu0 0.0
    %6951 = vmatpush2.msra.mxu0 0.0
    %6952 = vmatprep.subr.mxu0 0.0
    %6953 = vmatpush2.msra.mxu0 0.0
    %6954 = vmatprep.subr.mxu0 0.0
    %6955 = vmatpush2.msra.mxu0 0.0
    %6956 = vmatprep.subr.mxu0 0.0
    %6957 = vmatpush2.msra.mxu0 0.0
    %6958 = vmatprep.subr.mxu0 0.0
    %6959 = vmatpush2.msra.mxu0 0.0
    %6960 = vmatprep.subr.mxu0 0.0
    %6961 = vmatpush2.msra.mxu0 0.0
    %6962 = vmatprep.subr.mxu0 0.0
    %6963 = vmatpush2.msra.mxu0 0.0
    %6964 = vmatprep.subr.mxu0 0.0
    %6965 = vmatpush2.msra.mxu0 0.0
    %6966 = vmatprep.subr.mxu0 0.0
    %6967 = vmatpush2.msra.mxu0 0.0
    %6968 = vmatprep.subr.mxu0 0.0
    %6969 = vmatpush2.msra.mxu0 0.0
    %6970 = vmatprep.subr.mxu0 0.0
    %6971 = vmatpush2.msra.mxu0 0.0
    %6972 = vmatprep.subr.mxu0 0.0
    %6973 = vmatpush2.msra.mxu0 0.0
    %6974 = vmatprep.subr.mxu0 0.0
    %6975 = vmatpush2.msra.mxu0 0.0
    %6976 = vmatprep.mubr.f32.mxu0 0.0
    %6977 = vmatmul.mubr.f32.gmra.mxu0 %v6910
    %v6978 = vpop.f32.mrf.mxu0
    %v6979 = vadd.f32 %v6906, %v6978
    %v6980 = vpop.f32.mrf.mxu0
    %6981 = vdwg.mxu0
    %v6982 = vld [vmem:[%s12] sm:$0xff]
    %v6983 = vld [vmem:[%s12 + $0x8] sm:$0xff]
    %vm6984 = vcmask 130048
    %v6986 = vsel %vm6984, %v6729, 0
    %6988 = vmatprep.subr.mxu0 0.0
    %6989 = vmatpush1.msra.mxu0 0.0
    %6990 = vmatprep.subr.mxu0 0.0
    %6991 = vmatpush1.msra.mxu0 0.0
    %6992 = vmatprep.subr.mxu0 0.0
    %6993 = vmatpush1.msra.mxu0 0.0
    %6994 = vmatprep.subr.mxu0 0.0
    %6995 = vmatpush1.msra.mxu0 0.0
    %6996 = vmatprep.subr.mxu0 0.0
    %6997 = vmatpush1.msra.mxu0 0.0
    %6998 = vmatprep.subr.mxu0 0.0
    %6999 = vmatpush1.msra.mxu0 0.0
    %7000 = vmatprep.subr.mxu0 0.0
    %7001 = vmatpush1.msra.mxu0 0.0
    %7002 = vmatprep.subr.mxu0 0.0
    %7003 = vmatpush1.msra.mxu0 0.0
    %7004 = vmatprep.subr.mxu0 0.0
    %7005 = vmatpush1.msra.mxu0 0.0
    %7006 = vmatprep.subr.mxu0 0.0
    %7007 = vmatpush1.msra.mxu0 0.0
    %7008 = vmatprep.subr.mxu0 0.0
    %7009 = vmatpush1.msra.mxu0 0.0
    %7010 = vmatprep.subr.mxu0 0.0
    %7011 = vmatpush1.msra.mxu0 0.0
    %7012 = vmatprep.subr.mxu0 0.0
    %7013 = vmatpush1.msra.mxu0 0.0
    %7014 = vmatprep.subr.mxu0 0.0
    %7015 = vmatpush1.msra.mxu0 0.0
    %7016 = vmatprep.subr.mxu0 0.0
    %7017 = vmatpush1.msra.mxu0 %v6983
    %7018 = vmatprep.subr.mxu0 0.0
    %7019 = vmatpush1.msra.mxu0 %v6982
    %7020 = vmatprep.subr.mxu0 0.0
    %7021 = vmatpush2.msra.mxu0 0.0
    %7022 = vmatprep.subr.mxu0 0.0
    %7023 = vmatpush2.msra.mxu0 0.0
    %7024 = vmatprep.subr.mxu0 0.0
    %7025 = vmatpush2.msra.mxu0 0.0
    %7026 = vmatprep.subr.mxu0 0.0
    %7027 = vmatpush2.msra.mxu0 0.0
    %7028 = vmatprep.subr.mxu0 0.0
    %7029 = vmatpush2.msra.mxu0 0.0
    %7030 = vmatprep.subr.mxu0 0.0
    %7031 = vmatpush2.msra.mxu0 0.0
    %7032 = vmatprep.subr.mxu0 0.0
    %7033 = vmatpush2.msra.mxu0 0.0
    %7034 = vmatprep.subr.mxu0 0.0
    %7035 = vmatpush2.msra.mxu0 0.0
    %7036 = vmatprep.subr.mxu0 0.0
    %7037 = vmatpush2.msra.mxu0 0.0
    %7038 = vmatprep.subr.mxu0 0.0
    %7039 = vmatpush2.msra.mxu0 0.0
    %7040 = vmatprep.subr.mxu0 0.0
    %7041 = vmatpush2.msra.mxu0 0.0
    %7042 = vmatprep.subr.mxu0 0.0
    %7043 = vmatpush2.msra.mxu0 0.0
    %7044 = vmatprep.subr.mxu0 0.0
    %7045 = vmatpush2.msra.mxu0 0.0
    %7046 = vmatprep.subr.mxu0 0.0
    %7047 = vmatpush2.msra.mxu0 0.0
    %7048 = vmatprep.subr.mxu0 0.0
    %7049 = vmatpush2.msra.mxu0 0.0
    %7050 = vmatprep.subr.mxu0 0.0
    %7051 = vmatpush2.msra.mxu0 0.0
    %7052 = vmatprep.mubr.f32.mxu0 0.0
    %7053 = vmatmul.mubr.f32.gmra.mxu0 %v6986
    %v7054 = vpop.f32.mrf.mxu0
    %v7055 = vadd.f32 0.0, %v7054
    %v7056 = vpop.f32.mrf.mxu0
    %7057 = vdwg.mxu0
    %v7058 = vadd.f32 %v6979, %v7055
    %v7059 = vld [vmem:[%s13] sm:$0xff]
    %v7060 = vld [vmem:[%s13 + $0x8] sm:$0xff]
    %v7061 = vld [vmem:[%s13 + $0x10] sm:$0xff]
    %v7062 = vld [vmem:[%s13 + $0x18] sm:$0xff]
    %vm7063 = vcmask 261120
    %v7065 = vsel %vm7063, %v6816, 0
    %7067 = vmatprep.subr.mxu0 0.0
    %7068 = vmatpush1.msra.mxu0 0.0
    %7069 = vmatprep.subr.mxu0 0.0
    %7070 = vmatpush1.msra.mxu0 0.0
    %7071 = vmatprep.subr.mxu0 0.0
    %7072 = vmatpush1.msra.mxu0 0.0
    %7073 = vmatprep.subr.mxu0 0.0
    %7074 = vmatpush1.msra.mxu0 0.0
    %7075 = vmatprep.subr.mxu0 0.0
    %7076 = vmatpush1.msra.mxu0 0.0
    %7077 = vmatprep.subr.mxu0 0.0
    %7078 = vmatpush1.msra.mxu0 0.0
    %7079 = vmatprep.subr.mxu0 0.0
    %7080 = vmatpush1.msra.mxu0 0.0
    %7081 = vmatprep.subr.mxu0 0.0
    %7082 = vmatpush1.msra.mxu0 0.0
    %7083 = vmatprep.subr.mxu0 0.0
    %7084 = vmatpush1.msra.mxu0 0.0
    %7085 = vmatprep.subr.mxu0 0.0
    %7086 = vmatpush1.msra.mxu0 0.0
    %7087 = vmatprep.subr.mxu0 0.0
    %7088 = vmatpush1.msra.mxu0 0.0
    %7089 = vmatprep.subr.mxu0 0.0
    %7090 = vmatpush1.msra.mxu0 0.0
    %7091 = vmatprep.subr.mxu0 0.0
    %7092 = vmatpush1.msra.mxu0 %v7062
    %7093 = vmatprep.subr.mxu0 0.0
    %7094 = vmatpush1.msra.mxu0 %v7061
    %7095 = vmatprep.subr.mxu0 0.0
    %7096 = vmatpush1.msra.mxu0 %v7060
    %7097 = vmatprep.subr.mxu0 0.0
    %7098 = vmatpush1.msra.mxu0 %v7059
    %7099 = vmatprep.subr.mxu0 0.0
    %7100 = vmatpush2.msra.mxu0 0.0
    %7101 = vmatprep.subr.mxu0 0.0
    %7102 = vmatpush2.msra.mxu0 0.0
    %7103 = vmatprep.subr.mxu0 0.0
    %7104 = vmatpush2.msra.mxu0 0.0
    %7105 = vmatprep.subr.mxu0 0.0
    %7106 = vmatpush2.msra.mxu0 0.0
    %7107 = vmatprep.subr.mxu0 0.0
    %7108 = vmatpush2.msra.mxu0 0.0
    %7109 = vmatprep.subr.mxu0 0.0
    %7110 = vmatpush2.msra.mxu0 0.0
    %7111 = vmatprep.subr.mxu0 0.0
    %7112 = vmatpush2.msra.mxu0 0.0
    %7113 = vmatprep.subr.mxu0 0.0
    %7114 = vmatpush2.msra.mxu0 0.0
    %7115 = vmatprep.subr.mxu0 0.0
    %7116 = vmatpush2.msra.mxu0 0.0
    %7117 = vmatprep.subr.mxu0 0.0
    %7118 = vmatpush2.msra.mxu0 0.0
    %7119 = vmatprep.subr.mxu0 0.0
    %7120 = vmatpush2.msra.mxu0 0.0
    %7121 = vmatprep.subr.mxu0 0.0
    %7122 = vmatpush2.msra.mxu0 0.0
    %7123 = vmatprep.subr.mxu0 0.0
    %7124 = vmatpush2.msra.mxu0 0.0
    %7125 = vmatprep.subr.mxu0 0.0
    %7126 = vmatpush2.msra.mxu0 0.0
    %7127 = vmatprep.subr.mxu0 0.0
    %7128 = vmatpush2.msra.mxu0 0.0
    %7129 = vmatprep.subr.mxu0 0.0
    %7130 = vmatpush2.msra.mxu0 0.0
    %7131 = vmatprep.mubr.f32.mxu0 0.0
    %7132 = vmatmul.mubr.f32.gmra.mxu0 %v7065
    %v7133 = vpop.f32.mrf.mxu0
    %v7134 = vadd.f32 0.0, %v7133
    %v7135 = vpop.f32.mrf.mxu0
    %7136 = vdwg.mxu0
    %v7137 = vadd.f32 %v7058, %v7134
    %v7138 = vld [vmem:[%s14] sm:$0x1]
    %v7140 = vlaneseq
    %v7141 = vshrl.u32 %v7140, 7
    %v7142 = vsub.s32 0, %v7141
    %v7143 = vrot.slane %v7138, %v7142
    %v7145 = vadd.f32 %v7137, %v7143
    %v7146 = vtanh.pop %v7145
    %v7147 = vld [vmem:[%s15] sm:$0xff]
    %v7148 = vld [vmem:[%s15 + $0x8] sm:$0xff]
    %v7149 = vld [vmem:[%s15 + $0x10] sm:$0xff]
    %v7150 = vld [vmem:[%s15 + $0x18] sm:$0xff]
    %v7151 = vld [vmem:[%s15 + $0x20] sm:$0xff]
    %v7152 = vld [vmem:[%s15 + $0x28] sm:$0xff]
    %v7153 = vld [vmem:[%s15 + $0x30] sm:$0xff]
    %v7154 = vld [vmem:[%s15 + $0x38] sm:$0xff]
    %v7155 = vld [vmem:[%s15 + $0x40] sm:$0xff]
    %v7156 = vld [vmem:[%s15 + $0x48] sm:$0xff]
    %v7157 = vld [vmem:[%s15 + $0x50] sm:$0xff]
    %v7158 = vld [vmem:[%s15 + $0x58] sm:$0xff]
    %v7159 = vld [vmem:[%s15 + $0x60] sm:$0xff]
    %v7160 = vld [vmem:[%s15 + $0x68] sm:$0xff]
    %v7161 = vld [vmem:[%s15 + $0x70] sm:$0xff]
    %v7162 = vld [vmem:[%s15 + $0x78] sm:$0xff]
    %v7163 = vld [vmem:[%s16] sm:$0x1]
    %v7165 = vlaneseq
    %v7166 = vshrl.u32 %v7165, 7
    %v7167 = vsub.s32 0, %v7166
    %v7168 = vrot.slane %v7163, %v7167
    %7170 = vmatprep.subr.mxu0 0.0
    %7171 = vmatpush1.msra.mxu0 %v7162
    %7172 = vmatprep.subr.mxu0 0.0
    %7173 = vmatpush1.msra.mxu0 %v7161
    %7174 = vmatprep.subr.mxu0 0.0
    %7175 = vmatpush1.msra.mxu0 %v7160
    %7176 = vmatprep.subr.mxu0 0.0
    %7177 = vmatpush1.msra.mxu0 %v7159
    %7178 = vmatprep.subr.mxu0 0.0
    %7179 = vmatpush1.msra.mxu0 %v7158
    %7180 = vmatprep.subr.mxu0 0.0
    %7181 = vmatpush1.msra.mxu0 %v7157
    %7182 = vmatprep.subr.mxu0 0.0
    %7183 = vmatpush1.msra.mxu0 %v7156
    %7184 = vmatprep.subr.mxu0 0.0
    %7185 = vmatpush1.msra.mxu0 %v7155
    %7186 = vmatprep.subr.mxu0 0.0
    %7187 = vmatpush1.msra.mxu0 %v7154
    %7188 = vmatprep.subr.mxu0 0.0
    %7189 = vmatpush1.msra.mxu0 %v7153
    %7190 = vmatprep.subr.mxu0 0.0
    %7191 = vmatpush1.msra.mxu0 %v7152
    %7192 = vmatprep.subr.mxu0 0.0
    %7193 = vmatpush1.msra.mxu0 %v7151
    %7194 = vmatprep.subr.mxu0 0.0
    %7195 = vmatpush1.msra.mxu0 %v7150
    %7196 = vmatprep.subr.mxu0 0.0
    %7197 = vmatpush1.msra.mxu0 %v7149
    %7198 = vmatprep.subr.mxu0 0.0
    %7199 = vmatpush1.msra.mxu0 %v7148
    %7200 = vmatprep.subr.mxu0 0.0
    %7201 = vmatpush1.msra.mxu0 %v7147
    %7202 = vmatprep.subr.mxu0 0.0
    %7203 = vmatpush2.msra.mxu0 0.0
    %7204 = vmatprep.subr.mxu0 0.0
    %7205 = vmatpush2.msra.mxu0 0.0
    %7206 = vmatprep.subr.mxu0 0.0
    %7207 = vmatpush2.msra.mxu0 0.0
    %7208 = vmatprep.subr.mxu0 0.0
    %7209 = vmatpush2.msra.mxu0 0.0
    %7210 = vmatprep.subr.mxu0 0.0
    %7211 = vmatpush2.msra.mxu0 0.0
    %7212 = vmatprep.subr.mxu0 0.0
    %7213 = vmatpush2.msra.mxu0 0.0
    %7214 = vmatprep.subr.mxu0 0.0
    %7215 = vmatpush2.msra.mxu0 0.0
    %7216 = vmatprep.subr.mxu0 0.0
    %7217 = vmatpush2.msra.mxu0 0.0
    %7218 = vmatprep.subr.mxu0 0.0
    %7219 = vmatpush2.msra.mxu0 0.0
    %7220 = vmatprep.subr.mxu0 0.0
    %7221 = vmatpush2.msra.mxu0 0.0
    %7222 = vmatprep.subr.mxu0 0.0
    %7223 = vmatpush2.msra.mxu0 0.0
    %7224 = vmatprep.subr.mxu0 0.0
    %7225 = vmatpush2.msra.mxu0 0.0
    %7226 = vmatprep.subr.mxu0 0.0
    %7227 = vmatpush2.msra.mxu0 0.0
    %7228 = vmatprep.subr.mxu0 0.0
    %7229 = vmatpush2.msra.mxu0 0.0
    %7230 = vmatprep.subr.mxu0 0.0
    %7231 = vmatpush2.msra.mxu0 0.0
    %7232 = vmatprep.subr.mxu0 0.0
    %7233 = vmatpush2.msra.mxu0 0.0
    %7234 = vmatprep.mubr.f32.mxu0 0.0
    %7235 = vmatmul.mubr.f32.gmra.mxu0 %v7146
    %v7236 = vpop.f32.mrf.mxu0
    %v7237 = vadd.f32 %v7168, %v7236
    %v7238 = vpop.f32.mrf.mxu0
    %7239 = vdwg.mxu0
    %v7240 = vtanh.pop %v7237
    %v7241 = vld [vmem:[%s17] sm:$0xff]
    %v7242 = vld [vmem:[%s17 + $0x8] sm:$0xff]
    %v7243 = vld [vmem:[%s17 + $0x10] sm:$0xff]
    %v7244 = vld [vmem:[%s17 + $0x18] sm:$0xff]
    %v7245 = vld [vmem:[%s17 + $0x20] sm:$0xff]
    %v7246 = vld [vmem:[%s17 + $0x28] sm:$0xff]
    %v7247 = vld [vmem:[%s17 + $0x30] sm:$0xff]
    %v7248 = vld [vmem:[%s17 + $0x38] sm:$0xff]
    %v7249 = vld [vmem:[%s17 + $0x40] sm:$0xff]
    %v7250 = vld [vmem:[%s17 + $0x48] sm:$0xff]
    %v7251 = vld [vmem:[%s17 + $0x50] sm:$0xff]
    %v7252 = vld [vmem:[%s17 + $0x58] sm:$0xff]
    %v7253 = vld [vmem:[%s17 + $0x60] sm:$0xff]
    %v7254 = vld [vmem:[%s17 + $0x68] sm:$0xff]
    %v7255 = vld [vmem:[%s17 + $0x70] sm:$0xff]
    %v7256 = vld [vmem:[%s17 + $0x78] sm:$0xff]
    %v7257 = vld [vmem:[%s18] sm:$0x1]
    %v7259 = vlaneseq
    %v7260 = vshrl.u32 %v7259, 7
    %v7261 = vsub.s32 0, %v7260
    %v7262 = vrot.slane %v7257, %v7261
    %7264 = vmatprep.subr.mxu0 0.0
    %7265 = vmatpush1.msra.mxu0 %v7256
    %7266 = vmatprep.subr.mxu0 0.0
    %7267 = vmatpush1.msra.mxu0 %v7255
    %7268 = vmatprep.subr.mxu0 0.0
    %7269 = vmatpush1.msra.mxu0 %v7254
    %7270 = vmatprep.subr.mxu0 0.0
    %7271 = vmatpush1.msra.mxu0 %v7253
    %7272 = vmatprep.subr.mxu0 0.0
    %7273 = vmatpush1.msra.mxu0 %v7252
    %7274 = vmatprep.subr.mxu0 0.0
    %7275 = vmatpush1.msra.mxu0 %v7251
    %7276 = vmatprep.subr.mxu0 0.0
    %7277 = vmatpush1.msra.mxu0 %v7250
    %7278 = vmatprep.subr.mxu0 0.0
    %7279 = vmatpush1.msra.mxu0 %v7249
    %7280 = vmatprep.subr.mxu0 0.0
    %7281 = vmatpush1.msra.mxu0 %v7248
    %7282 = vmatprep.subr.mxu0 0.0
    %7283 = vmatpush1.msra.mxu0 %v7247
    %7284 = vmatprep.subr.mxu0 0.0
    %7285 = vmatpush1.msra.mxu0 %v7246
    %7286 = vmatprep.subr.mxu0 0.0
    %7287 = vmatpush1.msra.mxu0 %v7245
    %7288 = vmatprep.subr.mxu0 0.0
    %7289 = vmatpush1.msra.mxu0 %v7244
    %7290 = vmatprep.subr.mxu0 0.0
    %7291 = vmatpush1.msra.mxu0 %v7243
    %7292 = vmatprep.subr.mxu0 0.0
    %7293 = vmatpush1.msra.mxu0 %v7242
    %7294 = vmatprep.subr.mxu0 0.0
    %7295 = vmatpush1.msra.mxu0 %v7241
    %7296 = vmatprep.subr.mxu0 0.0
    %7297 = vmatpush2.msra.mxu0 0.0
    %7298 = vmatprep.subr.mxu0 0.0
    %7299 = vmatpush2.msra.mxu0 0.0
    %7300 = vmatprep.subr.mxu0 0.0
    %7301 = vmatpush2.msra.mxu0 0.0
    %7302 = vmatprep.subr.mxu0 0.0
    %7303 = vmatpush2.msra.mxu0 0.0
    %7304 = vmatprep.subr.mxu0 0.0
    %7305 = vmatpush2.msra.mxu0 0.0
    %7306 = vmatprep.subr.mxu0 0.0
    %7307 = vmatpush2.msra.mxu0 0.0
    %7308 = vmatprep.subr.mxu0 0.0
    %7309 = vmatpush2.msra.mxu0 0.0
    %7310 = vmatprep.subr.mxu0 0.0
    %7311 = vmatpush2.msra.mxu0 0.0
    %7312 = vmatprep.subr.mxu0 0.0
    %7313 = vmatpush2.msra.mxu0 0.0
    %7314 = vmatprep.subr.mxu0 0.0
    %7315 = vmatpush2.msra.mxu0 0.0
    %7316 = vmatprep.subr.mxu0 0.0
    %7317 = vmatpush2.msra.mxu0 0.0
    %7318 = vmatprep.subr.mxu0 0.0
    %7319 = vmatpush2.msra.mxu0 0.0
    %7320 = vmatprep.subr.mxu0 0.0
    %7321 = vmatpush2.msra.mxu0 0.0
    %7322 = vmatprep.subr.mxu0 0.0
    %7323 = vmatpush2.msra.mxu0 0.0
    %7324 = vmatprep.subr.mxu0 0.0
    %7325 = vmatpush2.msra.mxu0 0.0
    %7326 = vmatprep.subr.mxu0 0.0
    %7327 = vmatpush2.msra.mxu0 0.0
    %7328 = vmatprep.mubr.f32.mxu0 0.0
    %7329 = vmatmul.mubr.f32.gmra.mxu0 %v7240
    %v7330 = vpop.f32.mrf.mxu0
    %v7331 = vadd.f32 %v7262, %v7330
    %v7332 = vpop.f32.mrf.mxu0
    %7333 = vdwg.mxu0
    %vm7334 = vcmask 99328
    %7335 = vst.msk [vmem:[#allocation2] sm:$0x3] %vm7334, %v7331
    // Predicated region
    $region78: #{correction_net_forward.1} parent=1 // pred_check
      _
    $region79: #{correction_net_forward.1} parent=1 // pred_check_branch
      %7337 = sbr.rel (0) target = $region81
    $region80: #{correction_net_forward.1} parent=1 // pred_region
      %s7339 = ssub.s32 32, 32
      %7340 = vsyncadd [#allocation3], %s7339
      %s7342 = sshll.u32 [#allocation2], 4
      %s7343 = int_to_ptr.vmem [resolvable:$true] %s7342
      %7345 = dma.vmem_to_hbm [thread:$0]  %s7343, 32, %s19, [#allocation3]
    $region81: #{correction_net_forward.1} parent=1 // pred_fallthru
      _
    // Predicated region
    $region82: #{correction_net_forward.1} parent=1 // pred_check
      _
    $region83: #{correction_net_forward.1} parent=1 // pred_check_branch
      %7347 = sbr.rel (0) target = $region85
    $region84: #{correction_net_forward.1} parent=1 // pred_region
      %7348 = dma.done [#allocation3], 32
    $region85: #{correction_net_forward.1} parent=1 // pred_fallthru
      _
    %7349 = vsyncpa [#allocation3], 1

</llo_original>
